<compile_context>
chip_gen: v7x
topology: tpu7x:2x2x1
jax: 0.10.0
libtpu: 0.0.40
codegen_flags: <defaults>
</compile_context>

<pallas_src>
import functools
import math

import jax
import jax.numpy as jnp
from jax.experimental import pallas as pl
from jax.experimental.pallas import tpu as pltpu


def _layernorm(x, gamma, beta, eps=1e-5):
    mu = jnp.mean(x, axis=-1, keepdims=True)
    var = jnp.mean((x - mu) ** 2, axis=-1, keepdims=True)
    return (x - mu) * jax.lax.rsqrt(var + eps) * gamma + beta


def _silu(x):
    return x * jax.nn.sigmoid(x)


# --------------------------------------------------------------------------
# Kernel body
# --------------------------------------------------------------------------
def _atom_core(x0_ref, bias_ref, mq_ref, ln_g_ref, ln_b_ref,
               wq_ref, bq_ref, wkv_ref, bkv_ref, wo_ref, bo_ref,
               w1_ref, b1_ref, w2_ref, b2_ref, w3_ref, b3_ref,
               k_sc, v_sc, *, num_heads, q_tile):
    """Forward core for one (batch, query-tile) grid step.  Returns (tq, D) f32."""
    S = x0_ref.shape[1]
    D = x0_ref.shape[2]
    H = num_heads
    Dh = D // H
    tq = q_tile
    f32 = jnp.float32
    bf16 = jnp.bfloat16
    qi = pl.program_id(1)

    ln_g = ln_g_ref[...]
    ln_b = ln_b_ref[...]

    # ---- K/V for the FULL sequence: computed once per batch element (query
    # tile 0) with one fat (S, D) @ (D, 2D) MXU matmul, stored in persistent
    # bf16 VMEM scratch and reused by every subsequent query tile.
    @pl.when(qi == 0)
    def _():
        xn_full = _layernorm(x0_ref[0], ln_g, ln_b).astype(bf16)
        kv = (jnp.dot(xn_full, wkv_ref[...], preferred_element_type=f32)
              + bkv_ref[...])                                 # (S, 2D) f32
        k_sc[...] = kv[:, :D].astype(bf16)
        v_sc[...] = kv[:, D:].astype(bf16)

    # ---- Query tile: LayerNorm + one fat (tq, D) @ (D, D) Q projection.
    # 1/sqrt(Dh) is already folded into wq / bq by the wrapper.
    row0 = qi * tq
    if tq % 8 == 0:
        row0 = pl.multiple_of(row0, tq)
    x_t = x0_ref[0, pl.ds(row0, tq), :]                        # (tq, D) f32
    xn_t = _layernorm(x_t, ln_g, ln_b)
    xn_bf = xn_t.astype(bf16)
    q = jnp.dot(xn_bf, wq_ref[...], preferred_element_type=f32) + bq_ref[...]

    att_bias = bias_ref[0]                                     # (1, S) key-pad bias

    # ---- Per-head attention (static unroll; heads are lane-contiguous slices).
    # TODO(synk): for H >= 8 switch to lax.fori_loop over heads with a VMEM
    # accumulator to bound vreg live ranges (most important on v5e).
    head_outs = []
    for h in range(H):
        qh = q[:, h * Dh:(h + 1) * Dh].astype(bf16)            # (tq, Dh)
        kh = k_sc[:, h * Dh:(h + 1) * Dh]                      # (S, Dh) bf16
        vh = v_sc[:, h * Dh:(h + 1) * Dh]                      # (S, Dh) bf16
        s = jax.lax.dot_general(qh, kh, (((1,), (1,)), ((), ())),
                                preferred_element_type=f32)    # (tq, S)
        s = s + att_bias
        s = s - jnp.max(s, axis=-1, keepdims=True)
        p = jnp.exp(s)
        # Approx reciprocal runs on the EUP slot; ~1e-3 rel error (intentional).
        p = p * pl.reciprocal(jnp.sum(p, axis=-1, keepdims=True), approx=True)
        head_outs.append(jnp.dot(p.astype(bf16), vh,
                                 preferred_element_type=f32))  # (tq, Dh) f32

    # One fat (tq, D) @ (D, D) output projection instead of H K=Dh accumulations.
    o = jnp.concatenate(head_outs, axis=-1).astype(bf16)       # (tq, D)
    attn = jnp.dot(o, wo_ref[...], preferred_element_type=f32) + bo_ref[...]

    attended = xn_t + attn

    # ---- FFN: MLP with 2 hidden layers + SiLU (dropout p=0.1 is an eval no-op)
    h1 = _silu(jnp.dot(attended.astype(bf16), w1_ref[...],
                       preferred_element_type=f32) + b1_ref[...])
    h2 = _silu(jnp.dot(h1.astype(bf16), w2_ref[...],
                       preferred_element_type=f32) + b2_ref[...])
    f = jnp.dot(h2.astype(bf16), w3_ref[...],
                preferred_element_type=f32) + b3_ref[...]
    # TODO(synk): the reference MLP's exact mask semantics are not given; here
    # the padding mask multiplicatively zeroes the FFN output per token.
    f = f * mq_ref[0]                                          # (tq, 1) query mask

    return attended + f


def _atom_kernel(x0_ref, bias_ref, mq_ref, ln_g_ref, ln_b_ref,
                 wq_ref, bq_ref, wkv_ref, bkv_ref, wo_ref, bo_ref,
                 w1_ref, b1_ref, w2_ref, b2_ref, w3_ref, b3_ref,
                 out_ref, k_sc, v_sc, *, num_heads, q_tile):
    out_ref[0] = _atom_core(
        x0_ref, bias_ref, mq_ref, ln_g_ref, ln_b_ref,
        wq_ref, bq_ref, wkv_ref, bkv_ref, wo_ref, bo_ref,
        w1_ref, b1_ref, w2_ref, b2_ref, w3_ref, b3_ref,
        k_sc, v_sc, num_heads=num_heads, q_tile=q_tile)


def _atom_kernel_blend(x0_ref, bias_ref, mq_ref, ln_g_ref, ln_b_ref,
                       wq_ref, bq_ref, wkv_ref, bkv_ref, wo_ref, bo_ref,
                       w1_ref, b1_ref, w2_ref, b2_ref, w3_ref, b3_ref,
                       iv_ref, lam_ref, out_ref, k_sc, v_sc, *,
                       num_heads, q_tile):
    x_core = _atom_core(
        x0_ref, bias_ref, mq_ref, ln_g_ref, ln_b_ref,
        wq_ref, bq_ref, wkv_ref, bkv_ref, wo_ref, bo_ref,
        w1_ref, b1_ref, w2_ref, b2_ref, w3_ref, b3_ref,
        k_sc, v_sc, num_heads=num_heads, q_tile=q_tile)
    lam = lam_ref[0]                     # sigmoid(lambda_v_residual), SMEM scalar
    out_ref[0] = lam * x_core + (1.0 - lam) * iv_ref[0]


# --------------------------------------------------------------------------
# VMEM budgeting
# --------------------------------------------------------------------------
def _round_up(x, m):
    return -(-x // m) * m


def _block_vmem_bytes(shape, dtype, buffers):
    """Lane/sublane-padded VMEM footprint of one pipeline block (x buffers)."""
    dims = list(shape) if len(shape) >= 2 else [1] + list(shape)
    dims[-1] = _round_up(int(dims[-1]), 128)
    dims[-2] = _round_up(int(dims[-2]), 8)
    n = 1
    for d in dims:
        n *= int(d)
    return n * jnp.dtype(dtype).itemsize * buffers


def _vmem_cap_bytes():
    phys = 128 << 20
    try:
        info = pltpu.get_tpu_info()
        phys = int(getattr(info, "vmem_capacity_bytes", phys) or phys)
    except Exception:
        pass
    if phys <= (64 << 20):                       # v7x-class: headroom under 64 MiB
        return 52 << 20
    return min(phys - (16 << 20), 100 << 20)     # v5e/v6e: allow up to ~100 MiB


def _vmem_limit_bytes(S, D, tq, weight_args, blend, weights_single_buffered):
    f32, bf16 = jnp.float32, jnp.bfloat16
    wb = 1 if weights_single_buffered else 2
    total = sum(_block_vmem_bytes(a.shape, a.dtype, wb) for a in weight_args)
    total += _block_vmem_bytes((1, S, D), f32, 2)        # x_0 block
    total += _block_vmem_bytes((1, 1, S), f32, 2)        # additive key-pad bias
    total += _block_vmem_bytes((1, tq, 1), f32, 2)       # query-token mask
    total += _block_vmem_bytes((1, tq, D), f32, 2)       # output block
    if blend:
        total += _block_vmem_bytes((1, tq, D), f32, 2)   # initial_v block
    total += 2 * _block_vmem_bytes((S, D), bf16, 1)      # persistent K/V scratch
    # Live in-kernel intermediates: xn_full + (S,2D) KV projection (tile 0),
    # per-head (tq,S) scores/probs, q / attended / FFN activations; 1.5x fudge
    # for bf16 copies and relayouts.
    inter = (_block_vmem_bytes((S, D), f32, 1)
             + _block_vmem_bytes((S, 2 * D), f32, 1)
             + 2 * _block_vmem_bytes((tq, S), f32, 1)
             + 6 * _block_vmem_bytes((tq, D), f32, 1))
    total += int(1.5 * inter)
    cap = _vmem_cap_bytes()
    return int(min(cap, max(32 << 20, total + (4 << 20))))


# --------------------------------------------------------------------------
# Wrapper
# --------------------------------------------------------------------------
def init_params(key, lifting_dim):
    D = lifting_dim
    ks = jax.random.split(key, 7)
    w = lambda k: (jax.random.normal(k, (D, D), jnp.float32) * 0.02)
    z = lambda: jnp.zeros((1, D), jnp.float32)
    return {
        "ln_gamma": jnp.ones((1, D), jnp.float32),
        "ln_beta": jnp.zeros((1, D), jnp.float32),
        "wq": w(ks[0]), "bq": z(),
        "wk": w(ks[1]), "bk": z(),
        "wv": w(ks[2]), "bv": z(),
        "wo": w(ks[3]), "bo": z(),
        "w1": w(ks[4]), "b1": z(),
        "w2": w(ks[5]), "b2": z(),
        "w3": w(ks[6]), "b3": z(),
        "lambda_v_residual": 0.5,    # raw parameter; used through sigmoid()
    }


def atom_block_apply(params, x_0, v_0, concatenated_features, q_data,
                     mask=None, initial_v=None, *, num_heads=4):
    """Pallas-backed ATOMBlock.forward.  Returns (x_0_out, initial_v_out)."""
    del v_0, concatenated_features, q_data    # unused on the SELF-attention path
    B, S, D = x_0.shape
    H = num_heads
    Dh = D // H
    f32, bf16 = jnp.float32, jnp.bfloat16
    x_0 = x_0.astype(f32)

    # Query-tile size for the flash-style (B, S // tq) grid: per-tile score
    # scratch is only (tq, S) and the second TensorCore gets work at small B.
    if S > 256 and S % 256 == 0:
        tq = 256
    elif S > 128 and S % 128 == 0:
        tq = 128
    else:
        tq = S
    nq = S // tq

    if mask is None:
        mask = jnp.ones((B, S), f32)
    mask = mask.astype(f32)
    att_bias = ((mask - 1.0) * 1e30).reshape(B, 1, S)   # additive key-pad bias
    mask_q = mask.reshape(B, S, 1)

    # Weight prep: fused K/V matrix; 1/sqrt(Dh) folded into Q weight & bias.
    scale = 1.0 / math.sqrt(Dh)
    ln_g = params["ln_gamma"].astype(f32)
    ln_b = params["ln_beta"].astype(f32)
    wq = (params["wq"] * scale).astype(bf16)
    bq = (params["bq"] * scale).astype(f32)
    wkv = jnp.concatenate([params["wk"], params["wv"]], axis=1).astype(bf16)
    bkv = jnp.concatenate([params["bk"], params["bv"]], axis=1).astype(f32)
    wo, bo = params["wo"].astype(bf16), params["bo"].astype(f32)
    w1, b1 = params["w1"].astype(bf16), params["b1"].astype(f32)
    w2, b2 = params["w2"].astype(bf16), params["b2"].astype(f32)
    w3, b3 = params["w3"].astype(bf16), params["b3"].astype(f32)

    weight_args = [ln_g, ln_b, wq, bq, wkv, bkv, wo, bo, w1, b1, w2, b2, w3, b3]
    blend = initial_v is not None

    x_spec = pl.BlockSpec((1, S, D), lambda b, qi: (b, 0, 0))
    bias_spec = pl.BlockSpec((1, 1, S), lambda b, qi: (b, 0, 0))
    mq_spec = pl.BlockSpec((1, tq, 1), lambda b, qi: (b, qi, 0))
    tile_spec = pl.BlockSpec((1, tq, D), lambda b, qi: (b, qi, 0))

    args = [x_0, att_bias, mask_q] + weight_args
    if blend:
        iv = initial_v.astype(f32)   # kept f32 to preserve blend accuracy
        lam = jax.nn.sigmoid(
            jnp.asarray(params["lambda_v_residual"], f32)).reshape(1)
        args = args + [iv, lam]
        kernel = functools.partial(_atom_kernel_blend, num_heads=H, q_tile=tq)
    else:
        kernel = functools.partial(_atom_kernel, num_heads=H, q_tile=tq)

    def run(weights_single_buffered):
        def const_spec(a):
            idx = lambda b, qi, _n=a.ndim: (0,) * _n
            if weights_single_buffered:
                # Constant block index: double-buffering only doubles VMEM.
                return pl.BlockSpec(a.shape, idx,
                                    pipeline_mode=pl.Buffered(buffer_count=1))
            return pl.BlockSpec(a.shape, idx)

        in_specs = ([x_spec, bias_spec, mq_spec]
                    + [const_spec(a) for a in weight_args])
        if blend:
            in_specs = in_specs + [
                tile_spec,
                pl.BlockSpec(memory_space=pltpu.MemorySpace.SMEM)]

        vmem_limit = _vmem_limit_bytes(S, D, tq, weight_args, blend,
                                       weights_single_buffered)

        return pl.pallas_call(
            kernel,
            out_shape=jax.ShapeDtypeStruct((B, S, D), f32),
            grid_spec=pltpu.PrefetchScalarGridSpec(
                num_scalar_prefetch=0,
                grid=(B, nq),
                in_specs=in_specs,
                out_specs=tile_spec,
                scratch_shapes=[pltpu.VMEM((S, D), bf16),    # K (all heads)
                                pltpu.VMEM((S, D), bf16)],   # V (all heads)
            ),
            compiler_params=pltpu.CompilerParams(
                dimension_semantics=("parallel", "arbitrary"),
                vmem_limit_bytes=vmem_limit),
        )(*args)

    try:
        x_out = run(True)
    except Exception:
        # pipeline_mode=pl.Buffered(1) not supported by this jax/libtpu build;
        # fall back to default double-buffered weight blocks.
        x_out = run(False)

    if initial_v is None:
        return x_out, x_out            # initial_v = x_0.clone()
    return x_out, initial_v            # initial_v passed through unchanged


# --------------------------------------------------------------------------
# Pure-JAX reference & self-test
# --------------------------------------------------------------------------
def atom_block_reference(params, x_0, mask, initial_v, num_heads):
    """Pure-JAX (f32) reference of the same forward pass (correctness check)."""
    B, S, D = x_0.shape
    H, Dh = num_heads, D // num_heads
    g, b = params["ln_gamma"][0], params["ln_beta"][0]
    mu = x_0.mean(-1, keepdims=True)
    var = ((x_0 - mu) ** 2).mean(-1, keepdims=True)
    xn = (x_0 - mu) / jnp.sqrt(var + 1e-5) * g + b
    q = xn @ params["wq"] + params["bq"][0]
    k = xn @ params["wk"] + params["bk"][0]
    v = xn @ params["wv"] + params["bv"][0]
    qh = q.reshape(B, S, H, Dh); kh = k.reshape(B, S, H, Dh); vh = v.reshape(B, S, H, Dh)
    s = jnp.einsum("bqhd,bkhd->bhqk", qh, kh) / math.sqrt(Dh)
    s = s + ((mask - 1.0) * 1e30)[:, None, None, :]
    p = jax.nn.softmax(s, axis=-1)
    attn = jnp.einsum("bhqk,bkhd->bqhd", p, vh).reshape(B, S, D)
    attn = attn @ params["wo"] + params["bo"][0]
    attended = xn + attn
    h1 = jax.nn.silu(attended @ params["w1"] + params["b1"][0])
    h2 = jax.nn.silu(h1 @ params["w2"] + params["b2"][0])
    f = (h2 @ params["w3"] + params["b3"][0]) * mask[..., None]
    x_core = attended + f
    if initial_v is None:
        return x_core, x_core
    lam = jax.nn.sigmoid(jnp.asarray(params["lambda_v_residual"], jnp.float32))
    return lam * x_core + (1 - lam) * initial_v, initial_v


if __name__ == "__main__":
    B, S, D, H = 2, 8, 32, 4
    key = jax.random.PRNGKey(0)
    k_p, k_x, k_v, k_c, k_q = jax.random.split(key, 5)

    params = init_params(k_p, D)
    x_0 = jax.random.normal(k_x, (B, S, D), jnp.float32)
    v_0 = jax.random.normal(k_v, (B, S, D), jnp.float32)
    concatenated_features = jax.random.normal(k_c, (B, S, D), jnp.float32)
    q_data = jax.random.normal(k_q, (B, S, D), jnp.float32)
    mask = jnp.ones((B, S), jnp.float32)

    # First block: initial_v is None  -> returns (x_out, x_out)
    x1, iv1 = atom_block_apply(params, x_0, v_0, concatenated_features, q_data,
                               mask=mask, initial_v=None, num_heads=H)
    # Second block: initial_v given   -> blended output, initial_v passthrough
    x2, iv2 = atom_block_apply(params, x1, v_0, concatenated_features, q_data,
                               mask=mask, initial_v=iv1, num_heads=H)
    jax.block_until_ready((x1, iv1, x2, iv2))

    # Correctness vs. pure-JAX f32 reference (kernel uses bf16 MXU operands and
    # an approximate softmax reciprocal -> ~1e-3 relative error, intentional).
    rx1, riv1 = atom_block_reference(params, x_0, mask, None, H)
    rx2, riv2 = atom_block_reference(params, rx1, mask, riv1, H)
    assert jnp.allclose(x1, rx1, atol=1e-2, rtol=1e-2)
    assert jnp.allclose(iv1, riv1, atol=1e-2, rtol=1e-2)
    assert jnp.allclose(x2, rx2, atol=1e-2, rtol=1e-2)
    assert jnp.allclose(iv2, riv2, atol=1e-2, rtol=1e-2)

    print("KERNEL_OK")
</pallas_src>

<mosaic_0001>
module attributes {stable_mosaic.version = 11 : i64} {
  func.func @_atom_kernel(%arg0: i32, %arg1: i32, %arg2: memref<1x8x32xf32, #tpu.memory_space<vmem>>, %arg3: memref<1x1x8xf32, #tpu.memory_space<vmem>>, %arg4: memref<1x8x1xf32, #tpu.memory_space<vmem>>, %arg5: memref<1x32xf32, #tpu.memory_space<vmem>>, %arg6: memref<1x32xf32, #tpu.memory_space<vmem>>, %arg7: memref<32x32xbf16, #tpu.memory_space<vmem>>, %arg8: memref<1x32xf32, #tpu.memory_space<vmem>>, %arg9: memref<32x64xbf16, #tpu.memory_space<vmem>>, %arg10: memref<1x64xf32, #tpu.memory_space<vmem>>, %arg11: memref<32x32xbf16, #tpu.memory_space<vmem>>, %arg12: memref<1x32xf32, #tpu.memory_space<vmem>>, %arg13: memref<32x32xbf16, #tpu.memory_space<vmem>>, %arg14: memref<1x32xf32, #tpu.memory_space<vmem>>, %arg15: memref<32x32xbf16, #tpu.memory_space<vmem>>, %arg16: memref<1x32xf32, #tpu.memory_space<vmem>>, %arg17: memref<32x32xbf16, #tpu.memory_space<vmem>>, %arg18: memref<1x32xf32, #tpu.memory_space<vmem>>, %arg19: memref<1x8x32xf32, #tpu.memory_space<vmem>>, %arg20: memref<8x32xbf16, #tpu.memory_space<vmem>>, %arg21: memref<8x32xbf16, #tpu.memory_space<vmem>>) attributes {dimension_semantics = [#tpu.dimension_semantics<parallel>, #tpu.dimension_semantics<arbitrary>], iteration_bounds = array<i64: 2, 1>, scalar_prefetch = 0 : i64, scratch_operands = 2 : i64, tpu.core_type = #tpu.core_type<tc>, window_params = [{transform_indices = @transform_0, window_bounds = array<i64: 1, 8, 32>}, {transform_indices = @transform_1, window_bounds = array<i64: 1, 1, 8>}, {transform_indices = @transform_2, window_bounds = array<i64: 1, 8, 1>}, {pipeline_mode = #tpu.pipeline_mode<synchronous>, transform_indices = @transform_3, window_bounds = array<i64: 1, 32>}, {pipeline_mode = #tpu.pipeline_mode<synchronous>, transform_indices = @transform_4, window_bounds = array<i64: 1, 32>}, {pipeline_mode = #tpu.pipeline_mode<synchronous>, transform_indices = @transform_5, window_bounds = array<i64: 32, 32>}, {pipeline_mode = #tpu.pipeline_mode<synchronous>, transform_indices = @transform_6, window_bounds = array<i64: 1, 32>}, {pipeline_mode = #tpu.pipeline_mode<synchronous>, transform_indices = @transform_7, window_bounds = array<i64: 32, 64>}, {pipeline_mode = #tpu.pipeline_mode<synchronous>, transform_indices = @transform_8, window_bounds = array<i64: 1, 64>}, {pipeline_mode = #tpu.pipeline_mode<synchronous>, transform_indices = @transform_9, window_bounds = array<i64: 32, 32>}, {pipeline_mode = #tpu.pipeline_mode<synchronous>, transform_indices = @transform_10, window_bounds = array<i64: 1, 32>}, {pipeline_mode = #tpu.pipeline_mode<synchronous>, transform_indices = @transform_11, window_bounds = array<i64: 32, 32>}, {pipeline_mode = #tpu.pipeline_mode<synchronous>, transform_indices = @transform_12, window_bounds = array<i64: 1, 32>}, {pipeline_mode = #tpu.pipeline_mode<synchronous>, transform_indices = @transform_13, window_bounds = array<i64: 32, 32>}, {pipeline_mode = #tpu.pipeline_mode<synchronous>, transform_indices = @transform_14, window_bounds = array<i64: 1, 32>}, {pipeline_mode = #tpu.pipeline_mode<synchronous>, transform_indices = @transform_15, window_bounds = array<i64: 32, 32>}, {pipeline_mode = #tpu.pipeline_mode<synchronous>, transform_indices = @transform_16, window_bounds = array<i64: 1, 32>}, {transform_indices = @transform_17, window_bounds = array<i64: 1, 8, 32>}]} {
    %c0 = arith.constant 0 : index
    %c0_0 = arith.constant 0 : index
    %0 = vector.load %arg5[%c0, %c0_0] : memref<1x32xf32, #tpu.memory_space<vmem>>, vector<1x32xf32>
    %c0_1 = arith.constant 0 : index
    %c0_2 = arith.constant 0 : index
    %1 = vector.load %arg6[%c0_1, %c0_2] : memref<1x32xf32, #tpu.memory_space<vmem>>, vector<1x32xf32>
    %c0_i32 = arith.constant 0 : i32
    %2 = arith.cmpi eq, %arg1, %c0_i32 : i32
    %3 = arith.extui %2 : i1 to i32
    %c0_i32_3 = arith.constant 0 : i32
    %4 = arith.cmpi ne, %3, %c0_i32_3 : i32
    scf.if %4 {
      %c0_75 = arith.constant 0 : index
      %c0_76 = arith.constant 0 : index
      %c0_77 = arith.constant 0 : index
      %162 = vector.load %arg2[%c0_75, %c0_76, %c0_77] : memref<1x8x32xf32, #tpu.memory_space<vmem>>, vector<1x8x32xf32>
      %163 = vector.shape_cast %162 : vector<1x8x32xf32> to vector<8x32xf32>
      %cst_78 = arith.constant dense<0.000000e+00> : vector<8xf32>
      %164 = vector.multi_reduction <add>, %163, %cst_78 [1] : vector<8x32xf32> to vector<8xf32>
      %165 = vector.shape_cast %164 : vector<8xf32> to vector<8x1xf32>
      %cst_79 = arith.constant 3.200000e+01 : f32
      %166 = vector.broadcast %cst_79 : f32 to vector<8x1xf32>
      %167 = arith.divf %165, %166 : vector<8x1xf32>
      %168 = vector.broadcast %167 : vector<8x1xf32> to vector<8x32xf32>
      %169 = arith.subf %163, %168 : vector<8x32xf32>
      %170 = arith.mulf %169, %169 : vector<8x32xf32>
      %cst_80 = arith.constant dense<0.000000e+00> : vector<8xf32>
      %171 = vector.multi_reduction <add>, %170, %cst_80 [1] : vector<8x32xf32> to vector<8xf32>
      %172 = vector.shape_cast %171 : vector<8xf32> to vector<8x1xf32>
      %cst_81 = arith.constant 3.200000e+01 : f32
      %173 = vector.broadcast %cst_81 : f32 to vector<8x1xf32>
      %174 = arith.divf %172, %173 : vector<8x1xf32>
      %175 = vector.broadcast %167 : vector<8x1xf32> to vector<8x32xf32>
      %176 = arith.subf %163, %175 : vector<8x32xf32>
      %cst_82 = arith.constant 9.99999974E-6 : f32
      %177 = vector.broadcast %cst_82 : f32 to vector<8x1xf32>
      %178 = arith.addf %174, %177 : vector<8x1xf32>
      %179 = math.rsqrt %178 : vector<8x1xf32>
      %180 = vector.broadcast %179 : vector<8x1xf32> to vector<8x32xf32>
      %181 = arith.mulf %176, %180 : vector<8x32xf32>
      %182 = vector.broadcast %0 : vector<1x32xf32> to vector<8x32xf32>
      %183 = arith.mulf %181, %182 : vector<8x32xf32>
      %184 = vector.broadcast %1 : vector<1x32xf32> to vector<8x32xf32>
      %185 = arith.addf %183, %184 : vector<8x32xf32>
      %186 = arith.truncf %185 : vector<8x32xf32> to vector<8x32xbf16>
      %c0_83 = arith.constant 0 : index
      %c0_84 = arith.constant 0 : index
      %187 = vector.load %arg9[%c0_83, %c0_84] : memref<32x64xbf16, #tpu.memory_space<vmem>>, vector<32x64xbf16>
      %cst_85 = arith.constant dense<0.000000e+00> : vector<8x64xf32>
      %188 = tpu.matmul %186, %187, %cst_85 {dimension_numbers = #tpu.dot_dimension_numbers<[1], [0], [0], [1], [0, 0, 1, 1], [], []>} : vector<8x32xbf16>, vector<32x64xbf16>, vector<8x64xf32> -> vector<8x64xf32>
      %c0_86 = arith.constant 0 : index
      %c0_87 = arith.constant 0 : index
      %189 = vector.load %arg10[%c0_86, %c0_87] : memref<1x64xf32, #tpu.memory_space<vmem>>, vector<1x64xf32>
      %190 = vector.broadcast %189 : vector<1x64xf32> to vector<8x64xf32>
      %191 = arith.addf %188, %190 : vector<8x64xf32>
      %192 = vector.extract_strided_slice %191 {offsets = [0, 0], sizes = [8, 32], strides = [1, 1]} : vector<8x64xf32> to vector<8x32xf32>
      %193 = arith.truncf %192 : vector<8x32xf32> to vector<8x32xbf16>
      %c0_88 = arith.constant 0 : index
      %c0_89 = arith.constant 0 : index
      %194 = vector.load %arg20[%c0_88, %c0_89] : memref<8x32xbf16, #tpu.memory_space<vmem>>, vector<8x32xbf16>
      tpu.vector_store %arg20[%c0_88, %c0_89], %193 {strides = array<i32>} : memref<8x32xbf16, #tpu.memory_space<vmem>>, vector<8x32xbf16>,
      %195 = vector.extract_strided_slice %191 {offsets = [0, 32], sizes = [8, 32], strides = [1, 1]} : vector<8x64xf32> to vector<8x32xf32>
      %196 = arith.truncf %195 : vector<8x32xf32> to vector<8x32xbf16>
      %c0_90 = arith.constant 0 : index
      %c0_91 = arith.constant 0 : index
      %197 = vector.load %arg21[%c0_90, %c0_91] : memref<8x32xbf16, #tpu.memory_space<vmem>>, vector<8x32xbf16>
      tpu.vector_store %arg21[%c0_90, %c0_91], %196 {strides = array<i32>} : memref<8x32xbf16, #tpu.memory_space<vmem>>, vector<8x32xbf16>,
    } else {
    }
    %c8_i32 = arith.constant 8 : i32
    %5 = arith.muli %arg1, %c8_i32 : i32
    %6 = tpu.assume_multiple %5, 8 : i32
    %c0_4 = arith.constant 0 : index
    %7 = arith.index_cast %6 : i32 to index
    %c0_5 = arith.constant 0 : index
    %8 = vector.load %arg2[%c0_4, %7, %c0_5] : memref<1x8x32xf32, #tpu.memory_space<vmem>>, vector<1x8x32xf32>
    %9 = vector.shape_cast %8 : vector<1x8x32xf32> to vector<8x32xf32>
    %cst = arith.constant dense<0.000000e+00> : vector<8xf32>
    %10 = vector.multi_reduction <add>, %9, %cst [1] : vector<8x32xf32> to vector<8xf32>
    %11 = vector.shape_cast %10 : vector<8xf32> to vector<8x1xf32>
    %cst_6 = arith.constant 3.200000e+01 : f32
    %12 = vector.broadcast %cst_6 : f32 to vector<8x1xf32>
    %13 = arith.divf %11, %12 : vector<8x1xf32>
    %14 = vector.broadcast %13 : vector<8x1xf32> to vector<8x32xf32>
    %15 = arith.subf %9, %14 : vector<8x32xf32>
    %16 = arith.mulf %15, %15 : vector<8x32xf32>
    %cst_7 = arith.constant dense<0.000000e+00> : vector<8xf32>
    %17 = vector.multi_reduction <add>, %16, %cst_7 [1] : vector<8x32xf32> to vector<8xf32>
    %18 = vector.shape_cast %17 : vector<8xf32> to vector<8x1xf32>
    %cst_8 = arith.constant 3.200000e+01 : f32
    %19 = vector.broadcast %cst_8 : f32 to vector<8x1xf32>
    %20 = arith.divf %18, %19 : vector<8x1xf32>
    %21 = vector.broadcast %13 : vector<8x1xf32> to vector<8x32xf32>
    %22 = arith.subf %9, %21 : vector<8x32xf32>
    %cst_9 = arith.constant 9.99999974E-6 : f32
    %23 = vector.broadcast %cst_9 : f32 to vector<8x1xf32>
    %24 = arith.addf %20, %23 : vector<8x1xf32>
    %25 = math.rsqrt %24 : vector<8x1xf32>
    %26 = vector.broadcast %25 : vector<8x1xf32> to vector<8x32xf32>
    %27 = arith.mulf %22, %26 : vector<8x32xf32>
    %28 = vector.broadcast %0 : vector<1x32xf32> to vector<8x32xf32>
    %29 = arith.mulf %27, %28 : vector<8x32xf32>
    %30 = vector.broadcast %1 : vector<1x32xf32> to vector<8x32xf32>
    %31 = arith.addf %29, %30 : vector<8x32xf32>
    %32 = arith.truncf %31 : vector<8x32xf32> to vector<8x32xbf16>
    %c0_10 = arith.constant 0 : index
    %c0_11 = arith.constant 0 : index
    %33 = vector.load %arg7[%c0_10, %c0_11] : memref<32x32xbf16, #tpu.memory_space<vmem>>, vector<32x32xbf16>
    %cst_12 = arith.constant dense<0.000000e+00> : vector<8x32xf32>
    %34 = tpu.matmul %32, %33, %cst_12 {dimension_numbers = #tpu.dot_dimension_numbers<[1], [0], [0], [1], [0, 0, 1, 1], [], []>} : vector<8x32xbf16>, vector<32x32xbf16>, vector<8x32xf32> -> vector<8x32xf32>
    %c0_13 = arith.constant 0 : index
    %c0_14 = arith.constant 0 : index
    %35 = vector.load %arg8[%c0_13, %c0_14] : memref<1x32xf32, #tpu.memory_space<vmem>>, vector<1x32xf32>
    %36 = vector.broadcast %35 : vector<1x32xf32> to vector<8x32xf32>
    %37 = arith.addf %34, %36 : vector<8x32xf32>
    %c0_15 = arith.constant 0 : index
    %c0_16 = arith.constant 0 : index
    %c0_17 = arith.constant 0 : index
    %38 = vector.load %arg3[%c0_15, %c0_16, %c0_17] : memref<1x1x8xf32, #tpu.memory_space<vmem>>, vector<1x1x8xf32>
    %39 = vector.shape_cast %38 : vector<1x1x8xf32> to vector<1x8xf32>
    %40 = vector.extract_strided_slice %37 {offsets = [0, 0], sizes = [8, 8], strides = [1, 1]} : vector<8x32xf32> to vector<8x8xf32>
    %41 = arith.truncf %40 : vector<8x8xf32> to vector<8x8xbf16>
    %c0_18 = arith.constant 0 : index
    %c0_19 = arith.constant 0 : index
    %42 = vector.load %arg20[%c0_18, %c0_19] : memref<8x32xbf16, #tpu.memory_space<vmem>>, vector<8x8xbf16>
    %c0_20 = arith.constant 0 : index
    %c0_21 = arith.constant 0 : index
    %43 = vector.load %arg21[%c0_20, %c0_21] : memref<8x32xbf16, #tpu.memory_space<vmem>>, vector<8x8xbf16>
    %cst_22 = arith.constant dense<0.000000e+00> : vector<8x8xf32>
    %44 = tpu.matmul %41, %42, %cst_22 {dimension_numbers = #tpu.dot_dimension_numbers<[1], [1], [0], [0], [0, 0, 1, 0], [], []>} : vector<8x8xbf16>, vector<8x8xbf16>, vector<8x8xf32> -> vector<8x8xf32>
    %45 = vector.broadcast %39 : vector<1x8xf32> to vector<8x8xf32>
    %46 = arith.addf %44, %45 : vector<8x8xf32>
    %cst_23 = arith.constant dense<0xFF800000> : vector<8xf32>
    %47 = vector.multi_reduction <maximumf>, %46, %cst_23 [1] : vector<8x8xf32> to vector<8xf32>
    %48 = vector.shape_cast %47 : vector<8xf32> to vector<8x1xf32>
    %49 = vector.broadcast %48 : vector<8x1xf32> to vector<8x8xf32>
    %50 = arith.subf %46, %49 : vector<8x8xf32>
    %51 = math.exp %50 : vector<8x8xf32>
    %cst_24 = arith.constant dense<0.000000e+00> : vector<8xf32>
    %52 = vector.multi_reduction <add>, %51, %cst_24 [1] : vector<8x8xf32> to vector<8xf32>
    %53 = vector.shape_cast %52 : vector<8xf32> to vector<8x1xf32>
    %54 = tpu.reciprocal %53 {approx = true} : vector<8x1xf32> -> vector<8x1xf32>
    %55 = vector.broadcast %54 : vector<8x1xf32> to vector<8x8xf32>
    %56 = arith.mulf %51, %55 : vector<8x8xf32>
    %57 = arith.truncf %56 : vector<8x8xf32> to vector<8x8xbf16>
    %cst_25 = arith.constant dense<0.000000e+00> : vector<8x8xf32>
    %58 = tpu.matmul %57, %43, %cst_25 {dimension_numbers = #tpu.dot_dimension_numbers<[1], [0], [0], [1], [0, 0, 1, 1], [], []>} : vector<8x8xbf16>, vector<8x8xbf16>, vector<8x8xf32> -> vector<8x8xf32>
    %59 = vector.extract_strided_slice %37 {offsets = [0, 8], sizes = [8, 8], strides = [1, 1]} : vector<8x32xf32> to vector<8x8xf32>
    %60 = arith.truncf %59 : vector<8x8xf32> to vector<8x8xbf16>
    %c0_26 = arith.constant 0 : index
    %c8 = arith.constant 8 : index
    %61 = vector.load %arg20[%c0_26, %c8] : memref<8x32xbf16, #tpu.memory_space<vmem>>, vector<8x8xbf16>
    %c0_27 = arith.constant 0 : index
    %c8_28 = arith.constant 8 : index
    %62 = vector.load %arg21[%c0_27, %c8_28] : memref<8x32xbf16, #tpu.memory_space<vmem>>, vector<8x8xbf16>
    %cst_29 = arith.constant dense<0.000000e+00> : vector<8x8xf32>
    %63 = tpu.matmul %60, %61, %cst_29 {dimension_numbers = #tpu.dot_dimension_numbers<[1], [1], [0], [0], [0, 0, 1, 0], [], []>} : vector<8x8xbf16>, vector<8x8xbf16>, vector<8x8xf32> -> vector<8x8xf32>
    %64 = vector.broadcast %39 : vector<1x8xf32> to vector<8x8xf32>
    %65 = arith.addf %63, %64 : vector<8x8xf32>
    %cst_30 = arith.constant dense<0xFF800000> : vector<8xf32>
    %66 = vector.multi_reduction <maximumf>, %65, %cst_30 [1] : vector<8x8xf32> to vector<8xf32>
    %67 = vector.shape_cast %66 : vector<8xf32> to vector<8x1xf32>
    %68 = vector.broadcast %67 : vector<8x1xf32> to vector<8x8xf32>
    %69 = arith.subf %65, %68 : vector<8x8xf32>
    %70 = math.exp %69 : vector<8x8xf32>
    %cst_31 = arith.constant dense<0.000000e+00> : vector<8xf32>
    %71 = vector.multi_reduction <add>, %70, %cst_31 [1] : vector<8x8xf32> to vector<8xf32>
    %72 = vector.shape_cast %71 : vector<8xf32> to vector<8x1xf32>
    %73 = tpu.reciprocal %72 {approx = true} : vector<8x1xf32> -> vector<8x1xf32>
    %74 = vector.broadcast %73 : vector<8x1xf32> to vector<8x8xf32>
    %75 = arith.mulf %70, %74 : vector<8x8xf32>
    %76 = arith.truncf %75 : vector<8x8xf32> to vector<8x8xbf16>
    %cst_32 = arith.constant dense<0.000000e+00> : vector<8x8xf32>
    %77 = tpu.matmul %76, %62, %cst_32 {dimension_numbers = #tpu.dot_dimension_numbers<[1], [0], [0], [1], [0, 0, 1, 1], [], []>} : vector<8x8xbf16>, vector<8x8xbf16>, vector<8x8xf32> -> vector<8x8xf32>
    %78 = vector.extract_strided_slice %37 {offsets = [0, 16], sizes = [8, 8], strides = [1, 1]} : vector<8x32xf32> to vector<8x8xf32>
    %79 = arith.truncf %78 : vector<8x8xf32> to vector<8x8xbf16>
    %c0_33 = arith.constant 0 : index
    %c16 = arith.constant 16 : index
    %80 = vector.load %arg20[%c0_33, %c16] : memref<8x32xbf16, #tpu.memory_space<vmem>>, vector<8x8xbf16>
    %c0_34 = arith.constant 0 : index
    %c16_35 = arith.constant 16 : index
    %81 = vector.load %arg21[%c0_34, %c16_35] : memref<8x32xbf16, #tpu.memory_space<vmem>>, vector<8x8xbf16>
    %cst_36 = arith.constant dense<0.000000e+00> : vector<8x8xf32>
    %82 = tpu.matmul %79, %80, %cst_36 {dimension_numbers = #tpu.dot_dimension_numbers<[1], [1], [0], [0], [0, 0, 1, 0], [], []>} : vector<8x8xbf16>, vector<8x8xbf16>, vector<8x8xf32> -> vector<8x8xf32>
    %83 = vector.broadcast %39 : vector<1x8xf32> to vector<8x8xf32>
    %84 = arith.addf %82, %83 : vector<8x8xf32>
    %cst_37 = arith.constant dense<0xFF800000> : vector<8xf32>
    %85 = vector.multi_reduction <maximumf>, %84, %cst_37 [1] : vector<8x8xf32> to vector<8xf32>
    %86 = vector.shape_cast %85 : vector<8xf32> to vector<8x1xf32>
    %87 = vector.broadcast %86 : vector<8x1xf32> to vector<8x8xf32>
    %88 = arith.subf %84, %87 : vector<8x8xf32>
    %89 = math.exp %88 : vector<8x8xf32>
    %cst_38 = arith.constant dense<0.000000e+00> : vector<8xf32>
    %90 = vector.multi_reduction <add>, %89, %cst_38 [1] : vector<8x8xf32> to vector<8xf32>
    %91 = vector.shape_cast %90 : vector<8xf32> to vector<8x1xf32>
    %92 = tpu.reciprocal %91 {approx = true} : vector<8x1xf32> -> vector<8x1xf32>
    %93 = vector.broadcast %92 : vector<8x1xf32> to vector<8x8xf32>
    %94 = arith.mulf %89, %93 : vector<8x8xf32>
    %95 = arith.truncf %94 : vector<8x8xf32> to vector<8x8xbf16>
    %cst_39 = arith.constant dense<0.000000e+00> : vector<8x8xf32>
    %96 = tpu.matmul %95, %81, %cst_39 {dimension_numbers = #tpu.dot_dimension_numbers<[1], [0], [0], [1], [0, 0, 1, 1], [], []>} : vector<8x8xbf16>, vector<8x8xbf16>, vector<8x8xf32> -> vector<8x8xf32>
    %97 = vector.extract_strided_slice %37 {offsets = [0, 24], sizes = [8, 8], strides = [1, 1]} : vector<8x32xf32> to vector<8x8xf32>
    %98 = arith.truncf %97 : vector<8x8xf32> to vector<8x8xbf16>
    %c0_40 = arith.constant 0 : index
    %c24 = arith.constant 24 : index
    %99 = vector.load %arg20[%c0_40, %c24] : memref<8x32xbf16, #tpu.memory_space<vmem>>, vector<8x8xbf16>
    %c0_41 = arith.constant 0 : index
    %c24_42 = arith.constant 24 : index
    %100 = vector.load %arg21[%c0_41, %c24_42] : memref<8x32xbf16, #tpu.memory_space<vmem>>, vector<8x8xbf16>
    %cst_43 = arith.constant dense<0.000000e+00> : vector<8x8xf32>
    %101 = tpu.matmul %98, %99, %cst_43 {dimension_numbers = #tpu.dot_dimension_numbers<[1], [1], [0], [0], [0, 0, 1, 0], [], []>} : vector<8x8xbf16>, vector<8x8xbf16>, vector<8x8xf32> -> vector<8x8xf32>
    %102 = vector.broadcast %39 : vector<1x8xf32> to vector<8x8xf32>
    %103 = arith.addf %101, %102 : vector<8x8xf32>
    %cst_44 = arith.constant dense<0xFF800000> : vector<8xf32>
    %104 = vector.multi_reduction <maximumf>, %103, %cst_44 [1] : vector<8x8xf32> to vector<8xf32>
    %105 = vector.shape_cast %104 : vector<8xf32> to vector<8x1xf32>
    %106 = vector.broadcast %105 : vector<8x1xf32> to vector<8x8xf32>
    %107 = arith.subf %103, %106 : vector<8x8xf32>
    %108 = math.exp %107 : vector<8x8xf32>
    %cst_45 = arith.constant dense<0.000000e+00> : vector<8xf32>
    %109 = vector.multi_reduction <add>, %108, %cst_45 [1] : vector<8x8xf32> to vector<8xf32>
    %110 = vector.shape_cast %109 : vector<8xf32> to vector<8x1xf32>
    %111 = tpu.reciprocal %110 {approx = true} : vector<8x1xf32> -> vector<8x1xf32>
    %112 = vector.broadcast %111 : vector<8x1xf32> to vector<8x8xf32>
    %113 = arith.mulf %108, %112 : vector<8x8xf32>
    %114 = arith.truncf %113 : vector<8x8xf32> to vector<8x8xbf16>
    %cst_46 = arith.constant dense<0.000000e+00> : vector<8x8xf32>
    %115 = tpu.matmul %114, %100, %cst_46 {dimension_numbers = #tpu.dot_dimension_numbers<[1], [0], [0], [1], [0, 0, 1, 1], [], []>} : vector<8x8xbf16>, vector<8x8xbf16>, vector<8x8xf32> -> vector<8x8xf32>
    %116 = tpu.concatenate %58, %77, %96, %115 in 1 : vector<8x8xf32>, vector<8x8xf32>, vector<8x8xf32>, vector<8x8xf32> -> vector<8x32xf32>
    %117 = arith.truncf %116 : vector<8x32xf32> to vector<8x32xbf16>
    %c0_47 = arith.constant 0 : index
    %c0_48 = arith.constant 0 : index
    %118 = vector.load %arg11[%c0_47, %c0_48] : memref<32x32xbf16, #tpu.memory_space<vmem>>, vector<32x32xbf16>
    %cst_49 = arith.constant dense<0.000000e+00> : vector<8x32xf32>
    %119 = tpu.matmul %117, %118, %cst_49 {dimension_numbers = #tpu.dot_dimension_numbers<[1], [0], [0], [1], [0, 0, 1, 1], [], []>} : vector<8x32xbf16>, vector<32x32xbf16>, vector<8x32xf32> -> vector<8x32xf32>
    %c0_50 = arith.constant 0 : index
    %c0_51 = arith.constant 0 : index
    %120 = vector.load %arg12[%c0_50, %c0_51] : memref<1x32xf32, #tpu.memory_space<vmem>>, vector<1x32xf32>
    %121 = vector.broadcast %120 : vector<1x32xf32> to vector<8x32xf32>
    %122 = arith.addf %119, %121 : vector<8x32xf32>
    %123 = arith.addf %31, %122 : vector<8x32xf32>
    %124 = arith.truncf %123 : vector<8x32xf32> to vector<8x32xbf16>
    %c0_52 = arith.constant 0 : index
    %c0_53 = arith.constant 0 : index
    %125 = vector.load %arg13[%c0_52, %c0_53] : memref<32x32xbf16, #tpu.memory_space<vmem>>, vector<32x32xbf16>
    %cst_54 = arith.constant dense<0.000000e+00> : vector<8x32xf32>
    %126 = tpu.matmul %124, %125, %cst_54 {dimension_numbers = #tpu.dot_dimension_numbers<[1], [0], [0], [1], [0, 0, 1, 1], [], []>} : vector<8x32xbf16>, vector<32x32xbf16>, vector<8x32xf32> -> vector<8x32xf32>
    %c0_55 = arith.constant 0 : index
    %c0_56 = arith.constant 0 : index
    %127 = vector.load %arg14[%c0_55, %c0_56] : memref<1x32xf32, #tpu.memory_space<vmem>>, vector<1x32xf32>
    %128 = vector.broadcast %127 : vector<1x32xf32> to vector<8x32xf32>
    %129 = arith.addf %126, %128 : vector<8x32xf32>
    %130 = arith.negf %129 : vector<8x32xf32>
    %131 = math.exp %130 : vector<8x32xf32>
    %cst_57 = arith.constant 1.000000e+00 : f32
    %132 = vector.broadcast %cst_57 : f32 to vector<8x32xf32>
    %133 = arith.addf %132, %131 : vector<8x32xf32>
    %134 = arith.divf %132, %133 : vector<8x32xf32>
    %135 = arith.mulf %129, %134 : vector<8x32xf32>
    %136 = arith.truncf %135 : vector<8x32xf32> to vector<8x32xbf16>
    %c0_58 = arith.constant 0 : index
    %c0_59 = arith.constant 0 : index
    %137 = vector.load %arg15[%c0_58, %c0_59] : memref<32x32xbf16, #tpu.memory_space<vmem>>, vector<32x32xbf16>
    %cst_60 = arith.constant dense<0.000000e+00> : vector<8x32xf32>
    %138 = tpu.matmul %136, %137, %cst_60 {dimension_numbers = #tpu.dot_dimension_numbers<[1], [0], [0], [1], [0, 0, 1, 1], [], []>} : vector<8x32xbf16>, vector<32x32xbf16>, vector<8x32xf32> -> vector<8x32xf32>
    %c0_61 = arith.constant 0 : index
    %c0_62 = arith.constant 0 : index
    %139 = vector.load %arg16[%c0_61, %c0_62] : memref<1x32xf32, #tpu.memory_space<vmem>>, vector<1x32xf32>
    %140 = vector.broadcast %139 : vector<1x32xf32> to vector<8x32xf32>
    %141 = arith.addf %138, %140 : vector<8x32xf32>
    %142 = arith.negf %141 : vector<8x32xf32>
    %143 = math.exp %142 : vector<8x32xf32>
    %cst_63 = arith.constant 1.000000e+00 : f32
    %144 = vector.broadcast %cst_63 : f32 to vector<8x32xf32>
    %145 = arith.addf %144, %143 : vector<8x32xf32>
    %146 = arith.divf %144, %145 : vector<8x32xf32>
    %147 = arith.mulf %141, %146 : vector<8x32xf32>
    %148 = arith.truncf %147 : vector<8x32xf32> to vector<8x32xbf16>
    %c0_64 = arith.constant 0 : index
    %c0_65 = arith.constant 0 : index
    %149 = vector.load %arg17[%c0_64, %c0_65] : memref<32x32xbf16, #tpu.memory_space<vmem>>, vector<32x32xbf16>
    %cst_66 = arith.constant dense<0.000000e+00> : vector<8x32xf32>
    %150 = tpu.matmul %148, %149, %cst_66 {dimension_numbers = #tpu.dot_dimension_numbers<[1], [0], [0], [1], [0, 0, 1, 1], [], []>} : vector<8x32xbf16>, vector<32x32xbf16>, vector<8x32xf32> -> vector<8x32xf32>
    %c0_67 = arith.constant 0 : index
    %c0_68 = arith.constant 0 : index
    %151 = vector.load %arg18[%c0_67, %c0_68] : memref<1x32xf32, #tpu.memory_space<vmem>>, vector<1x32xf32>
    %152 = vector.broadcast %151 : vector<1x32xf32> to vector<8x32xf32>
    %153 = arith.addf %150, %152 : vector<8x32xf32>
    %c0_69 = arith.constant 0 : index
    %c0_70 = arith.constant 0 : index
    %c0_71 = arith.constant 0 : index
    %154 = vector.load %arg4[%c0_69, %c0_70, %c0_71] : memref<1x8x1xf32, #tpu.memory_space<vmem>>, vector<1x8x1xf32>
    %155 = vector.shape_cast %154 : vector<1x8x1xf32> to vector<8x1xf32>
    %156 = vector.broadcast %155 : vector<8x1xf32> to vector<8x32xf32>
    %157 = arith.mulf %153, %156 : vector<8x32xf32>
    %158 = arith.addf %123, %157 : vector<8x32xf32>
    %c0_72 = arith.constant 0 : index
    %c0_73 = arith.constant 0 : index
    %c0_74 = arith.constant 0 : index
    %159 = vector.load %arg19[%c0_72, %c0_73, %c0_74] : memref<1x8x32xf32, #tpu.memory_space<vmem>>, vector<1x8x32xf32>
    %160 = vector.shape_cast %159 : vector<1x8x32xf32> to vector<8x32xf32>
    %161 = vector.shape_cast %158 : vector<8x32xf32> to vector<1x8x32xf32>
    tpu.vector_store %arg19[%c0_72, %c0_73, %c0_74], %161 {strides = array<i32>} : memref<1x8x32xf32, #tpu.memory_space<vmem>>, vector<1x8x32xf32>,
    return
  }
  func.func @transform_0(%arg0: i32, %arg1: i32) -> (i32, i32, i32) {
    %c0_i32 = arith.constant 0 : i32
    %c0_i32_0 = arith.constant 0 : i32
    %c0_i32_1 = arith.constant 0 : i32
    return %arg0, %c0_i32, %c0_i32_0 : i32, i32, i32
  }
  func.func @transform_1(%arg0: i32, %arg1: i32) -> (i32, i32, i32) {
    %c0_i32 = arith.constant 0 : i32
    %c0_i32_0 = arith.constant 0 : i32
    %c0_i32_1 = arith.constant 0 : i32
    return %arg0, %c0_i32, %c0_i32_0 : i32, i32, i32
  }
  func.func @transform_2(%arg0: i32, %arg1: i32) -> (i32, i32, i32) {
    %c0_i32 = arith.constant 0 : i32
    %c0_i32_0 = arith.constant 0 : i32
    return %arg0, %arg1, %c0_i32 : i32, i32, i32
  }
  func.func @transform_3(%arg0: i32, %arg1: i32) -> (i32, i32) {
    %c0_i32 = arith.constant 0 : i32
    %c0_i32_0 = arith.constant 0 : i32
    %c0_i32_1 = arith.constant 0 : i32
    return %c0_i32, %c0_i32_0 : i32, i32
  }
  func.func @transform_4(%arg0: i32, %arg1: i32) -> (i32, i32) {
    %c0_i32 = arith.constant 0 : i32
    %c0_i32_0 = arith.constant 0 : i32
    %c0_i32_1 = arith.constant 0 : i32
    return %c0_i32, %c0_i32_0 : i32, i32
  }
  func.func @transform_5(%arg0: i32, %arg1: i32) -> (i32, i32) {
    %c0_i32 = arith.constant 0 : i32
    %c0_i32_0 = arith.constant 0 : i32
    %c0_i32_1 = arith.constant 0 : i32
    return %c0_i32, %c0_i32_0 : i32, i32
  }
  func.func @transform_6(%arg0: i32, %arg1: i32) -> (i32, i32) {
    %c0_i32 = arith.constant 0 : i32
    %c0_i32_0 = arith.constant 0 : i32
    %c0_i32_1 = arith.constant 0 : i32
    return %c0_i32, %c0_i32_0 : i32, i32
  }
  func.func @transform_7(%arg0: i32, %arg1: i32) -> (i32, i32) {
    %c0_i32 = arith.constant 0 : i32
    %c0_i32_0 = arith.constant 0 : i32
    %c0_i32_1 = arith.constant 0 : i32
    return %c0_i32, %c0_i32_0 : i32, i32
  }
  func.func @transform_8(%arg0: i32, %arg1: i32) -> (i32, i32) {
    %c0_i32 = arith.constant 0 : i32
    %c0_i32_0 = arith.constant 0 : i32
    %c0_i32_1 = arith.constant 0 : i32
    return %c0_i32, %c0_i32_0 : i32, i32
  }
  func.func @transform_9(%arg0: i32, %arg1: i32) -> (i32, i32) {
    %c0_i32 = arith.constant 0 : i32
    %c0_i32_0 = arith.constant 0 : i32
    %c0_i32_1 = arith.constant 0 : i32
    return %c0_i32, %c0_i32_0 : i32, i32
  }
  func.func @transform_10(%arg0: i32, %arg1: i32) -> (i32, i32) {
    %c0_i32 = arith.constant 0 : i32
    %c0_i32_0 = arith.constant 0 : i32
    %c0_i32_1 = arith.constant 0 : i32
    return %c0_i32, %c0_i32_0 : i32, i32
  }
  func.func @transform_11(%arg0: i32, %arg1: i32) -> (i32, i32) {
    %c0_i32 = arith.constant 0 : i32
    %c0_i32_0 = arith.constant 0 : i32
    %c0_i32_1 = arith.constant 0 : i32
    return %c0_i32, %c0_i32_0 : i32, i32
  }
  func.func @transform_12(%arg0: i32, %arg1: i32) -> (i32, i32) {
    %c0_i32 = arith.constant 0 : i32
    %c0_i32_0 = arith.constant 0 : i32
    %c0_i32_1 = arith.constant 0 : i32
    return %c0_i32, %c0_i32_0 : i32, i32
  }
  func.func @transform_13(%arg0: i32, %arg1: i32) -> (i32, i32) {
    %c0_i32 = arith.constant 0 : i32
    %c0_i32_0 = arith.constant 0 : i32
    %c0_i32_1 = arith.constant 0 : i32
    return %c0_i32, %c0_i32_0 : i32, i32
  }
  func.func @transform_14(%arg0: i32, %arg1: i32) -> (i32, i32) {
    %c0_i32 = arith.constant 0 : i32
    %c0_i32_0 = arith.constant 0 : i32
    %c0_i32_1 = arith.constant 0 : i32
    return %c0_i32, %c0_i32_0 : i32, i32
  }
  func.func @transform_15(%arg0: i32, %arg1: i32) -> (i32, i32) {
    %c0_i32 = arith.constant 0 : i32
    %c0_i32_0 = arith.constant 0 : i32
    %c0_i32_1 = arith.constant 0 : i32
    return %c0_i32, %c0_i32_0 : i32, i32
  }
  func.func @transform_16(%arg0: i32, %arg1: i32) -> (i32, i32) {
    %c0_i32 = arith.constant 0 : i32
    %c0_i32_0 = arith.constant 0 : i32
    %c0_i32_1 = arith.constant 0 : i32
    return %c0_i32, %c0_i32_0 : i32, i32
  }
  func.func @transform_17(%arg0: i32, %arg1: i32) -> (i32, i32, i32) {
    %c0_i32 = arith.constant 0 : i32
    %c0_i32_0 = arith.constant 0 : i32
    return %arg0, %arg1, %c0_i32 : i32, i32, i32
  }
}

module attributes {stable_mosaic.version = 11 : i64} {
  func.func @_atom_kernel(%arg0: i32, %arg1: i32, %arg2: memref<1x8x32xf32, #tpu.memory_space<vmem>>, %arg3: memref<1x1x8xf32, #tpu.memory_space<vmem>>, %arg4: memref<1x8x1xf32, #tpu.memory_space<vmem>>, %arg5: memref<1x32xf32, #tpu.memory_space<vmem>>, %arg6: memref<1x32xf32, #tpu.memory_space<vmem>>, %arg7: memref<32x32xbf16, #tpu.memory_space<vmem>>, %arg8: memref<1x32xf32, #tpu.memory_space<vmem>>, %arg9: memref<32x64xbf16, #tpu.memory_space<vmem>>, %arg10: memref<1x64xf32, #tpu.memory_space<vmem>>, %arg11: memref<32x32xbf16, #tpu.memory_space<vmem>>, %arg12: memref<1x32xf32, #tpu.memory_space<vmem>>, %arg13: memref<32x32xbf16, #tpu.memory_space<vmem>>, %arg14: memref<1x32xf32, #tpu.memory_space<vmem>>, %arg15: memref<32x32xbf16, #tpu.memory_space<vmem>>, %arg16: memref<1x32xf32, #tpu.memory_space<vmem>>, %arg17: memref<32x32xbf16, #tpu.memory_space<vmem>>, %arg18: memref<1x32xf32, #tpu.memory_space<vmem>>, %arg19: memref<1x8x32xf32, #tpu.memory_space<vmem>>, %arg20: memref<8x32xbf16, #tpu.memory_space<vmem>>, %arg21: memref<8x32xbf16, #tpu.memory_space<vmem>>) attributes {dimension_semantics = [#tpu.dimension_semantics<parallel>, #tpu.dimension_semantics<arbitrary>], iteration_bounds = array<i64: 2, 1>, scalar_prefetch = 0 : i64, scratch_operands = 2 : i64, tpu.core_type = #tpu.core_type<tc>, window_params = [{transform_indices = @transform_0, window_bounds = array<i64: 1, 8, 32>}, {transform_indices = @transform_1, window_bounds = array<i64: 1, 1, 8>}, {transform_indices = @transform_2, window_bounds = array<i64: 1, 8, 1>}, {pipeline_mode = #tpu.pipeline_mode<synchronous>, transform_indices = @transform_3, window_bounds = array<i64: 1, 32>}, {pipeline_mode = #tpu.pipeline_mode<synchronous>, transform_indices = @transform_4, window_bounds = array<i64: 1, 32>}, {pipeline_mode = #tpu.pipeline_mode<synchronous>, transform_indices = @transform_5, window_bounds = array<i64: 32, 32>}, {pipeline_mode = #tpu.pipeline_mode<synchronous>, transform_indices = @transform_6, window_bounds = array<i64: 1, 32>}, {pipeline_mode = #tpu.pipeline_mode<synchronous>, transform_indices = @transform_7, window_bounds = array<i64: 32, 64>}, {pipeline_mode = #tpu.pipeline_mode<synchronous>, transform_indices = @transform_8, window_bounds = array<i64: 1, 64>}, {pipeline_mode = #tpu.pipeline_mode<synchronous>, transform_indices = @transform_9, window_bounds = array<i64: 32, 32>}, {pipeline_mode = #tpu.pipeline_mode<synchronous>, transform_indices = @transform_10, window_bounds = array<i64: 1, 32>}, {pipeline_mode = #tpu.pipeline_mode<synchronous>, transform_indices = @transform_11, window_bounds = array<i64: 32, 32>}, {pipeline_mode = #tpu.pipeline_mode<synchronous>, transform_indices = @transform_12, window_bounds = array<i64: 1, 32>}, {pipeline_mode = #tpu.pipeline_mode<synchronous>, transform_indices = @transform_13, window_bounds = array<i64: 32, 32>}, {pipeline_mode = #tpu.pipeline_mode<synchronous>, transform_indices = @transform_14, window_bounds = array<i64: 1, 32>}, {pipeline_mode = #tpu.pipeline_mode<synchronous>, transform_indices = @transform_15, window_bounds = array<i64: 32, 32>}, {pipeline_mode = #tpu.pipeline_mode<synchronous>, transform_indices = @transform_16, window_bounds = array<i64: 1, 32>}, {transform_indices = @transform_17, window_bounds = array<i64: 1, 8, 32>}]} {
    %c0 = arith.constant 0 : index
    %c0_0 = arith.constant 0 : index
    %0 = vector.load %arg5[%c0, %c0_0] : memref<1x32xf32, #tpu.memory_space<vmem>>, vector<1x32xf32>
    %c0_1 = arith.constant 0 : index
    %c0_2 = arith.constant 0 : index
    %1 = vector.load %arg6[%c0_1, %c0_2] : memref<1x32xf32, #tpu.memory_space<vmem>>, vector<1x32xf32>
    %c0_i32 = arith.constant 0 : i32
    %2 = arith.cmpi eq, %arg1, %c0_i32 : i32
    %3 = arith.extui %2 : i1 to i32
    %c0_i32_3 = arith.constant 0 : i32
    %4 = arith.cmpi ne, %3, %c0_i32_3 : i32
    scf.if %4 {
      %c0_75 = arith.constant 0 : index
      %c0_76 = arith.constant 0 : index
      %c0_77 = arith.constant 0 : index
      %162 = vector.load %arg2[%c0_75, %c0_76, %c0_77] : memref<1x8x32xf32, #tpu.memory_space<vmem>>, vector<1x8x32xf32>
      %163 = vector.shape_cast %162 : vector<1x8x32xf32> to vector<8x32xf32>
      %cst_78 = arith.constant dense<0.000000e+00> : vector<8xf32>
      %164 = vector.multi_reduction <add>, %163, %cst_78 [1] : vector<8x32xf32> to vector<8xf32>
      %165 = vector.shape_cast %164 : vector<8xf32> to vector<8x1xf32>
      %cst_79 = arith.constant 3.200000e+01 : f32
      %166 = vector.broadcast %cst_79 : f32 to vector<8x1xf32>
      %167 = arith.divf %165, %166 : vector<8x1xf32>
      %168 = vector.broadcast %167 : vector<8x1xf32> to vector<8x32xf32>
      %169 = arith.subf %163, %168 : vector<8x32xf32>
      %170 = arith.mulf %169, %169 : vector<8x32xf32>
      %cst_80 = arith.constant dense<0.000000e+00> : vector<8xf32>
      %171 = vector.multi_reduction <add>, %170, %cst_80 [1] : vector<8x32xf32> to vector<8xf32>
      %172 = vector.shape_cast %171 : vector<8xf32> to vector<8x1xf32>
      %cst_81 = arith.constant 3.200000e+01 : f32
      %173 = vector.broadcast %cst_81 : f32 to vector<8x1xf32>
      %174 = arith.divf %172, %173 : vector<8x1xf32>
      %175 = vector.broadcast %167 : vector<8x1xf32> to vector<8x32xf32>
      %176 = arith.subf %163, %175 : vector<8x32xf32>
      %cst_82 = arith.constant 9.99999974E-6 : f32
      %177 = vector.broadcast %cst_82 : f32 to vector<8x1xf32>
      %178 = arith.addf %174, %177 : vector<8x1xf32>
      %179 = math.rsqrt %178 : vector<8x1xf32>
      %180 = vector.broadcast %179 : vector<8x1xf32> to vector<8x32xf32>
      %181 = arith.mulf %176, %180 : vector<8x32xf32>
      %182 = vector.broadcast %0 : vector<1x32xf32> to vector<8x32xf32>
      %183 = arith.mulf %181, %182 : vector<8x32xf32>
      %184 = vector.broadcast %1 : vector<1x32xf32> to vector<8x32xf32>
      %185 = arith.addf %183, %184 : vector<8x32xf32>
      %186 = arith.truncf %185 : vector<8x32xf32> to vector<8x32xbf16>
      %c0_83 = arith.constant 0 : index
      %c0_84 = arith.constant 0 : index
      %187 = vector.load %arg9[%c0_83, %c0_84] : memref<32x64xbf16, #tpu.memory_space<vmem>>, vector<32x64xbf16>
      %cst_85 = arith.constant dense<0.000000e+00> : vector<8x64xf32>
      %188 = tpu.matmul %186, %187, %cst_85 {dimension_numbers = #tpu.dot_dimension_numbers<[1], [0], [0], [1], [0, 0, 1, 1], [], []>} : vector<8x32xbf16>, vector<32x64xbf16>, vector<8x64xf32> -> vector<8x64xf32>
      %c0_86 = arith.constant 0 : index
      %c0_87 = arith.constant 0 : index
      %189 = vector.load %arg10[%c0_86, %c0_87] : memref<1x64xf32, #tpu.memory_space<vmem>>, vector<1x64xf32>
      %190 = vector.broadcast %189 : vector<1x64xf32> to vector<8x64xf32>
      %191 = arith.addf %188, %190 : vector<8x64xf32>
      %192 = vector.extract_strided_slice %191 {offsets = [0, 0], sizes = [8, 32], strides = [1, 1]} : vector<8x64xf32> to vector<8x32xf32>
      %193 = arith.truncf %192 : vector<8x32xf32> to vector<8x32xbf16>
      %c0_88 = arith.constant 0 : index
      %c0_89 = arith.constant 0 : index
      %194 = vector.load %arg20[%c0_88, %c0_89] : memref<8x32xbf16, #tpu.memory_space<vmem>>, vector<8x32xbf16>
      tpu.vector_store %arg20[%c0_88, %c0_89], %193 {strides = array<i32>} : memref<8x32xbf16, #tpu.memory_space<vmem>>, vector<8x32xbf16>,
      %195 = vector.extract_strided_slice %191 {offsets = [0, 32], sizes = [8, 32], strides = [1, 1]} : vector<8x64xf32> to vector<8x32xf32>
      %196 = arith.truncf %195 : vector<8x32xf32> to vector<8x32xbf16>
      %c0_90 = arith.constant 0 : index
      %c0_91 = arith.constant 0 : index
      %197 = vector.load %arg21[%c0_90, %c0_91] : memref<8x32xbf16, #tpu.memory_space<vmem>>, vector<8x32xbf16>
      tpu.vector_store %arg21[%c0_90, %c0_91], %196 {strides = array<i32>} : memref<8x32xbf16, #tpu.memory_space<vmem>>, vector<8x32xbf16>,
    } else {
    }
    %c8_i32 = arith.constant 8 : i32
    %5 = arith.muli %arg1, %c8_i32 : i32
    %6 = tpu.assume_multiple %5, 8 : i32
    %c0_4 = arith.constant 0 : index
    %7 = arith.index_cast %6 : i32 to index
    %c0_5 = arith.constant 0 : index
    %8 = vector.load %arg2[%c0_4, %7, %c0_5] : memref<1x8x32xf32, #tpu.memory_space<vmem>>, vector<1x8x32xf32>
    %9 = vector.shape_cast %8 : vector<1x8x32xf32> to vector<8x32xf32>
    %cst = arith.constant dense<0.000000e+00> : vector<8xf32>
    %10 = vector.multi_reduction <add>, %9, %cst [1] : vector<8x32xf32> to vector<8xf32>
    %11 = vector.shape_cast %10 : vector<8xf32> to vector<8x1xf32>
    %cst_6 = arith.constant 3.200000e+01 : f32
    %12 = vector.broadcast %cst_6 : f32 to vector<8x1xf32>
    %13 = arith.divf %11, %12 : vector<8x1xf32>
    %14 = vector.broadcast %13 : vector<8x1xf32> to vector<8x32xf32>
    %15 = arith.subf %9, %14 : vector<8x32xf32>
    %16 = arith.mulf %15, %15 : vector<8x32xf32>
    %cst_7 = arith.constant dense<0.000000e+00> : vector<8xf32>
    %17 = vector.multi_reduction <add>, %16, %cst_7 [1] : vector<8x32xf32> to vector<8xf32>
    %18 = vector.shape_cast %17 : vector<8xf32> to vector<8x1xf32>
    %cst_8 = arith.constant 3.200000e+01 : f32
    %19 = vector.broadcast %cst_8 : f32 to vector<8x1xf32>
    %20 = arith.divf %18, %19 : vector<8x1xf32>
    %21 = vector.broadcast %13 : vector<8x1xf32> to vector<8x32xf32>
    %22 = arith.subf %9, %21 : vector<8x32xf32>
    %cst_9 = arith.constant 9.99999974E-6 : f32
    %23 = vector.broadcast %cst_9 : f32 to vector<8x1xf32>
    %24 = arith.addf %20, %23 : vector<8x1xf32>
    %25 = math.rsqrt %24 : vector<8x1xf32>
    %26 = vector.broadcast %25 : vector<8x1xf32> to vector<8x32xf32>
    %27 = arith.mulf %22, %26 : vector<8x32xf32>
    %28 = vector.broadcast %0 : vector<1x32xf32> to vector<8x32xf32>
    %29 = arith.mulf %27, %28 : vector<8x32xf32>
    %30 = vector.broadcast %1 : vector<1x32xf32> to vector<8x32xf32>
    %31 = arith.addf %29, %30 : vector<8x32xf32>
    %32 = arith.truncf %31 : vector<8x32xf32> to vector<8x32xbf16>
    %c0_10 = arith.constant 0 : index
    %c0_11 = arith.constant 0 : index
    %33 = vector.load %arg7[%c0_10, %c0_11] : memref<32x32xbf16, #tpu.memory_space<vmem>>, vector<32x32xbf16>
    %cst_12 = arith.constant dense<0.000000e+00> : vector<8x32xf32>
    %34 = tpu.matmul %32, %33, %cst_12 {dimension_numbers = #tpu.dot_dimension_numbers<[1], [0], [0], [1], [0, 0, 1, 1], [], []>} : vector<8x32xbf16>, vector<32x32xbf16>, vector<8x32xf32> -> vector<8x32xf32>
    %c0_13 = arith.constant 0 : index
    %c0_14 = arith.constant 0 : index
    %35 = vector.load %arg8[%c0_13, %c0_14] : memref<1x32xf32, #tpu.memory_space<vmem>>, vector<1x32xf32>
    %36 = vector.broadcast %35 : vector<1x32xf32> to vector<8x32xf32>
    %37 = arith.addf %34, %36 : vector<8x32xf32>
    %c0_15 = arith.constant 0 : index
    %c0_16 = arith.constant 0 : index
    %c0_17 = arith.constant 0 : index
    %38 = vector.load %arg3[%c0_15, %c0_16, %c0_17] : memref<1x1x8xf32, #tpu.memory_space<vmem>>, vector<1x1x8xf32>
    %39 = vector.shape_cast %38 : vector<1x1x8xf32> to vector<1x8xf32>
    %40 = vector.extract_strided_slice %37 {offsets = [0, 0], sizes = [8, 8], strides = [1, 1]} : vector<8x32xf32> to vector<8x8xf32>
    %41 = arith.truncf %40 : vector<8x8xf32> to vector<8x8xbf16>
    %c0_18 = arith.constant 0 : index
    %c0_19 = arith.constant 0 : index
    %42 = vector.load %arg20[%c0_18, %c0_19] : memref<8x32xbf16, #tpu.memory_space<vmem>>, vector<8x8xbf16>
    %c0_20 = arith.constant 0 : index
    %c0_21 = arith.constant 0 : index
    %43 = vector.load %arg21[%c0_20, %c0_21] : memref<8x32xbf16, #tpu.memory_space<vmem>>, vector<8x8xbf16>
    %cst_22 = arith.constant dense<0.000000e+00> : vector<8x8xf32>
    %44 = tpu.matmul %41, %42, %cst_22 {dimension_numbers = #tpu.dot_dimension_numbers<[1], [1], [0], [0], [0, 0, 1, 0], [], []>} : vector<8x8xbf16>, vector<8x8xbf16>, vector<8x8xf32> -> vector<8x8xf32>
    %45 = vector.broadcast %39 : vector<1x8xf32> to vector<8x8xf32>
    %46 = arith.addf %44, %45 : vector<8x8xf32>
    %cst_23 = arith.constant dense<0xFF800000> : vector<8xf32>
    %47 = vector.multi_reduction <maximumf>, %46, %cst_23 [1] : vector<8x8xf32> to vector<8xf32>
    %48 = vector.shape_cast %47 : vector<8xf32> to vector<8x1xf32>
    %49 = vector.broadcast %48 : vector<8x1xf32> to vector<8x8xf32>
    %50 = arith.subf %46, %49 : vector<8x8xf32>
    %51 = math.exp %50 : vector<8x8xf32>
    %cst_24 = arith.constant dense<0.000000e+00> : vector<8xf32>
    %52 = vector.multi_reduction <add>, %51, %cst_24 [1] : vector<8x8xf32> to vector<8xf32>
    %53 = vector.shape_cast %52 : vector<8xf32> to vector<8x1xf32>
    %54 = tpu.reciprocal %53 {approx = true} : vector<8x1xf32> -> vector<8x1xf32>
    %55 = vector.broadcast %54 : vector<8x1xf32> to vector<8x8xf32>
    %56 = arith.mulf %51, %55 : vector<8x8xf32>
    %57 = arith.truncf %56 : vector<8x8xf32> to vector<8x8xbf16>
    %cst_25 = arith.constant dense<0.000000e+00> : vector<8x8xf32>
    %58 = tpu.matmul %57, %43, %cst_25 {dimension_numbers = #tpu.dot_dimension_numbers<[1], [0], [0], [1], [0, 0, 1, 1], [], []>} : vector<8x8xbf16>, vector<8x8xbf16>, vector<8x8xf32> -> vector<8x8xf32>
    %59 = vector.extract_strided_slice %37 {offsets = [0, 8], sizes = [8, 8], strides = [1, 1]} : vector<8x32xf32> to vector<8x8xf32>
    %60 = arith.truncf %59 : vector<8x8xf32> to vector<8x8xbf16>
    %c0_26 = arith.constant 0 : index
    %c8 = arith.constant 8 : index
    %61 = vector.load %arg20[%c0_26, %c8] : memref<8x32xbf16, #tpu.memory_space<vmem>>, vector<8x8xbf16>
    %c0_27 = arith.constant 0 : index
    %c8_28 = arith.constant 8 : index
    %62 = vector.load %arg21[%c0_27, %c8_28] : memref<8x32xbf16, #tpu.memory_space<vmem>>, vector<8x8xbf16>
    %cst_29 = arith.constant dense<0.000000e+00> : vector<8x8xf32>
    %63 = tpu.matmul %60, %61, %cst_29 {dimension_numbers = #tpu.dot_dimension_numbers<[1], [1], [0], [0], [0, 0, 1, 0], [], []>} : vector<8x8xbf16>, vector<8x8xbf16>, vector<8x8xf32> -> vector<8x8xf32>
    %64 = vector.broadcast %39 : vector<1x8xf32> to vector<8x8xf32>
    %65 = arith.addf %63, %64 : vector<8x8xf32>
    %cst_30 = arith.constant dense<0xFF800000> : vector<8xf32>
    %66 = vector.multi_reduction <maximumf>, %65, %cst_30 [1] : vector<8x8xf32> to vector<8xf32>
    %67 = vector.shape_cast %66 : vector<8xf32> to vector<8x1xf32>
    %68 = vector.broadcast %67 : vector<8x1xf32> to vector<8x8xf32>
    %69 = arith.subf %65, %68 : vector<8x8xf32>
    %70 = math.exp %69 : vector<8x8xf32>
    %cst_31 = arith.constant dense<0.000000e+00> : vector<8xf32>
    %71 = vector.multi_reduction <add>, %70, %cst_31 [1] : vector<8x8xf32> to vector<8xf32>
    %72 = vector.shape_cast %71 : vector<8xf32> to vector<8x1xf32>
    %73 = tpu.reciprocal %72 {approx = true} : vector<8x1xf32> -> vector<8x1xf32>
    %74 = vector.broadcast %73 : vector<8x1xf32> to vector<8x8xf32>
    %75 = arith.mulf %70, %74 : vector<8x8xf32>
    %76 = arith.truncf %75 : vector<8x8xf32> to vector<8x8xbf16>
    %cst_32 = arith.constant dense<0.000000e+00> : vector<8x8xf32>
    %77 = tpu.matmul %76, %62, %cst_32 {dimension_numbers = #tpu.dot_dimension_numbers<[1], [0], [0], [1], [0, 0, 1, 1], [], []>} : vector<8x8xbf16>, vector<8x8xbf16>, vector<8x8xf32> -> vector<8x8xf32>
    %78 = vector.extract_strided_slice %37 {offsets = [0, 16], sizes = [8, 8], strides = [1, 1]} : vector<8x32xf32> to vector<8x8xf32>
    %79 = arith.truncf %78 : vector<8x8xf32> to vector<8x8xbf16>
    %c0_33 = arith.constant 0 : index
    %c16 = arith.constant 16 : index
    %80 = vector.load %arg20[%c0_33, %c16] : memref<8x32xbf16, #tpu.memory_space<vmem>>, vector<8x8xbf16>
    %c0_34 = arith.constant 0 : index
    %c16_35 = arith.constant 16 : index
    %81 = vector.load %arg21[%c0_34, %c16_35] : memref<8x32xbf16, #tpu.memory_space<vmem>>, vector<8x8xbf16>
    %cst_36 = arith.constant dense<0.000000e+00> : vector<8x8xf32>
    %82 = tpu.matmul %79, %80, %cst_36 {dimension_numbers = #tpu.dot_dimension_numbers<[1], [1], [0], [0], [0, 0, 1, 0], [], []>} : vector<8x8xbf16>, vector<8x8xbf16>, vector<8x8xf32> -> vector<8x8xf32>
    %83 = vector.broadcast %39 : vector<1x8xf32> to vector<8x8xf32>
    %84 = arith.addf %82, %83 : vector<8x8xf32>
    %cst_37 = arith.constant dense<0xFF800000> : vector<8xf32>
    %85 = vector.multi_reduction <maximumf>, %84, %cst_37 [1] : vector<8x8xf32> to vector<8xf32>
    %86 = vector.shape_cast %85 : vector<8xf32> to vector<8x1xf32>
    %87 = vector.broadcast %86 : vector<8x1xf32> to vector<8x8xf32>
    %88 = arith.subf %84, %87 : vector<8x8xf32>
    %89 = math.exp %88 : vector<8x8xf32>
    %cst_38 = arith.constant dense<0.000000e+00> : vector<8xf32>
    %90 = vector.multi_reduction <add>, %89, %cst_38 [1] : vector<8x8xf32> to vector<8xf32>
    %91 = vector.shape_cast %90 : vector<8xf32> to vector<8x1xf32>
    %92 = tpu.reciprocal %91 {approx = true} : vector<8x1xf32> -> vector<8x1xf32>
    %93 = vector.broadcast %92 : vector<8x1xf32> to vector<8x8xf32>
    %94 = arith.mulf %89, %93 : vector<8x8xf32>
    %95 = arith.truncf %94 : vector<8x8xf32> to vector<8x8xbf16>
    %cst_39 = arith.constant dense<0.000000e+00> : vector<8x8xf32>
    %96 = tpu.matmul %95, %81, %cst_39 {dimension_numbers = #tpu.dot_dimension_numbers<[1], [0], [0], [1], [0, 0, 1, 1], [], []>} : vector<8x8xbf16>, vector<8x8xbf16>, vector<8x8xf32> -> vector<8x8xf32>
    %97 = vector.extract_strided_slice %37 {offsets = [0, 24], sizes = [8, 8], strides = [1, 1]} : vector<8x32xf32> to vector<8x8xf32>
    %98 = arith.truncf %97 : vector<8x8xf32> to vector<8x8xbf16>
    %c0_40 = arith.constant 0 : index
    %c24 = arith.constant 24 : index
    %99 = vector.load %arg20[%c0_40, %c24] : memref<8x32xbf16, #tpu.memory_space<vmem>>, vector<8x8xbf16>
    %c0_41 = arith.constant 0 : index
    %c24_42 = arith.constant 24 : index
    %100 = vector.load %arg21[%c0_41, %c24_42] : memref<8x32xbf16, #tpu.memory_space<vmem>>, vector<8x8xbf16>
    %cst_43 = arith.constant dense<0.000000e+00> : vector<8x8xf32>
    %101 = tpu.matmul %98, %99, %cst_43 {dimension_numbers = #tpu.dot_dimension_numbers<[1], [1], [0], [0], [0, 0, 1, 0], [], []>} : vector<8x8xbf16>, vector<8x8xbf16>, vector<8x8xf32> -> vector<8x8xf32>
    %102 = vector.broadcast %39 : vector<1x8xf32> to vector<8x8xf32>
    %103 = arith.addf %101, %102 : vector<8x8xf32>
    %cst_44 = arith.constant dense<0xFF800000> : vector<8xf32>
    %104 = vector.multi_reduction <maximumf>, %103, %cst_44 [1] : vector<8x8xf32> to vector<8xf32>
    %105 = vector.shape_cast %104 : vector<8xf32> to vector<8x1xf32>
    %106 = vector.broadcast %105 : vector<8x1xf32> to vector<8x8xf32>
    %107 = arith.subf %103, %106 : vector<8x8xf32>
    %108 = math.exp %107 : vector<8x8xf32>
    %cst_45 = arith.constant dense<0.000000e+00> : vector<8xf32>
    %109 = vector.multi_reduction <add>, %108, %cst_45 [1] : vector<8x8xf32> to vector<8xf32>
    %110 = vector.shape_cast %109 : vector<8xf32> to vector<8x1xf32>
    %111 = tpu.reciprocal %110 {approx = true} : vector<8x1xf32> -> vector<8x1xf32>
    %112 = vector.broadcast %111 : vector<8x1xf32> to vector<8x8xf32>
    %113 = arith.mulf %108, %112 : vector<8x8xf32>
    %114 = arith.truncf %113 : vector<8x8xf32> to vector<8x8xbf16>
    %cst_46 = arith.constant dense<0.000000e+00> : vector<8x8xf32>
    %115 = tpu.matmul %114, %100, %cst_46 {dimension_numbers = #tpu.dot_dimension_numbers<[1], [0], [0], [1], [0, 0, 1, 1], [], []>} : vector<8x8xbf16>, vector<8x8xbf16>, vector<8x8xf32> -> vector<8x8xf32>
    %116 = tpu.concatenate %58, %77, %96, %115 in 1 : vector<8x8xf32>, vector<8x8xf32>, vector<8x8xf32>, vector<8x8xf32> -> vector<8x32xf32>
    %117 = arith.truncf %116 : vector<8x32xf32> to vector<8x32xbf16>
    %c0_47 = arith.constant 0 : index
    %c0_48 = arith.constant 0 : index
    %118 = vector.load %arg11[%c0_47, %c0_48] : memref<32x32xbf16, #tpu.memory_space<vmem>>, vector<32x32xbf16>
    %cst_49 = arith.constant dense<0.000000e+00> : vector<8x32xf32>
    %119 = tpu.matmul %117, %118, %cst_49 {dimension_numbers = #tpu.dot_dimension_numbers<[1], [0], [0], [1], [0, 0, 1, 1], [], []>} : vector<8x32xbf16>, vector<32x32xbf16>, vector<8x32xf32> -> vector<8x32xf32>
    %c0_50 = arith.constant 0 : index
    %c0_51 = arith.constant 0 : index
    %120 = vector.load %arg12[%c0_50, %c0_51] : memref<1x32xf32, #tpu.memory_space<vmem>>, vector<1x32xf32>
    %121 = vector.broadcast %120 : vector<1x32xf32> to vector<8x32xf32>
    %122 = arith.addf %119, %121 : vector<8x32xf32>
    %123 = arith.addf %31, %122 : vector<8x32xf32>
    %124 = arith.truncf %123 : vector<8x32xf32> to vector<8x32xbf16>
    %c0_52 = arith.constant 0 : index
    %c0_53 = arith.constant 0 : index
    %125 = vector.load %arg13[%c0_52, %c0_53] : memref<32x32xbf16, #tpu.memory_space<vmem>>, vector<32x32xbf16>
    %cst_54 = arith.constant dense<0.000000e+00> : vector<8x32xf32>
    %126 = tpu.matmul %124, %125, %cst_54 {dimension_numbers = #tpu.dot_dimension_numbers<[1], [0], [0], [1], [0, 0, 1, 1], [], []>} : vector<8x32xbf16>, vector<32x32xbf16>, vector<8x32xf32> -> vector<8x32xf32>
    %c0_55 = arith.constant 0 : index
    %c0_56 = arith.constant 0 : index
    %127 = vector.load %arg14[%c0_55, %c0_56] : memref<1x32xf32, #tpu.memory_space<vmem>>, vector<1x32xf32>
    %128 = vector.broadcast %127 : vector<1x32xf32> to vector<8x32xf32>
    %129 = arith.addf %126, %128 : vector<8x32xf32>
    %130 = arith.negf %129 : vector<8x32xf32>
    %131 = math.exp %130 : vector<8x32xf32>
    %cst_57 = arith.constant 1.000000e+00 : f32
    %132 = vector.broadcast %cst_57 : f32 to vector<8x32xf32>
    %133 = arith.addf %132, %131 : vector<8x32xf32>
    %134 = arith.divf %132, %133 : vector<8x32xf32>
    %135 = arith.mulf %129, %134 : vector<8x32xf32>
    %136 = arith.truncf %135 : vector<8x32xf32> to vector<8x32xbf16>
    %c0_58 = arith.constant 0 : index
    %c0_59 = arith.constant 0 : index
    %137 = vector.load %arg15[%c0_58, %c0_59] : memref<32x32xbf16, #tpu.memory_space<vmem>>, vector<32x32xbf16>
    %cst_60 = arith.constant dense<0.000000e+00> : vector<8x32xf32>
    %138 = tpu.matmul %136, %137, %cst_60 {dimension_numbers = #tpu.dot_dimension_numbers<[1], [0], [0], [1], [0, 0, 1, 1], [], []>} : vector<8x32xbf16>, vector<32x32xbf16>, vector<8x32xf32> -> vector<8x32xf32>
    %c0_61 = arith.constant 0 : index
    %c0_62 = arith.constant 0 : index
    %139 = vector.load %arg16[%c0_61, %c0_62] : memref<1x32xf32, #tpu.memory_space<vmem>>, vector<1x32xf32>
    %140 = vector.broadcast %139 : vector<1x32xf32> to vector<8x32xf32>
    %141 = arith.addf %138, %140 : vector<8x32xf32>
    %142 = arith.negf %141 : vector<8x32xf32>
    %143 = math.exp %142 : vector<8x32xf32>
    %cst_63 = arith.constant 1.000000e+00 : f32
    %144 = vector.broadcast %cst_63 : f32 to vector<8x32xf32>
    %145 = arith.addf %144, %143 : vector<8x32xf32>
    %146 = arith.divf %144, %145 : vector<8x32xf32>
    %147 = arith.mulf %141, %146 : vector<8x32xf32>
    %148 = arith.truncf %147 : vector<8x32xf32> to vector<8x32xbf16>
    %c0_64 = arith.constant 0 : index
    %c0_65 = arith.constant 0 : index
    %149 = vector.load %arg17[%c0_64, %c0_65] : memref<32x32xbf16, #tpu.memory_space<vmem>>, vector<32x32xbf16>
    %cst_66 = arith.constant dense<0.000000e+00> : vector<8x32xf32>
    %150 = tpu.matmul %148, %149, %cst_66 {dimension_numbers = #tpu.dot_dimension_numbers<[1], [0], [0], [1], [0, 0, 1, 1], [], []>} : vector<8x32xbf16>, vector<32x32xbf16>, vector<8x32xf32> -> vector<8x32xf32>
    %c0_67 = arith.constant 0 : index
    %c0_68 = arith.constant 0 : index
    %151 = vector.load %arg18[%c0_67, %c0_68] : memref<1x32xf32, #tpu.memory_space<vmem>>, vector<1x32xf32>
    %152 = vector.broadcast %151 : vector<1x32xf32> to vector<8x32xf32>
    %153 = arith.addf %150, %152 : vector<8x32xf32>
    %c0_69 = arith.constant 0 : index
    %c0_70 = arith.constant 0 : index
    %c0_71 = arith.constant 0 : index
    %154 = vector.load %arg4[%c0_69, %c0_70, %c0_71] : memref<1x8x1xf32, #tpu.memory_space<vmem>>, vector<1x8x1xf32>
    %155 = vector.shape_cast %154 : vector<1x8x1xf32> to vector<8x1xf32>
    %156 = vector.broadcast %155 : vector<8x1xf32> to vector<8x32xf32>
    %157 = arith.mulf %153, %156 : vector<8x32xf32>
    %158 = arith.addf %123, %157 : vector<8x32xf32>
    %c0_72 = arith.constant 0 : index
    %c0_73 = arith.constant 0 : index
    %c0_74 = arith.constant 0 : index
    %159 = vector.load %arg19[%c0_72, %c0_73, %c0_74] : memref<1x8x32xf32, #tpu.memory_space<vmem>>, vector<1x8x32xf32>
    %160 = vector.shape_cast %159 : vector<1x8x32xf32> to vector<8x32xf32>
    %161 = vector.shape_cast %158 : vector<8x32xf32> to vector<1x8x32xf32>
    tpu.vector_store %arg19[%c0_72, %c0_73, %c0_74], %161 {strides = array<i32>} : memref<1x8x32xf32, #tpu.memory_space<vmem>>, vector<1x8x32xf32>,
    return
  }
  func.func @transform_0(%arg0: i32, %arg1: i32) -> (i32, i32, i32) {
    %c0_i32 = arith.constant 0 : i32
    %c0_i32_0 = arith.constant 0 : i32
    %c0_i32_1 = arith.constant 0 : i32
    return %arg0, %c0_i32, %c0_i32_0 : i32, i32, i32
  }
  func.func @transform_1(%arg0: i32, %arg1: i32) -> (i32, i32, i32) {
    %c0_i32 = arith.constant 0 : i32
    %c0_i32_0 = arith.constant 0 : i32
    %c0_i32_1 = arith.constant 0 : i32
    return %arg0, %c0_i32, %c0_i32_0 : i32, i32, i32
  }
  func.func @transform_2(%arg0: i32, %arg1: i32) -> (i32, i32, i32) {
    %c0_i32 = arith.constant 0 : i32
    %c0_i32_0 = arith.constant 0 : i32
    return %arg0, %arg1, %c0_i32 : i32, i32, i32
  }
  func.func @transform_3(%arg0: i32, %arg1: i32) -> (i32, i32) {
    %c0_i32 = arith.constant 0 : i32
    %c0_i32_0 = arith.constant 0 : i32
    %c0_i32_1 = arith.constant 0 : i32
    return %c0_i32, %c0_i32_0 : i32, i32
  }
  func.func @transform_4(%arg0: i32, %arg1: i32) -> (i32, i32) {
    %c0_i32 = arith.constant 0 : i32
    %c0_i32_0 = arith.constant 0 : i32
    %c0_i32_1 = arith.constant 0 : i32
    return %c0_i32, %c0_i32_0 : i32, i32
  }
  func.func @transform_5(%arg0: i32, %arg1: i32) -> (i32, i32) {
    %c0_i32 = arith.constant 0 : i32
    %c0_i32_0 = arith.constant 0 : i32
    %c0_i32_1 = arith.constant 0 : i32
    return %c0_i32, %c0_i32_0 : i32, i32
  }
  func.func @transform_6(%arg0: i32, %arg1: i32) -> (i32, i32) {
    %c0_i32 = arith.constant 0 : i32
    %c0_i32_0 = arith.constant 0 : i32
    %c0_i32_1 = arith.constant 0 : i32
    return %c0_i32, %c0_i32_0 : i32, i32
  }
  func.func @transform_7(%arg0: i32, %arg1: i32) -> (i32, i32) {
    %c0_i32 = arith.constant 0 : i32
    %c0_i32_0 = arith.constant 0 : i32
    %c0_i32_1 = arith.constant 0 : i32
    return %c0_i32, %c0_i32_0 : i32, i32
  }
  func.func @transform_8(%arg0: i32, %arg1: i32) -> (i32, i32) {
    %c0_i32 = arith.constant 0 : i32
    %c0_i32_0 = arith.constant 0 : i32
    %c0_i32_1 = arith.constant 0 : i32
    return %c0_i32, %c0_i32_0 : i32, i32
  }
  func.func @transform_9(%arg0: i32, %arg1: i32) -> (i32, i32) {
    %c0_i32 = arith.constant 0 : i32
    %c0_i32_0 = arith.constant 0 : i32
    %c0_i32_1 = arith.constant 0 : i32
    return %c0_i32, %c0_i32_0 : i32, i32
  }
  func.func @transform_10(%arg0: i32, %arg1: i32) -> (i32, i32) {
    %c0_i32 = arith.constant 0 : i32
    %c0_i32_0 = arith.constant 0 : i32
    %c0_i32_1 = arith.constant 0 : i32
    return %c0_i32, %c0_i32_0 : i32, i32
  }
  func.func @transform_11(%arg0: i32, %arg1: i32) -> (i32, i32) {
    %c0_i32 = arith.constant 0 : i32
    %c0_i32_0 = arith.constant 0 : i32
    %c0_i32_1 = arith.constant 0 : i32
    return %c0_i32, %c0_i32_0 : i32, i32
  }
  func.func @transform_12(%arg0: i32, %arg1: i32) -> (i32, i32) {
    %c0_i32 = arith.constant 0 : i32
    %c0_i32_0 = arith.constant 0 : i32
    %c0_i32_1 = arith.constant 0 : i32
    return %c0_i32, %c0_i32_0 : i32, i32
  }
  func.func @transform_13(%arg0: i32, %arg1: i32) -> (i32, i32) {
    %c0_i32 = arith.constant 0 : i32
    %c0_i32_0 = arith.constant 0 : i32
    %c0_i32_1 = arith.constant 0 : i32
    return %c0_i32, %c0_i32_0 : i32, i32
  }
  func.func @transform_14(%arg0: i32, %arg1: i32) -> (i32, i32) {
    %c0_i32 = arith.constant 0 : i32
    %c0_i32_0 = arith.constant 0 : i32
    %c0_i32_1 = arith.constant 0 : i32
    return %c0_i32, %c0_i32_0 : i32, i32
  }
  func.func @transform_15(%arg0: i32, %arg1: i32) -> (i32, i32) {
    %c0_i32 = arith.constant 0 : i32
    %c0_i32_0 = arith.constant 0 : i32
    %c0_i32_1 = arith.constant 0 : i32
    return %c0_i32, %c0_i32_0 : i32, i32
  }
  func.func @transform_16(%arg0: i32, %arg1: i32) -> (i32, i32) {
    %c0_i32 = arith.constant 0 : i32
    %c0_i32_0 = arith.constant 0 : i32
    %c0_i32_1 = arith.constant 0 : i32
    return %c0_i32, %c0_i32_0 : i32, i32
  }
  func.func @transform_17(%arg0: i32, %arg1: i32) -> (i32, i32, i32) {
    %c0_i32 = arith.constant 0 : i32
    %c0_i32_0 = arith.constant 0 : i32
    return %arg0, %arg1, %c0_i32 : i32, i32, i32
  }
}

</mosaic_0001>

<llo_original>
// kernel: tpu_custom_call.1
$region0: #{tpu_custom_call.1}
  #allocation0 [shape = 'u32[]', space=smem, size = 0x4, offset = 0x4, fixed_abs, tag = 'smem constant byte address 0x4 - core index']
  #allocation1 [shape = 'u32[144,128]{1,0:T(1,128)}', space=vmem, size = 0x12000, scoped, tag = 'internal scratch']
  #allocation2 [shape = 'bf16[8,32]{1,0:T(8,128)(2,1)}', space=vmem, size = 0x800, scoped, tag = 'scratch operand']
  #allocation3 [shape = 'bf16[8,32]{1,0:T(8,128)(2,1)}', space=vmem, size = 0x800, scoped, tag = 'scratch operand']
  %s0 = inlined_call_operand.vmem [shape: f32[2,8,32], index: 0, kind: input, shape index: {}]
  %s1 = inlined_call_operand.hbm [shape: f32[2,1,8], index: 1, kind: input, shape index: {}]
  %s2 = inlined_call_operand.vmem [shape: f32[2,8,1], index: 2, kind: input, shape index: {}]
  %s3 = inlined_call_operand.hbm [shape: f32[1,32], index: 3, kind: input, shape index: {}]
  %s4 = inlined_call_operand.hbm [shape: f32[1,32], index: 4, kind: input, shape index: {}]
  %s5 = inlined_call_operand.vmem [shape: bf16[32,32], index: 5, kind: input, shape index: {}]
  %s6 = inlined_call_operand.hbm [shape: f32[1,32], index: 6, kind: input, shape index: {}]
  %s7 = inlined_call_operand.hbm [shape: bf16[32,64], index: 7, kind: input, shape index: {}]
  %s8 = inlined_call_operand.hbm [shape: f32[1,64], index: 8, kind: input, shape index: {}]
  %s9 = inlined_call_operand.vmem [shape: bf16[32,32], index: 9, kind: input, shape index: {}]
  %s10 = inlined_call_operand.vmem [shape: f32[1,32], index: 10, kind: input, shape index: {}]
  %s11 = inlined_call_operand.hbm [shape: bf16[32,32], index: 11, kind: input, shape index: {}]
  %s12 = inlined_call_operand.vmem [shape: f32[1,32], index: 12, kind: input, shape index: {}]
  %s13 = inlined_call_operand.vmem [shape: bf16[32,32], index: 13, kind: input, shape index: {}]
  %s14 = inlined_call_operand.vmem [shape: f32[1,32], index: 14, kind: input, shape index: {}]
  %s15 = inlined_call_operand.hbm [shape: bf16[32,32], index: 15, kind: input, shape index: {}]
  %s16 = inlined_call_operand.vmem [shape: f32[1,32], index: 16, kind: input, shape index: {}]
  %s17 = inlined_call_operand.hbm [shape: f32[2,8,32], index: 17, kind: output, shape index: {}]
  %s18 = sld [smem:[#allocation0]]
  $region137: #{tpu_custom_call.1} parent=0
    _
  %s20 = ssub.s32 1, %s18
  %s21 = scalar_select 0, %s20, %s18
  $region1: #{tpu_custom_call.1} parent=0
    #allocation4 [shape = 'u8[1024]{0}', space=vmem, size = 0x400, scoped, tag = 'input window, operand 1']
    #allocation5 [shape = 's32[2]{0}', space=sflag, size = 0x8, scoped, tag = 'scoped memory for tpu_custom_call.1']
    #allocation6 [shape = 's32[2]{0}', space=sflag, size = 0x8, scoped, tag = 'scoped memory for tpu_custom_call.1']
    #allocation7 [shape = 'u8[512]{0}', space=vmem, size = 0x400, scoped, tag = 'input window, operand 3, single buffered']
    #allocation8 [shape = 's32[1]{0}', space=sflag, size = 0x4, scoped, tag = 'scoped memory for tpu_custom_call.1']
    #allocation9 [shape = 'u8[512]{0}', space=vmem, size = 0x400, scoped, tag = 'input window, operand 4, single buffered']
    #allocation10 [shape = 'u8[512]{0}', space=vmem, size = 0x400, scoped, tag = 'input window, operand 6, single buffered']
    #allocation11 [shape = 's32[1]{0}', space=sflag, size = 0x4, scoped, tag = 'scoped memory for tpu_custom_call.1']
    #allocation12 [shape = 'u8[8192]{0}', space=vmem, size = 0x2000, scoped, tag = 'input window, operand 7, single buffered']
    #allocation13 [shape = 'u8[512]{0}', space=vmem, size = 0x400, scoped, tag = 'input window, operand 8, single buffered']
    #allocation14 [shape = 's32[1]{0}', space=sflag, size = 0x4, scoped, tag = 'scoped memory for tpu_custom_call.1']
    #allocation15 [shape = 'u8[8192]{0}', space=vmem, size = 0x2000, scoped, tag = 'input window, operand 11, single buffered']
    #allocation16 [shape = 'u8[8192]{0}', space=vmem, size = 0x2000, scoped, tag = 'input window, operand 15, single buffered']
    #allocation17 [shape = 's32[1]{0}', space=sflag, size = 0x4, scoped, tag = 'scoped memory for tpu_custom_call.1']
    #allocation18 [shape = 'u8[8192]{0}', space=vmem, size = 0x2000, scoped, tag = 'output window, operand 0']
    %22 = vsyncpa [#allocation5], 0
    %s23 = scalar_lea.sflag [#allocation5], 1
    %24 = vsyncpa %s23, 0
    %25 = vsyncpa [#allocation8], 0
    %26 = vsyncpa [#allocation11], 0
    %27 = vsyncpa [#allocation14], 0
    %28 = vsyncpa [#allocation17], 0
    %29 = vsyncpa [#allocation6], 0
    %s30 = scalar_lea.sflag [#allocation6], 1
    %31 = vsyncpa %s30, 0
    loop: start=0, step=1, limit=4
    $region2: #{tpu_custom_call.1} parent=1 // loop_pre_header
      _
    $region3: #{tpu_custom_call.1} parent=1 // loop_header
      %s33 = sphi 0, %s37
      %p34 = scmp.ge.s32.totalorder %s33, 4
      %s40 = sphi 0, %s52
      %s41 = sphi 0, %s48
      %s42 = sphi 0, %s40
      %s43 = sphi 0, %s41
      %s44 = sphi 0, %s42
      %s45 = sphi 0, %s43
      %s55 = sphi 0, %s57
      %s58 = sphi 0, %s55
      %s59 = sphi 0, %s58
      %s75 = sphi 0, %s59
      %s81 = sphi 0, %s83
      %s84 = sphi 0, %s81
      %s85 = sphi 0, %s84
      %s101 = sphi 0, %s85
      %s109 = sphi 0, %s111
      %s112 = sphi 0, %s109
      %s113 = sphi 0, %s112
      %s129 = sphi 0, %s113
      %s133 = sphi 0, %s133
      %s135 = sphi 0, %s133
      %s136 = sphi 0, %s135
      %s150 = sphi 0, %s136
      %s154 = sphi 0, %s154
      %s156 = sphi 0, %s154
      %s157 = sphi 0, %s156
      %s171 = sphi 0, %s157
      %s175 = sphi 0, %s175
      %s177 = sphi 0, %s175
      %s178 = sphi 0, %s177
      %s192 = sphi 0, %s178
      %s196 = sphi 0, %s196
      %s198 = sphi 0, %s196
      %s199 = sphi 0, %s198
      %s213 = sphi 0, %s199
      %s217 = sphi 0, %s217
      %s219 = sphi 0, %s217
      %s220 = sphi 0, %s219
      %s234 = sphi 0, %s220
      %s238 = sphi 0, %s238
      %s240 = sphi 0, %s238
      %s241 = sphi 0, %s240
      %s255 = sphi 0, %s241
      %s259 = sphi 0, %s259
      %s261 = sphi 0, %s259
      %s262 = sphi 0, %s261
      %s276 = sphi 0, %s262
      %s280 = sphi 0, %s280
      %s282 = sphi 0, %s280
      %s283 = sphi 0, %s282
      %s297 = sphi 0, %s283
      %s301 = sphi 0, %s301
      %s303 = sphi 0, %s301
      %s304 = sphi 0, %s303
      %s318 = sphi 0, %s304
      %s322 = sphi 0, %s322
      %s324 = sphi 0, %s322
      %s325 = sphi 0, %s324
      %s339 = sphi 0, %s325
      %s343 = sphi 0, %s343
      %s345 = sphi 0, %s343
      %s346 = sphi 0, %s345
      %s360 = sphi 0, %s346
      %s364 = sphi 0, %s364
      %s366 = sphi 0, %s364
      %s367 = sphi 0, %s366
      %s381 = sphi 0, %s367
      %s385 = sphi 0, %s385
      %s387 = sphi 0, %s385
      %s388 = sphi 0, %s387
      %s402 = sphi 0, %s388
      %s406 = sphi 0, %s406
      %s408 = sphi 0, %s406
      %s409 = sphi 0, %s408
      %s423 = sphi 0, %s409
      %s431 = sphi 0, %s433
      %s434 = sphi 0, %s431
      %s435 = sphi 0, %s434
      %s451 = sphi 0, %s435
    $region4: #{tpu_custom_call.1} parent=1 // loop_header_branch
      %36 = sbr.rel (%p34) target = $region8
    $region5: #{tpu_custom_call.1} parent=1 // loop_body
      %s38 = ssub.s32 %s33, 1
      %s39 = ssub.s32 %s33, 2
      %s46 = sadd.s32 1, %s41
      %p47 = scmp.ge.s32.totalorder %s46, 1
      %s48 = scalar_select %p47, 0, %s46
      %s49 = sadd.s32 1, %s40
      %s50 = scalar_select %p47, %s49, %s40
      %p51 = scmp.ge.s32.totalorder %s50, 2
      %s52 = scalar_select %p51, 0, %s50
      %s53 = ssub.s32 %s40, %s52
      %p54 = scmp.eq.s32.totalorder %s53, 0
      %s56 = sadd.s32 %s55, 1
      %s57 = scalar_select %p54, %s55, %s56
      %p60 = pneg %p54
      %p61 = scmp.eq.s32.totalorder %s33, 1
      %p62 = por %p60, %p61
      %p63 = scmp.ne.s32.totalorder %s55, %s58
      %p64 = scmp.eq.s32.totalorder %s33, 0
      %p65 = por %p63, %p64
      %p66 = scmp.ne.s32.totalorder %s55, %s58
      %p67 = scmp.eq.s32.totalorder %s38, 1
      %p68 = por %p66, %p67
      %p69 = scmp.ne.s32.totalorder %s58, %s59
      %p70 = scmp.eq.s32.totalorder %s38, 0
      %p71 = por %p69, %p70
      %p72 = scmp.ne.s32.totalorder %s58, %s59
      %p73 = scmp.eq.s32.totalorder %s39, 1
      %p74 = por %p72, %p73
      %p76 = scmp.ne.s32.totalorder %s59, %s75
      %p77 = scmp.eq.s32.totalorder %s39, 0
      %p78 = por %p76, %p77
      %s79 = ssub.s32 %s40, %s52
      %p80 = scmp.eq.s32.totalorder %s79, 0
      %s82 = sadd.s32 %s81, 1
      %s83 = scalar_select %p80, %s81, %s82
      %p86 = pneg %p80
      %p87 = scmp.eq.s32.totalorder %s33, 1
      %p88 = por %p86, %p87
      %p89 = scmp.ne.s32.totalorder %s81, %s84
      %p90 = scmp.eq.s32.totalorder %s33, 0
      %p91 = por %p89, %p90
      %p92 = scmp.ne.s32.totalorder %s81, %s84
      %p93 = scmp.eq.s32.totalorder %s38, 1
      %p94 = por %p92, %p93
      %p95 = scmp.ne.s32.totalorder %s84, %s85
      %p96 = scmp.eq.s32.totalorder %s38, 0
      %p97 = por %p95, %p96
      %p98 = scmp.ne.s32.totalorder %s84, %s85
      %p99 = scmp.eq.s32.totalorder %s39, 1
      %p100 = por %p98, %p99
      %p102 = scmp.ne.s32.totalorder %s85, %s101
      %p103 = scmp.eq.s32.totalorder %s39, 0
      %p104 = por %p102, %p103
      %s105 = ssub.s32 %s40, %s52
      %s106 = ssub.s32 %s41, %s48
      %s107 = sor.u32 %s105, %s106
      %p108 = scmp.eq.s32.totalorder %s107, 0
      %s110 = sadd.s32 %s109, 1
      %s111 = scalar_select %p108, %s109, %s110
      %p114 = pneg %p108
      %p115 = scmp.eq.s32.totalorder %s33, 1
      %p116 = por %p114, %p115
      %p117 = scmp.ne.s32.totalorder %s109, %s112
      %p118 = scmp.eq.s32.totalorder %s33, 0
      %p119 = por %p117, %p118
      %p120 = scmp.ne.s32.totalorder %s109, %s112
      %p121 = scmp.eq.s32.totalorder %s38, 1
      %p122 = por %p120, %p121
      %p123 = scmp.ne.s32.totalorder %s112, %s113
      %p124 = scmp.eq.s32.totalorder %s38, 0
      %p125 = por %p123, %p124
      %p126 = scmp.ne.s32.totalorder %s112, %s113
      %p127 = scmp.eq.s32.totalorder %s39, 1
      %p128 = por %p126, %p127
      %p130 = scmp.ne.s32.totalorder %s113, %s129
      %p131 = scmp.eq.s32.totalorder %s39, 0
      %p132 = por %p130, %p131
      %s134 = sadd.s32 %s133, 1
      %p137 = scmp.eq.s32.totalorder %s33, 1
      %p138 = scmp.ne.s32.totalorder %s133, %s135
      %p139 = scmp.eq.s32.totalorder %s33, 0
      %p140 = por %p138, %p139
      %p141 = scmp.ne.s32.totalorder %s133, %s135
      %p142 = scmp.eq.s32.totalorder %s38, 1
      %p143 = por %p141, %p142
      %p144 = scmp.ne.s32.totalorder %s135, %s136
      %p145 = scmp.eq.s32.totalorder %s38, 0
      %p146 = por %p144, %p145
      %p147 = scmp.ne.s32.totalorder %s135, %s136
      %p148 = scmp.eq.s32.totalorder %s39, 1
      %p149 = por %p147, %p148
      %p151 = scmp.ne.s32.totalorder %s136, %s150
      %p152 = scmp.eq.s32.totalorder %s39, 0
      %p153 = por %p151, %p152
      %s155 = sadd.s32 %s154, 1
      %p158 = scmp.eq.s32.totalorder %s33, 1
      %p159 = scmp.ne.s32.totalorder %s154, %s156
      %p160 = scmp.eq.s32.totalorder %s33, 0
      %p161 = por %p159, %p160
      %p162 = scmp.ne.s32.totalorder %s154, %s156
      %p163 = scmp.eq.s32.totalorder %s38, 1
      %p164 = por %p162, %p163
      %p165 = scmp.ne.s32.totalorder %s156, %s157
      %p166 = scmp.eq.s32.totalorder %s38, 0
      %p167 = por %p165, %p166
      %p168 = scmp.ne.s32.totalorder %s156, %s157
      %p169 = scmp.eq.s32.totalorder %s39, 1
      %p170 = por %p168, %p169
      %p172 = scmp.ne.s32.totalorder %s157, %s171
      %p173 = scmp.eq.s32.totalorder %s39, 0
      %p174 = por %p172, %p173
      %s176 = sadd.s32 %s175, 1
      %p179 = scmp.eq.s32.totalorder %s33, 1
      %p180 = scmp.ne.s32.totalorder %s175, %s177
      %p181 = scmp.eq.s32.totalorder %s33, 0
      %p182 = por %p180, %p181
      %p183 = scmp.ne.s32.totalorder %s175, %s177
      %p184 = scmp.eq.s32.totalorder %s38, 1
      %p185 = por %p183, %p184
      %p186 = scmp.ne.s32.totalorder %s177, %s178
      %p187 = scmp.eq.s32.totalorder %s38, 0
      %p188 = por %p186, %p187
      %p189 = scmp.ne.s32.totalorder %s177, %s178
      %p190 = scmp.eq.s32.totalorder %s39, 1
      %p191 = por %p189, %p190
      %p193 = scmp.ne.s32.totalorder %s178, %s192
      %p194 = scmp.eq.s32.totalorder %s39, 0
      %p195 = por %p193, %p194
      %s197 = sadd.s32 %s196, 1
      %p200 = scmp.eq.s32.totalorder %s33, 1
      %p201 = scmp.ne.s32.totalorder %s196, %s198
      %p202 = scmp.eq.s32.totalorder %s33, 0
      %p203 = por %p201, %p202
      %p204 = scmp.ne.s32.totalorder %s196, %s198
      %p205 = scmp.eq.s32.totalorder %s38, 1
      %p206 = por %p204, %p205
      %p207 = scmp.ne.s32.totalorder %s198, %s199
      %p208 = scmp.eq.s32.totalorder %s38, 0
      %p209 = por %p207, %p208
      %p210 = scmp.ne.s32.totalorder %s198, %s199
      %p211 = scmp.eq.s32.totalorder %s39, 1
      %p212 = por %p210, %p211
      %p214 = scmp.ne.s32.totalorder %s199, %s213
      %p215 = scmp.eq.s32.totalorder %s39, 0
      %p216 = por %p214, %p215
      %s218 = sadd.s32 %s217, 1
      %p221 = scmp.eq.s32.totalorder %s33, 1
      %p222 = scmp.ne.s32.totalorder %s217, %s219
      %p223 = scmp.eq.s32.totalorder %s33, 0
      %p224 = por %p222, %p223
      %p225 = scmp.ne.s32.totalorder %s217, %s219
      %p226 = scmp.eq.s32.totalorder %s38, 1
      %p227 = por %p225, %p226
      %p228 = scmp.ne.s32.totalorder %s219, %s220
      %p229 = scmp.eq.s32.totalorder %s38, 0
      %p230 = por %p228, %p229
      %p231 = scmp.ne.s32.totalorder %s219, %s220
      %p232 = scmp.eq.s32.totalorder %s39, 1
      %p233 = por %p231, %p232
      %p235 = scmp.ne.s32.totalorder %s220, %s234
      %p236 = scmp.eq.s32.totalorder %s39, 0
      %p237 = por %p235, %p236
      %s239 = sadd.s32 %s238, 1
      %p242 = scmp.eq.s32.totalorder %s33, 1
      %p243 = scmp.ne.s32.totalorder %s238, %s240
      %p244 = scmp.eq.s32.totalorder %s33, 0
      %p245 = por %p243, %p244
      %p246 = scmp.ne.s32.totalorder %s238, %s240
      %p247 = scmp.eq.s32.totalorder %s38, 1
      %p248 = por %p246, %p247
      %p249 = scmp.ne.s32.totalorder %s240, %s241
      %p250 = scmp.eq.s32.totalorder %s38, 0
      %p251 = por %p249, %p250
      %p252 = scmp.ne.s32.totalorder %s240, %s241
      %p253 = scmp.eq.s32.totalorder %s39, 1
      %p254 = por %p252, %p253
      %p256 = scmp.ne.s32.totalorder %s241, %s255
      %p257 = scmp.eq.s32.totalorder %s39, 0
      %p258 = por %p256, %p257
      %s260 = sadd.s32 %s259, 1
      %p263 = scmp.eq.s32.totalorder %s33, 1
      %p264 = scmp.ne.s32.totalorder %s259, %s261
      %p265 = scmp.eq.s32.totalorder %s33, 0
      %p266 = por %p264, %p265
      %p267 = scmp.ne.s32.totalorder %s259, %s261
      %p268 = scmp.eq.s32.totalorder %s38, 1
      %p269 = por %p267, %p268
      %p270 = scmp.ne.s32.totalorder %s261, %s262
      %p271 = scmp.eq.s32.totalorder %s38, 0
      %p272 = por %p270, %p271
      %p273 = scmp.ne.s32.totalorder %s261, %s262
      %p274 = scmp.eq.s32.totalorder %s39, 1
      %p275 = por %p273, %p274
      %p277 = scmp.ne.s32.totalorder %s262, %s276
      %p278 = scmp.eq.s32.totalorder %s39, 0
      %p279 = por %p277, %p278
      %s281 = sadd.s32 %s280, 1
      %p284 = scmp.eq.s32.totalorder %s33, 1
      %p285 = scmp.ne.s32.totalorder %s280, %s282
      %p286 = scmp.eq.s32.totalorder %s33, 0
      %p287 = por %p285, %p286
      %p288 = scmp.ne.s32.totalorder %s280, %s282
      %p289 = scmp.eq.s32.totalorder %s38, 1
      %p290 = por %p288, %p289
      %p291 = scmp.ne.s32.totalorder %s282, %s283
      %p292 = scmp.eq.s32.totalorder %s38, 0
      %p293 = por %p291, %p292
      %p294 = scmp.ne.s32.totalorder %s282, %s283
      %p295 = scmp.eq.s32.totalorder %s39, 1
      %p296 = por %p294, %p295
      %p298 = scmp.ne.s32.totalorder %s283, %s297
      %p299 = scmp.eq.s32.totalorder %s39, 0
      %p300 = por %p298, %p299
      %s302 = sadd.s32 %s301, 1
      %p305 = scmp.eq.s32.totalorder %s33, 1
      %p306 = scmp.ne.s32.totalorder %s301, %s303
      %p307 = scmp.eq.s32.totalorder %s33, 0
      %p308 = por %p306, %p307
      %p309 = scmp.ne.s32.totalorder %s301, %s303
      %p310 = scmp.eq.s32.totalorder %s38, 1
      %p311 = por %p309, %p310
      %p312 = scmp.ne.s32.totalorder %s303, %s304
      %p313 = scmp.eq.s32.totalorder %s38, 0
      %p314 = por %p312, %p313
      %p315 = scmp.ne.s32.totalorder %s303, %s304
      %p316 = scmp.eq.s32.totalorder %s39, 1
      %p317 = por %p315, %p316
      %p319 = scmp.ne.s32.totalorder %s304, %s318
      %p320 = scmp.eq.s32.totalorder %s39, 0
      %p321 = por %p319, %p320
      %s323 = sadd.s32 %s322, 1
      %p326 = scmp.eq.s32.totalorder %s33, 1
      %p327 = scmp.ne.s32.totalorder %s322, %s324
      %p328 = scmp.eq.s32.totalorder %s33, 0
      %p329 = por %p327, %p328
      %p330 = scmp.ne.s32.totalorder %s322, %s324
      %p331 = scmp.eq.s32.totalorder %s38, 1
      %p332 = por %p330, %p331
      %p333 = scmp.ne.s32.totalorder %s324, %s325
      %p334 = scmp.eq.s32.totalorder %s38, 0
      %p335 = por %p333, %p334
      %p336 = scmp.ne.s32.totalorder %s324, %s325
      %p337 = scmp.eq.s32.totalorder %s39, 1
      %p338 = por %p336, %p337
      %p340 = scmp.ne.s32.totalorder %s325, %s339
      %p341 = scmp.eq.s32.totalorder %s39, 0
      %p342 = por %p340, %p341
      %s344 = sadd.s32 %s343, 1
      %p347 = scmp.eq.s32.totalorder %s33, 1
      %p348 = scmp.ne.s32.totalorder %s343, %s345
      %p349 = scmp.eq.s32.totalorder %s33, 0
      %p350 = por %p348, %p349
      %p351 = scmp.ne.s32.totalorder %s343, %s345
      %p352 = scmp.eq.s32.totalorder %s38, 1
      %p353 = por %p351, %p352
      %p354 = scmp.ne.s32.totalorder %s345, %s346
      %p355 = scmp.eq.s32.totalorder %s38, 0
      %p356 = por %p354, %p355
      %p357 = scmp.ne.s32.totalorder %s345, %s346
      %p358 = scmp.eq.s32.totalorder %s39, 1
      %p359 = por %p357, %p358
      %p361 = scmp.ne.s32.totalorder %s346, %s360
      %p362 = scmp.eq.s32.totalorder %s39, 0
      %p363 = por %p361, %p362
      %s365 = sadd.s32 %s364, 1
      %p368 = scmp.eq.s32.totalorder %s33, 1
      %p369 = scmp.ne.s32.totalorder %s364, %s366
      %p370 = scmp.eq.s32.totalorder %s33, 0
      %p371 = por %p369, %p370
      %p372 = scmp.ne.s32.totalorder %s364, %s366
      %p373 = scmp.eq.s32.totalorder %s38, 1
      %p374 = por %p372, %p373
      %p375 = scmp.ne.s32.totalorder %s366, %s367
      %p376 = scmp.eq.s32.totalorder %s38, 0
      %p377 = por %p375, %p376
      %p378 = scmp.ne.s32.totalorder %s366, %s367
      %p379 = scmp.eq.s32.totalorder %s39, 1
      %p380 = por %p378, %p379
      %p382 = scmp.ne.s32.totalorder %s367, %s381
      %p383 = scmp.eq.s32.totalorder %s39, 0
      %p384 = por %p382, %p383
      %s386 = sadd.s32 %s385, 1
      %p389 = scmp.eq.s32.totalorder %s33, 1
      %p390 = scmp.ne.s32.totalorder %s385, %s387
      %p391 = scmp.eq.s32.totalorder %s33, 0
      %p392 = por %p390, %p391
      %p393 = scmp.ne.s32.totalorder %s385, %s387
      %p394 = scmp.eq.s32.totalorder %s38, 1
      %p395 = por %p393, %p394
      %p396 = scmp.ne.s32.totalorder %s387, %s388
      %p397 = scmp.eq.s32.totalorder %s38, 0
      %p398 = por %p396, %p397
      %p399 = scmp.ne.s32.totalorder %s387, %s388
      %p400 = scmp.eq.s32.totalorder %s39, 1
      %p401 = por %p399, %p400
      %p403 = scmp.ne.s32.totalorder %s388, %s402
      %p404 = scmp.eq.s32.totalorder %s39, 0
      %p405 = por %p403, %p404
      %s407 = sadd.s32 %s406, 1
      %p410 = scmp.eq.s32.totalorder %s33, 1
      %p411 = scmp.ne.s32.totalorder %s406, %s408
      %p412 = scmp.eq.s32.totalorder %s33, 0
      %p413 = por %p411, %p412
      %p414 = scmp.ne.s32.totalorder %s406, %s408
      %p415 = scmp.eq.s32.totalorder %s38, 1
      %p416 = por %p414, %p415
      %p417 = scmp.ne.s32.totalorder %s408, %s409
      %p418 = scmp.eq.s32.totalorder %s38, 0
      %p419 = por %p417, %p418
      %p420 = scmp.ne.s32.totalorder %s408, %s409
      %p421 = scmp.eq.s32.totalorder %s39, 1
      %p422 = por %p420, %p421
      %p424 = scmp.ne.s32.totalorder %s409, %s423
      %p425 = scmp.eq.s32.totalorder %s39, 0
      %p426 = por %p424, %p425
      %s427 = ssub.s32 %s40, %s52
      %s428 = ssub.s32 %s41, %s48
      %s429 = sor.u32 %s427, %s428
      %p430 = scmp.eq.s32.totalorder %s429, 0
      %s432 = sadd.s32 %s431, 1
      %s433 = scalar_select %p430, %s431, %s432
      %p436 = pneg %p430
      %p437 = scmp.eq.s32.totalorder %s33, 1
      %p438 = por %p436, %p437
      %p439 = scmp.ne.s32.totalorder %s431, %s434
      %p440 = scmp.eq.s32.totalorder %s33, 0
      %p441 = por %p439, %p440
      %p442 = scmp.ne.s32.totalorder %s431, %s434
      %p443 = scmp.eq.s32.totalorder %s38, 1
      %p444 = por %p442, %p443
      %p445 = scmp.ne.s32.totalorder %s434, %s435
      %p446 = scmp.eq.s32.totalorder %s38, 0
      %p447 = por %p445, %p446
      %p448 = scmp.ne.s32.totalorder %s434, %s435
      %p449 = scmp.eq.s32.totalorder %s39, 1
      %p450 = por %p448, %p449
      %p452 = scmp.ne.s32.totalorder %s435, %s451
      %p453 = scmp.eq.s32.totalorder %s39, 0
      %p454 = por %p452, %p453
      %p455 = scmp.le.s32.totalorder 1, %s33
      %p456 = scmp.lt.s32.totalorder %s33, 3
      %p457 = pnand %p455, %p456
      %p458 = pneg %p457
      // Predicated region
      $region9: #{tpu_custom_call.1} parent=5 // pred_check
        _
      $region10: #{tpu_custom_call.1} parent=5 // pred_check_branch
        %460 = sbr.rel (%p457) target = $region12
      $region11: #{tpu_custom_call.1} parent=5 // pred_region
        %s461 = ssub.s32 %s33, 1
        // Predicated region
        $region13: #{tpu_custom_call.1} parent=11 // pred_check
          %p462 = pneg %p146
        $region14: #{tpu_custom_call.1} parent=11 // pred_check_branch
          %464 = sbr.rel (%p462) target = $region16
        $region15: #{tpu_custom_call.1} parent=11 // pred_region
          %s466 = ssub.s32 16, 16
          %467 = vsyncadd [#allocation8], %s466
          %s469 = sshll.u32 [#allocation7], 4
          %s470 = int_to_ptr.vmem [resolvable:$true] %s469
          %472 = dma.hbm_to_vmem [thread:$0]  %s3, 16, %s470, [#allocation8]
        $region16: #{tpu_custom_call.1} parent=11 // pred_fallthru
          _
        // Predicated region
        $region17: #{tpu_custom_call.1} parent=11 // pred_check
          %p473 = pneg %p167
        $region18: #{tpu_custom_call.1} parent=11 // pred_check_branch
          %475 = sbr.rel (%p473) target = $region20
        $region19: #{tpu_custom_call.1} parent=11 // pred_region
          %s477 = ssub.s32 16, 16
          %478 = vsyncadd [#allocation8], %s477
          %s480 = sshll.u32 [#allocation9], 4
          %s481 = int_to_ptr.vmem [resolvable:$true] %s480
          %483 = dma.hbm_to_vmem [thread:$0]  %s4, 16, %s481, [#allocation8]
        $region20: #{tpu_custom_call.1} parent=11 // pred_fallthru
          _
        // Predicated region
        $region21: #{tpu_custom_call.1} parent=11 // pred_check
          %p484 = pneg %p188
        $region22: #{tpu_custom_call.1} parent=11 // pred_check_branch
          %486 = sbr.rel (%p484) target = $region24
        $region23: #{tpu_custom_call.1} parent=11 // pred_region
          _
        $region24: #{tpu_custom_call.1} parent=11 // pred_fallthru
          _
        // Predicated region
        $region25: #{tpu_custom_call.1} parent=11 // pred_check
          %p487 = pneg %p209
        $region26: #{tpu_custom_call.1} parent=11 // pred_check_branch
          %489 = sbr.rel (%p487) target = $region28
        $region27: #{tpu_custom_call.1} parent=11 // pred_region
          %s491 = ssub.s32 16, 16
          %492 = vsyncadd [#allocation11], %s491
          %s494 = sshll.u32 [#allocation10], 4
          %s495 = int_to_ptr.vmem [resolvable:$true] %s494
          %497 = dma.hbm_to_vmem [thread:$0]  %s6, 16, %s495, [#allocation11]
        $region28: #{tpu_custom_call.1} parent=11 // pred_fallthru
          _
        // Predicated region
        $region29: #{tpu_custom_call.1} parent=11 // pred_check
          %p498 = pneg %p230
        $region30: #{tpu_custom_call.1} parent=11 // pred_check_branch
          %500 = sbr.rel (%p498) target = $region32
        $region31: #{tpu_custom_call.1} parent=11 // pred_region
          %s502 = ssub.s32 256, 256
          %503 = vsyncadd [#allocation11], %s502
          %s504 = sshll.u32 [#allocation12], 4
          %s505 = int_to_ptr.vmem [resolvable:$true] %s504
          %510 = dma.hbm_to_vmem [thread:$0]  %s7, 256, %s505, [#allocation11], 64, 64, 4
        $region32: #{tpu_custom_call.1} parent=11 // pred_fallthru
          _
        // Predicated region
        $region33: #{tpu_custom_call.1} parent=11 // pred_check
          %p511 = pneg %p251
        $region34: #{tpu_custom_call.1} parent=11 // pred_check_branch
          %513 = sbr.rel (%p511) target = $region36
        $region35: #{tpu_custom_call.1} parent=11 // pred_region
          %s515 = ssub.s32 16, 16
          %516 = vsyncadd [#allocation14], %s515
          %s518 = sshll.u32 [#allocation13], 4
          %s519 = int_to_ptr.vmem [resolvable:$true] %s518
          %521 = dma.hbm_to_vmem [thread:$0]  %s8, 16, %s519, [#allocation14]
        $region36: #{tpu_custom_call.1} parent=11 // pred_fallthru
          _
        // Predicated region
        $region37: #{tpu_custom_call.1} parent=11 // pred_check
          %p522 = pneg %p272
        $region38: #{tpu_custom_call.1} parent=11 // pred_check_branch
          %524 = sbr.rel (%p522) target = $region40
        $region39: #{tpu_custom_call.1} parent=11 // pred_region
          _
        $region40: #{tpu_custom_call.1} parent=11 // pred_fallthru
          _
        // Predicated region
        $region41: #{tpu_custom_call.1} parent=11 // pred_check
          %p525 = pneg %p293
        $region42: #{tpu_custom_call.1} parent=11 // pred_check_branch
          %527 = sbr.rel (%p525) target = $region44
        $region43: #{tpu_custom_call.1} parent=11 // pred_region
          _
        $region44: #{tpu_custom_call.1} parent=11 // pred_fallthru
          _
        // Predicated region
        $region45: #{tpu_custom_call.1} parent=11 // pred_check
          %p528 = pneg %p314
        $region46: #{tpu_custom_call.1} parent=11 // pred_check_branch
          %530 = sbr.rel (%p528) target = $region48
        $region47: #{tpu_custom_call.1} parent=11 // pred_region
          %s532 = ssub.s32 256, 256
          %533 = vsyncadd [#allocation14], %s532
          %s534 = sshll.u32 [#allocation15], 4
          %s535 = int_to_ptr.vmem [resolvable:$true] %s534
          %540 = dma.hbm_to_vmem [thread:$0]  %s11, 256, %s535, [#allocation14], 64, 64, 4
        $region48: #{tpu_custom_call.1} parent=11 // pred_fallthru
          _
        // Predicated region
        $region49: #{tpu_custom_call.1} parent=11 // pred_check
          %p541 = pneg %p335
        $region50: #{tpu_custom_call.1} parent=11 // pred_check_branch
          %543 = sbr.rel (%p541) target = $region52
        $region51: #{tpu_custom_call.1} parent=11 // pred_region
          _
        $region52: #{tpu_custom_call.1} parent=11 // pred_fallthru
          _
        // Predicated region
        $region53: #{tpu_custom_call.1} parent=11 // pred_check
          %p544 = pneg %p356
        $region54: #{tpu_custom_call.1} parent=11 // pred_check_branch
          %546 = sbr.rel (%p544) target = $region56
        $region55: #{tpu_custom_call.1} parent=11 // pred_region
          _
        $region56: #{tpu_custom_call.1} parent=11 // pred_fallthru
          _
        // Predicated region
        $region57: #{tpu_custom_call.1} parent=11 // pred_check
          %p547 = pneg %p377
        $region58: #{tpu_custom_call.1} parent=11 // pred_check_branch
          %549 = sbr.rel (%p547) target = $region60
        $region59: #{tpu_custom_call.1} parent=11 // pred_region
          _
        $region60: #{tpu_custom_call.1} parent=11 // pred_fallthru
          _
        // Predicated region
        $region61: #{tpu_custom_call.1} parent=11 // pred_check
          %p550 = pneg %p398
        $region62: #{tpu_custom_call.1} parent=11 // pred_check_branch
          %552 = sbr.rel (%p550) target = $region64
        $region63: #{tpu_custom_call.1} parent=11 // pred_region
          %s554 = ssub.s32 256, 256
          %555 = vsyncadd [#allocation17], %s554
          %s556 = sshll.u32 [#allocation16], 4
          %s557 = int_to_ptr.vmem [resolvable:$true] %s556
          %562 = dma.hbm_to_vmem [thread:$0]  %s15, 256, %s557, [#allocation17], 64, 64, 4
        $region64: #{tpu_custom_call.1} parent=11 // pred_fallthru
          _
        // Predicated region
        $region65: #{tpu_custom_call.1} parent=11 // pred_check
          %p563 = pneg %p419
        $region66: #{tpu_custom_call.1} parent=11 // pred_check_branch
          %565 = sbr.rel (%p563) target = $region68
        $region67: #{tpu_custom_call.1} parent=11 // pred_region
          _
        $region68: #{tpu_custom_call.1} parent=11 // pred_fallthru
          _
      $region12: #{tpu_custom_call.1} parent=5 // pred_fallthru
        _
      %p566 = scmp.lt.s32.totalorder %s33, 2
      // Predicated region
      $region69: #{tpu_custom_call.1} parent=5 // pred_check
        %p567 = pneg %p566
      $region70: #{tpu_custom_call.1} parent=5 // pred_check_branch
        %569 = sbr.rel (%p567) target = $region72
      $region71: #{tpu_custom_call.1} parent=5 // pred_region
        // Predicated region
        $region73: #{tpu_custom_call.1} parent=71 // pred_check
          %p570 = pneg %p65
        $region74: #{tpu_custom_call.1} parent=71 // pred_check_branch
          %572 = sbr.rel (%p570) target = $region76
        $region75: #{tpu_custom_call.1} parent=71 // pred_region
          %p573 = scmp.lt.s32.totalorder %s40, 1
          %s574 = scalar_select %p573, %s40, 1
          %s575 = smul.addr %s574, 8
          %s576 = scalar_lea.vmem %s0, %s575
        $region76: #{tpu_custom_call.1} parent=71 // pred_fallthru
          _
        // Predicated region
        $region77: #{tpu_custom_call.1} parent=71 // pred_check
          %p577 = pneg %p91
        $region78: #{tpu_custom_call.1} parent=71 // pred_check_branch
          %579 = sbr.rel (%p577) target = $region80
        $region79: #{tpu_custom_call.1} parent=71 // pred_region
          %s580 = sand.u32 %s81, 1
          %s581 = scalar_lea.sflag [#allocation5], %s580
          %s582 = sand.u32 %s81, 1
          %s583 = scalar_lea.vmem [#allocation4], %s582
          %s585 = ssub.s32 16, 16
          %586 = vsyncadd %s581, %s585
          %s587 = smul.addr %s40, 16
          %s588 = scalar_lea.hbm %s1, %s587
          %s590 = sshll.u32 %s583, 4
          %s591 = int_to_ptr.vmem [resolvable:$true] %s590
          %593 = dma.hbm_to_vmem [thread:$0]  %s588, 16, %s591, %s581
        $region80: #{tpu_custom_call.1} parent=71 // pred_fallthru
          _
        // Predicated region
        $region81: #{tpu_custom_call.1} parent=71 // pred_check
          %p594 = pneg %p119
        $region82: #{tpu_custom_call.1} parent=71 // pred_check_branch
          %596 = sbr.rel (%p594) target = $region84
        $region83: #{tpu_custom_call.1} parent=71 // pred_region
          %p597 = scmp.lt.s32.totalorder %s40, 1
          %s598 = scalar_select %p597, %s40, 1
          %p599 = scmp.lt.s32.totalorder %s41, 0
          %s600 = scalar_select %p599, %s41, 0
          %s601 = sadd.s32 %s600, %s598
          %s602 = smul.addr %s601, 8
          %s603 = scalar_lea.vmem %s2, %s602
        $region84: #{tpu_custom_call.1} parent=71 // pred_fallthru
          _
      $region72: #{tpu_custom_call.1} parent=5 // pred_fallthru
        _
      %p604 = scmp.le.s32.totalorder 1, %s33
      %p605 = scmp.lt.s32.totalorder %s33, 3
      %p606 = pnand %p604, %p605
      %p607 = pneg %p606
      // Predicated region
      $region85: #{tpu_custom_call.1} parent=5 // pred_check
        _
      $region86: #{tpu_custom_call.1} parent=5 // pred_check_branch
        %609 = sbr.rel (%p606) target = $region88
      $region87: #{tpu_custom_call.1} parent=5 // pred_region
        %s610 = ssub.s32 %s33, 1
        %s611 = sand.u32 %s84, 1
        %s612 = scalar_lea.sflag [#allocation5], %s611
        %s613 = sand.u32 %s84, 1
        %s614 = scalar_lea.vmem [#allocation4], %s613
        // Predicated region
        $region89: #{tpu_custom_call.1} parent=87 // pred_check
          %p615 = pneg %p97
        $region90: #{tpu_custom_call.1} parent=87 // pred_check_branch
          %617 = sbr.rel (%p615) target = $region92
        $region91: #{tpu_custom_call.1} parent=87 // pred_region
          %618 = dma.done %s612, 16
        $region92: #{tpu_custom_call.1} parent=87 // pred_fallthru
          _
        // Predicated region
        $region93: #{tpu_custom_call.1} parent=87 // pred_check
          %p619 = pneg %p146
        $region94: #{tpu_custom_call.1} parent=87 // pred_check_branch
          %621 = sbr.rel (%p619) target = $region96
        $region95: #{tpu_custom_call.1} parent=87 // pred_region
          %622 = dma.done [#allocation8], 16
        $region96: #{tpu_custom_call.1} parent=87 // pred_fallthru
          _
        // Predicated region
        $region97: #{tpu_custom_call.1} parent=87 // pred_check
          %p623 = pneg %p167
        $region98: #{tpu_custom_call.1} parent=87 // pred_check_branch
          %625 = sbr.rel (%p623) target = $region100
        $region99: #{tpu_custom_call.1} parent=87 // pred_region
          %626 = dma.done [#allocation8], 16
        $region100: #{tpu_custom_call.1} parent=87 // pred_fallthru
          _
        // Predicated region
        $region101: #{tpu_custom_call.1} parent=87 // pred_check
          %p627 = pneg %p209
        $region102: #{tpu_custom_call.1} parent=87 // pred_check_branch
          %629 = sbr.rel (%p627) target = $region104
        $region103: #{tpu_custom_call.1} parent=87 // pred_region
          %630 = dma.done [#allocation11], 16
        $region104: #{tpu_custom_call.1} parent=87 // pred_fallthru
          _
        // Predicated region
        $region105: #{tpu_custom_call.1} parent=87 // pred_check
          %p631 = pneg %p230
        $region106: #{tpu_custom_call.1} parent=87 // pred_check_branch
          %633 = sbr.rel (%p631) target = $region108
        $region107: #{tpu_custom_call.1} parent=87 // pred_region
          %634 = dma.done [#allocation11], 256
        $region108: #{tpu_custom_call.1} parent=87 // pred_fallthru
          _
        // Predicated region
        $region109: #{tpu_custom_call.1} parent=87 // pred_check
          %p635 = pneg %p251
        $region110: #{tpu_custom_call.1} parent=87 // pred_check_branch
          %637 = sbr.rel (%p635) target = $region112
        $region111: #{tpu_custom_call.1} parent=87 // pred_region
          %638 = dma.done [#allocation14], 16
        $region112: #{tpu_custom_call.1} parent=87 // pred_fallthru
          _
        // Predicated region
        $region113: #{tpu_custom_call.1} parent=87 // pred_check
          %p639 = pneg %p314
        $region114: #{tpu_custom_call.1} parent=87 // pred_check_branch
          %641 = sbr.rel (%p639) target = $region116
        $region115: #{tpu_custom_call.1} parent=87 // pred_region
          %642 = dma.done [#allocation14], 256
        $region116: #{tpu_custom_call.1} parent=87 // pred_fallthru
          _
        // Predicated region
        $region117: #{tpu_custom_call.1} parent=87 // pred_check
          %p643 = pneg %p398
        $region118: #{tpu_custom_call.1} parent=87 // pred_check_branch
          %645 = sbr.rel (%p643) target = $region120
        $region119: #{tpu_custom_call.1} parent=87 // pred_region
          %646 = dma.done [#allocation17], 256
        $region120: #{tpu_custom_call.1} parent=87 // pred_fallthru
          _
        %p647 = scmp.lt.s32.totalorder %s42, 1
        %s648 = scalar_select %p647, %s42, 1
        %s649 = smul.addr %s648, 8
        %s650 = scalar_lea.vmem %s0, %s649
        %p651 = pneg %p71
        %p652 = pneg %p68
        %s653 = sand.u32 %s84, 1
        %s654 = scalar_lea.sflag [#allocation5], %s653
        %s655 = sand.u32 %s84, 1
        %s656 = scalar_lea.vmem [#allocation4], %s655
        %p657 = pneg %p97
        %p658 = pneg %p94
        %p659 = scmp.lt.s32.totalorder %s42, 1
        %s660 = scalar_select %p659, %s42, 1
        %p661 = scmp.lt.s32.totalorder %s43, 0
        %s662 = scalar_select %p661, %s43, 0
        %s663 = sadd.s32 %s662, %s660
        %s664 = smul.addr %s663, 8
        %s665 = scalar_lea.vmem %s2, %s664
        %p666 = pneg %p125
        %p667 = pneg %p122
        %p668 = pneg %p146
        %p669 = pneg %p143
        %p670 = pneg %p167
        %p671 = pneg %p164
        %p672 = pneg %p188
        %p673 = pneg %p185
        %p674 = pneg %p209
        %p675 = pneg %p206
        %p676 = pneg %p230
        %p677 = pneg %p227
        %p678 = pneg %p251
        %p679 = pneg %p248
        %p680 = pneg %p272
        %p681 = pneg %p269
        %p682 = pneg %p293
        %p683 = pneg %p290
        %p684 = pneg %p314
        %p685 = pneg %p311
        %p686 = pneg %p335
        %p687 = pneg %p332
        %p688 = pneg %p356
        %p689 = pneg %p353
        %p690 = pneg %p377
        %p691 = pneg %p374
        %p692 = pneg %p398
        %p693 = pneg %p395
        %p694 = pneg %p419
        %p695 = pneg %p416
        %p696 = pneg %p447
        %p697 = pneg %p444
        %s698 = sand.u32 %s434, 1
        %s699 = scalar_lea.sflag [#allocation6], %s698
        %s700 = sand.u32 %s434, 1
        %s701 = smul.addr %s700, 8
        %s702 = scalar_lea.vmem [#allocation18], %s701
        %p703 = scmp.lt.s32.totalorder %s42, 1
        %s704 = scalar_select %p703, %s42, 1
        %s705 = smul.addr %s704, 8
        %s706 = scalar_lea.vmem %s0, %s705
        %p707 = scmp.lt.s32.totalorder %s42, 1
        %s708 = scalar_select %p707, %s42, 1
        %p709 = scmp.lt.s32.totalorder %s43, 0
        %s710 = scalar_select %p709, %s43, 0
        %s711 = sadd.s32 %s710, %s708
        %s712 = smul.addr %s711, 8
        %s713 = scalar_lea.vmem %s2, %s712
        %v715 = vld [vmem:[#allocation7] sm:$0x1]
        %v716 = vld [vmem:[#allocation9] sm:$0x1]
        %p717 = scmp.eq.s32.totalorder %s43, 0
        // Predicated region
        $region121: #{tpu_custom_call.1} parent=87 // pred_check
          %p718 = pneg %p717
        $region122: #{tpu_custom_call.1} parent=87 // pred_check_branch
          %720 = sbr.rel (%p718) target = $region124
        $region123: #{tpu_custom_call.1} parent=87 // pred_region
          %v721 = vld [vmem:[%s706] sm:$0xff]
          %vm722 = vcmask 261120
          %v723 = vsel %vm722, %v721, 0.0
          %724 = vadd.xlane.f32.xlu0 %v723
          %v725 = vpop.xlane.xlu0 %724
          %v726 = vrcp.pop 32.0
          %v727 = vmul.f32 %v725, %v726
          %v728 = vsub.f32 %v721, %v727
          %v729 = vmul.f32 %v728, %v728
          %v730 = vsel %vm722, %v729, 0.0
          %731 = vadd.xlane.f32.xlu0 %v730
          %v732 = vpop.xlane.xlu0 %731
          %v733 = vmul.f32 %v732, %v726
          %v734 = vadd.f32 %v733, 1e-05
          %v735 = vrsqrt.pop %v734
          %v736 = vmul.f32 %v728, %v735
          %v738 = vlaneseq
          %v739 = vshrl.u32 %v738, 7
          %v740 = vsub.s32 0, %v739
          %v741 = vrot.slane %v715, %v740
          %v743 = vmul.f32 %v736, %v741
          %v745 = vlaneseq
          %v746 = vshrl.u32 %v745, 7
          %v747 = vsub.s32 0, %v746
          %v748 = vrot.slane %v716, %v747
          %v750 = vadd.f32 %v743, %v748
          %v751 = vpack.c.bf16 %v750, %v750
          %v752 = vld [vmem:[#allocation12] sm:$0xf]
          %v753 = vld [vmem:[#allocation12 + $0x4] sm:$0xf]
          %v754 = vld [vmem:[#allocation12 + $0x8] sm:$0xf]
          %v755 = vld [vmem:[#allocation12 + $0xc] sm:$0xf]
          %v756 = vld [vmem:[#allocation13] sm:$0x1]
          %v758 = vlaneseq
          %v759 = vshrl.u32 %v758, 7
          %v760 = vsub.s32 0, %v759
          %v761 = vrot.slane %v756, %v760
          %v767 = vunpack.c.l.b16 %v752
          %v768 = vunpack.c.l.b16 %v753
          %v769 = vunpack.c.l.b16 %v754
          %v770 = vunpack.c.l.b16 %v755
          %v771 = vpack.c.b16 %v768, %v767
          %v772 = vpack.c.b16 %v770, %v769
          %v776 = vsel %vm722, %v751, 0
          %778 = vmatprep.subr.bf16.mxu0 0
          %779 = vmatpush1.bf16.msra.mxu0 %v771
          %780 = vmatprep.subr.bf16.mxu0 0
          %781 = vmatpush1.bf16.msra.mxu0 %v772
          %782 = vmatprep.subr.bf16.mxu0 0
          %783 = vmatpush1.bf16.msra.mxu0 0
          %784 = vmatprep.subr.bf16.mxu0 0
          %785 = vmatpush1.bf16.msra.mxu0 0
          %786 = vmatprep.subr.bf16.mxu0 0
          %787 = vmatpush1.bf16.msra.mxu0 0
          %788 = vmatprep.subr.bf16.mxu0 0
          %789 = vmatpush1.bf16.msra.mxu0 0
          %790 = vmatprep.subr.bf16.mxu0 0
          %791 = vmatpush1.bf16.msra.mxu0 0
          %792 = vmatprep.subr.bf16.mxu0 0
          %793 = vmatpush1.bf16.msra.mxu0 0
          %794 = vmatprep.subr.bf16.mxu0 0
          %795 = vmatpush1.bf16.msra.mxu0 0
          %796 = vmatprep.subr.bf16.mxu0 0
          %797 = vmatpush1.bf16.msra.mxu0 0
          %798 = vmatprep.subr.bf16.mxu0 0
          %799 = vmatpush1.bf16.msra.mxu0 0
          %800 = vmatprep.subr.bf16.mxu0 0
          %801 = vmatpush1.bf16.msra.mxu0 0
          %802 = vmatprep.subr.bf16.mxu0 0
          %803 = vmatpush1.bf16.msra.mxu0 0
          %804 = vmatprep.subr.bf16.mxu0 0
          %805 = vmatpush1.bf16.msra.mxu0 0
          %806 = vmatprep.subr.bf16.mxu0 0
          %807 = vmatpush1.bf16.msra.mxu0 0
          %808 = vmatprep.subr.bf16.mxu0 0
          %809 = vmatpush1.bf16.msra.mxu0 0
          %810 = vmatprep.mubr.bf16.mxu0 0
          %811 = vmatmul.mubr.bf16.gmra.mrb[0].mxu0 %v776
          %v812 = vpop.f32.mrb[0].mxu0
          %v813 = vadd.f32 %v761, %v812
          %v814 = vpop.f32.mrb[0].mxu0
          %v815 = vpop.f32.mrb[0].mxu0
          %v816 = vpop.f32.mrb[0].mxu0
          %817 = vdwg.mxu0
          %v818 = vpack.c.bf16 %v813, %v813
          %vm819 = vcmask 257024
          %820 = vst.msk [vmem:[#allocation2] sm:$0xf] %vm819, %v818
          %v822 = vunpack.c.l.b16 %v818
          %v823 = vpack.c.b16 %v822, %v822
          %824 = vrot.lane.b32.xlu0 %v823, 96
          %v825 = vpop.permute.xlu0 %824
          %827 = vst.msk [vmem:[#allocation3] sm:$0xf] %vm819, %v825
        $region124: #{tpu_custom_call.1} parent=87 // pred_fallthru
          _
        %s828 = smul.u32 %s43, 8
        %s829 = scalar_lea.vmem %s706, %s828
        %v830 = vld [vmem:[%s829] sm:$0xff]
        %vm831 = vcmask 261120
        %v832 = vsel %vm831, %v830, 0.0
        %833 = vadd.xlane.f32.xlu0 %v832
        %v834 = vpop.xlane.xlu0 %833
        %v835 = vrcp.pop 32.0
        %v836 = vmul.f32 %v834, %v835
        %v837 = vsub.f32 %v830, %v836
        %v838 = vmul.f32 %v837, %v837
        %v839 = vsel %vm831, %v838, 0.0
        %840 = vadd.xlane.f32.xlu0 %v839
        %v841 = vpop.xlane.xlu0 %840
        %v842 = vmul.f32 %v841, %v835
        %v843 = vadd.f32 %v842, 1e-05
        %v844 = vrsqrt.pop %v843
        %v845 = vmul.f32 %v837, %v844
        %v847 = vlaneseq
        %v848 = vshrl.u32 %v847, 7
        %v849 = vsub.s32 0, %v848
        %v850 = vrot.slane %v715, %v849
        %v852 = vmul.f32 %v845, %v850
        %v854 = vlaneseq
        %v855 = vshrl.u32 %v854, 7
        %v856 = vsub.s32 0, %v855
        %v857 = vrot.slane %v716, %v856
        %v859 = vadd.f32 %v852, %v857
        %v860 = vpack.c.bf16 %v859, %v859
        %v861 = vld [vmem:[%s5] sm:$0xf]
        %v862 = vld [vmem:[%s5 + $0x4] sm:$0xf]
        %v863 = vld [vmem:[%s5 + $0x8] sm:$0xf]
        %v864 = vld [vmem:[%s5 + $0xc] sm:$0xf]
        %v865 = vld [vmem:[#allocation10] sm:$0x1]
        %v867 = vlaneseq
        %v868 = vshrl.u32 %v867, 7
        %v869 = vsub.s32 0, %v868
        %v870 = vrot.slane %v865, %v869
        %v876 = vunpack.c.l.b16 %v861
        %v877 = vunpack.c.l.b16 %v862
        %v878 = vunpack.c.l.b16 %v863
        %v879 = vunpack.c.l.b16 %v864
        %v880 = vpack.c.b16 %v877, %v876
        %v881 = vpack.c.b16 %v879, %v878
        %v885 = vsel %vm831, %v860, 0
        %887 = vmatprep.subr.bf16.mxu0 0
        %888 = vmatpush1.bf16.msra.mxu0 %v880
        %889 = vmatprep.subr.bf16.mxu0 0
        %890 = vmatpush1.bf16.msra.mxu0 %v881
        %891 = vmatprep.subr.bf16.mxu0 0
        %892 = vmatpush1.bf16.msra.mxu0 0
        %893 = vmatprep.subr.bf16.mxu0 0
        %894 = vmatpush1.bf16.msra.mxu0 0
        %895 = vmatprep.subr.bf16.mxu0 0
        %896 = vmatpush1.bf16.msra.mxu0 0
        %897 = vmatprep.subr.bf16.mxu0 0
        %898 = vmatpush1.bf16.msra.mxu0 0
        %899 = vmatprep.subr.bf16.mxu0 0
        %900 = vmatpush1.bf16.msra.mxu0 0
        %901 = vmatprep.subr.bf16.mxu0 0
        %902 = vmatpush1.bf16.msra.mxu0 0
        %903 = vmatprep.subr.bf16.mxu0 0
        %904 = vmatpush1.bf16.msra.mxu0 0
        %905 = vmatprep.subr.bf16.mxu0 0
        %906 = vmatpush1.bf16.msra.mxu0 0
        %907 = vmatprep.subr.bf16.mxu0 0
        %908 = vmatpush1.bf16.msra.mxu0 0
        %909 = vmatprep.subr.bf16.mxu0 0
        %910 = vmatpush1.bf16.msra.mxu0 0
        %911 = vmatprep.subr.bf16.mxu0 0
        %912 = vmatpush1.bf16.msra.mxu0 0
        %913 = vmatprep.subr.bf16.mxu0 0
        %914 = vmatpush1.bf16.msra.mxu0 0
        %915 = vmatprep.subr.bf16.mxu0 0
        %916 = vmatpush1.bf16.msra.mxu0 0
        %917 = vmatprep.subr.bf16.mxu0 0
        %918 = vmatpush1.bf16.msra.mxu0 0
        %919 = vmatprep.mubr.bf16.mxu0 0
        %920 = vmatmul.mubr.bf16.gmra.mrb[0].mxu0 %v885
        %v921 = vpop.f32.mrb[0].mxu0
        %v922 = vadd.f32 %v870, %v921
        %v923 = vpop.f32.mrb[0].mxu0
        %v924 = vpop.f32.mrb[0].mxu0
        %v925 = vpop.f32.mrb[0].mxu0
        %926 = vdwg.mxu0
        %v927 = vld [vmem:[%s614] sm:$0x1]
        %v928 = vpack.c.bf16 %v922, %v922
        %v929 = vld [vmem:[#allocation2] sm:$0xf]
        %v930 = vld [vmem:[#allocation3] sm:$0xf]
        %v932 = vlaneseq
        %v933 = vshrl.u32 %v932, 7
        %v934 = vsub.s32 0, %v933
        %v935 = vrot.slane %v927, %v934
        %vm937 = vcmask 64512
        %v939 = vsel %vm937, %v928, 0
        %v942 = vsel %vm937, %v929, 0
        %944 = vmatprep.subr.bf16.mxu0 0
        %945 = vmatpush1.bf16.xpose.msra.mxu0 %v942
        %946 = vmatprep.subr.bf16.mxu0 0
        %947 = vmatpush1.bf16.xpose.msra.mxu0 0
        %948 = vmatprep.subr.bf16.mxu0 0
        %949 = vmatpush1.bf16.xpose.msra.mxu0 0
        %950 = vmatprep.subr.bf16.mxu0 0
        %951 = vmatpush1.bf16.xpose.msra.mxu0 0
        %952 = vmatprep.subr.bf16.mxu0 0
        %953 = vmatpush1.bf16.xpose.msra.mxu0 0
        %954 = vmatprep.subr.bf16.mxu0 0
        %955 = vmatpush1.bf16.xpose.msra.mxu0 0
        %956 = vmatprep.subr.bf16.mxu0 0
        %957 = vmatpush1.bf16.xpose.msra.mxu0 0
        %958 = vmatprep.subr.bf16.mxu0 0
        %959 = vmatpush1.bf16.xpose.msra.mxu0 0
        %960 = vmatprep.subr.bf16.mxu0 0
        %961 = vmatpush1.bf16.xpose.msra.mxu0 0
        %962 = vmatprep.subr.bf16.mxu0 0
        %963 = vmatpush1.bf16.xpose.msra.mxu0 0
        %964 = vmatprep.subr.bf16.mxu0 0
        %965 = vmatpush1.bf16.xpose.msra.mxu0 0
        %966 = vmatprep.subr.bf16.mxu0 0
        %967 = vmatpush1.bf16.xpose.msra.mxu0 0
        %968 = vmatprep.subr.bf16.mxu0 0
        %969 = vmatpush1.bf16.xpose.msra.mxu0 0
        %970 = vmatprep.subr.bf16.mxu0 0
        %971 = vmatpush1.bf16.xpose.msra.mxu0 0
        %972 = vmatprep.subr.bf16.mxu0 0
        %973 = vmatpush1.bf16.xpose.msra.mxu0 0
        %974 = vmatprep.subr.bf16.mxu0 0
        %975 = vmatpush1.bf16.xpose.msra.mxu0 0
        %976 = vmatprep.mubr.bf16.mxu0 0
        %977 = vmatmul.mubr.bf16.gmra.mrb[0].mxu0 %v939
        %v978 = vpop.f32.mrb[0].mxu0
        %v979 = vadd.f32 %v935, %v978
        %v980 = vpop.f32.mrb[0].mxu0
        %v981 = vpop.f32.mrb[0].mxu0
        %v982 = vpop.f32.mrb[0].mxu0
        %983 = vdwg.mxu0
        %v984 = vsel %vm937, %v979, -inf
        %985 = vmax.xlane.f32.xlu0 %v984
        %v986 = vpop.xlane.xlu0 %985
        %v987 = vsub.f32 %v979, %v986
        %v988 = vmul.f32 %v987, 1.442695
        %v989 = vpow.pop %v988
        %v990 = vsel %vm937, %v989, 0.0
        %991 = vadd.xlane.f32.xlu0 %v990
        %v992 = vpop.xlane.xlu0 %991
        %v993 = vrcp.pop %v992
        %v994 = vmul.f32 %v989, %v993
        %v995 = vpack.c.bf16 %v994, %v994
        %v997 = vsel %vm937, %v995, 0
        %vm999 = vcmask 1043456
        %v1001 = vsel %vm999, %v930, 0
        %1003 = vmatprep.subr.bf16.mxu0 0
        %1004 = vmatpush1.bf16.msra.mxu0 %v1001
        %1005 = vmatprep.subr.bf16.mxu0 0
        %1006 = vmatpush1.bf16.msra.mxu0 0
        %1007 = vmatprep.subr.bf16.mxu0 0
        %1008 = vmatpush1.bf16.msra.mxu0 0
        %1009 = vmatprep.subr.bf16.mxu0 0
        %1010 = vmatpush1.bf16.msra.mxu0 0
        %1011 = vmatprep.subr.bf16.mxu0 0
        %1012 = vmatpush1.bf16.msra.mxu0 0
        %1013 = vmatprep.subr.bf16.mxu0 0
        %1014 = vmatpush1.bf16.msra.mxu0 0
        %1015 = vmatprep.subr.bf16.mxu0 0
        %1016 = vmatpush1.bf16.msra.mxu0 0
        %1017 = vmatprep.subr.bf16.mxu0 0
        %1018 = vmatpush1.bf16.msra.mxu0 0
        %1019 = vmatprep.subr.bf16.mxu0 0
        %1020 = vmatpush1.bf16.msra.mxu0 0
        %1021 = vmatprep.subr.bf16.mxu0 0
        %1022 = vmatpush1.bf16.msra.mxu0 0
        %1023 = vmatprep.subr.bf16.mxu0 0
        %1024 = vmatpush1.bf16.msra.mxu0 0
        %1025 = vmatprep.subr.bf16.mxu0 0
        %1026 = vmatpush1.bf16.msra.mxu0 0
        %1027 = vmatprep.subr.bf16.mxu0 0
        %1028 = vmatpush1.bf16.msra.mxu0 0
        %1029 = vmatprep.subr.bf16.mxu0 0
        %1030 = vmatpush1.bf16.msra.mxu0 0
        %1031 = vmatprep.subr.bf16.mxu0 0
        %1032 = vmatpush1.bf16.msra.mxu0 0
        %1033 = vmatprep.subr.bf16.mxu0 0
        %1034 = vmatpush1.bf16.msra.mxu0 0
        %1035 = vmatprep.mubr.bf16.mxu0 0
        %1036 = vmatmul.mubr.bf16.gmra.mrb[0].mxu0 %v997
        %v1037 = vpop.f32.mrb[0].mxu0
        %v1038 = vadd.f32 0.0, %v1037
        %v1039 = vpop.f32.mrb[0].mxu0
        %v1040 = vpop.f32.mrb[0].mxu0
        %v1041 = vpop.f32.mrb[0].mxu0
        %1042 = vdwg.mxu0
        %1044 = vrot.lane.b32.xlu0 %v928, 120
        %v1045 = vpop.permute.xlu0 %1044
        %v1047 = vunpack.c.l.b16 %v929
        %v1048 = vpack.c.b16 %v1047, %v1047
        %1049 = vrot.lane.b32.xlu0 %v1048, 120
        %v1050 = vpop.permute.xlu0 %1049
        %v1052 = vsel %vm937, %v1045, 0
        %v1055 = vsel %vm937, %v1050, 0
        %1057 = vmatprep.subr.bf16.mxu0 0
        %1058 = vmatpush1.bf16.xpose.msra.mxu0 %v1055
        %1059 = vmatprep.subr.bf16.mxu0 0
        %1060 = vmatpush1.bf16.xpose.msra.mxu0 0
        %1061 = vmatprep.subr.bf16.mxu0 0
        %1062 = vmatpush1.bf16.xpose.msra.mxu0 0
        %1063 = vmatprep.subr.bf16.mxu0 0
        %1064 = vmatpush1.bf16.xpose.msra.mxu0 0
        %1065 = vmatprep.subr.bf16.mxu0 0
        %1066 = vmatpush1.bf16.xpose.msra.mxu0 0
        %1067 = vmatprep.subr.bf16.mxu0 0
        %1068 = vmatpush1.bf16.xpose.msra.mxu0 0
        %1069 = vmatprep.subr.bf16.mxu0 0
        %1070 = vmatpush1.bf16.xpose.msra.mxu0 0
        %1071 = vmatprep.subr.bf16.mxu0 0
        %1072 = vmatpush1.bf16.xpose.msra.mxu0 0
        %1073 = vmatprep.subr.bf16.mxu0 0
        %1074 = vmatpush1.bf16.xpose.msra.mxu0 0
        %1075 = vmatprep.subr.bf16.mxu0 0
        %1076 = vmatpush1.bf16.xpose.msra.mxu0 0
        %1077 = vmatprep.subr.bf16.mxu0 0
        %1078 = vmatpush1.bf16.xpose.msra.mxu0 0
        %1079 = vmatprep.subr.bf16.mxu0 0
        %1080 = vmatpush1.bf16.xpose.msra.mxu0 0
        %1081 = vmatprep.subr.bf16.mxu0 0
        %1082 = vmatpush1.bf16.xpose.msra.mxu0 0
        %1083 = vmatprep.subr.bf16.mxu0 0
        %1084 = vmatpush1.bf16.xpose.msra.mxu0 0
        %1085 = vmatprep.subr.bf16.mxu0 0
        %1086 = vmatpush1.bf16.xpose.msra.mxu0 0
        %1087 = vmatprep.subr.bf16.mxu0 0
        %1088 = vmatpush1.bf16.xpose.msra.mxu0 0
        %1089 = vmatprep.mubr.bf16.mxu0 0
        %1090 = vmatmul.mubr.bf16.gmra.mrb[0].mxu0 %v1052
        %v1091 = vpop.f32.mrb[0].mxu0
        %v1092 = vadd.f32 %v935, %v1091
        %v1093 = vpop.f32.mrb[0].mxu0
        %v1094 = vpop.f32.mrb[0].mxu0
        %v1095 = vpop.f32.mrb[0].mxu0
        %1096 = vdwg.mxu0
        %v1097 = vsel %vm937, %v1092, -inf
        %1098 = vmax.xlane.f32.xlu0 %v1097
        %v1099 = vpop.xlane.xlu0 %1098
        %v1100 = vsub.f32 %v1092, %v1099
        %v1101 = vmul.f32 %v1100, 1.442695
        %v1102 = vpow.pop %v1101
        %v1103 = vsel %vm937, %v1102, 0.0
        %1104 = vadd.xlane.f32.xlu0 %v1103
        %v1105 = vpop.xlane.xlu0 %1104
        %v1106 = vrcp.pop %v1105
        %v1107 = vmul.f32 %v1102, %v1106
        %v1108 = vpack.c.bf16 %v1107, %v1107
        %v1110 = vunpack.c.l.b16 %v930
        %v1111 = vpack.c.b16 %v1110, %v1110
        %1112 = vrot.lane.b32.xlu0 %v1111, 120
        %v1113 = vpop.permute.xlu0 %1112
        %v1115 = vsel %vm937, %v1108, 0
        %v1118 = vsel %vm999, %v1113, 0
        %1120 = vmatprep.subr.bf16.mxu0 0
        %1121 = vmatpush1.bf16.msra.mxu0 %v1118
        %1122 = vmatprep.subr.bf16.mxu0 0
        %1123 = vmatpush1.bf16.msra.mxu0 0
        %1124 = vmatprep.subr.bf16.mxu0 0
        %1125 = vmatpush1.bf16.msra.mxu0 0
        %1126 = vmatprep.subr.bf16.mxu0 0
        %1127 = vmatpush1.bf16.msra.mxu0 0
        %1128 = vmatprep.subr.bf16.mxu0 0
        %1129 = vmatpush1.bf16.msra.mxu0 0
        %1130 = vmatprep.subr.bf16.mxu0 0
        %1131 = vmatpush1.bf16.msra.mxu0 0
        %1132 = vmatprep.subr.bf16.mxu0 0
        %1133 = vmatpush1.bf16.msra.mxu0 0
        %1134 = vmatprep.subr.bf16.mxu0 0
        %1135 = vmatpush1.bf16.msra.mxu0 0
        %1136 = vmatprep.subr.bf16.mxu0 0
        %1137 = vmatpush1.bf16.msra.mxu0 0
        %1138 = vmatprep.subr.bf16.mxu0 0
        %1139 = vmatpush1.bf16.msra.mxu0 0
        %1140 = vmatprep.subr.bf16.mxu0 0
        %1141 = vmatpush1.bf16.msra.mxu0 0
        %1142 = vmatprep.subr.bf16.mxu0 0
        %1143 = vmatpush1.bf16.msra.mxu0 0
        %1144 = vmatprep.subr.bf16.mxu0 0
        %1145 = vmatpush1.bf16.msra.mxu0 0
        %1146 = vmatprep.subr.bf16.mxu0 0
        %1147 = vmatpush1.bf16.msra.mxu0 0
        %1148 = vmatprep.subr.bf16.mxu0 0
        %1149 = vmatpush1.bf16.msra.mxu0 0
        %1150 = vmatprep.subr.bf16.mxu0 0
        %1151 = vmatpush1.bf16.msra.mxu0 0
        %1152 = vmatprep.mubr.bf16.mxu0 0
        %1153 = vmatmul.mubr.bf16.gmra.mrb[0].mxu0 %v1115
        %v1154 = vpop.f32.mrb[0].mxu0
        %v1155 = vadd.f32 0.0, %v1154
        %v1156 = vpop.f32.mrb[0].mxu0
        %v1157 = vpop.f32.mrb[0].mxu0
        %v1158 = vpop.f32.mrb[0].mxu0
        %1159 = vdwg.mxu0
        %1160 = vrot.lane.b32.xlu0 %v928, 112
        %v1161 = vpop.permute.xlu0 %1160
        %1162 = vrot.lane.b32.xlu0 %v1048, 112
        %v1163 = vpop.permute.xlu0 %1162
        %v1165 = vsel %vm937, %v1161, 0
        %v1168 = vsel %vm937, %v1163, 0
        %1170 = vmatprep.subr.bf16.mxu0 0
        %1171 = vmatpush1.bf16.xpose.msra.mxu0 %v1168
        %1172 = vmatprep.subr.bf16.mxu0 0
        %1173 = vmatpush1.bf16.xpose.msra.mxu0 0
        %1174 = vmatprep.subr.bf16.mxu0 0
        %1175 = vmatpush1.bf16.xpose.msra.mxu0 0
        %1176 = vmatprep.subr.bf16.mxu0 0
        %1177 = vmatpush1.bf16.xpose.msra.mxu0 0
        %1178 = vmatprep.subr.bf16.mxu0 0
        %1179 = vmatpush1.bf16.xpose.msra.mxu0 0
        %1180 = vmatprep.subr.bf16.mxu0 0
        %1181 = vmatpush1.bf16.xpose.msra.mxu0 0
        %1182 = vmatprep.subr.bf16.mxu0 0
        %1183 = vmatpush1.bf16.xpose.msra.mxu0 0
        %1184 = vmatprep.subr.bf16.mxu0 0
        %1185 = vmatpush1.bf16.xpose.msra.mxu0 0
        %1186 = vmatprep.subr.bf16.mxu0 0
        %1187 = vmatpush1.bf16.xpose.msra.mxu0 0
        %1188 = vmatprep.subr.bf16.mxu0 0
        %1189 = vmatpush1.bf16.xpose.msra.mxu0 0
        %1190 = vmatprep.subr.bf16.mxu0 0
        %1191 = vmatpush1.bf16.xpose.msra.mxu0 0
        %1192 = vmatprep.subr.bf16.mxu0 0
        %1193 = vmatpush1.bf16.xpose.msra.mxu0 0
        %1194 = vmatprep.subr.bf16.mxu0 0
        %1195 = vmatpush1.bf16.xpose.msra.mxu0 0
        %1196 = vmatprep.subr.bf16.mxu0 0
        %1197 = vmatpush1.bf16.xpose.msra.mxu0 0
        %1198 = vmatprep.subr.bf16.mxu0 0
        %1199 = vmatpush1.bf16.xpose.msra.mxu0 0
        %1200 = vmatprep.subr.bf16.mxu0 0
        %1201 = vmatpush1.bf16.xpose.msra.mxu0 0
        %1202 = vmatprep.mubr.bf16.mxu0 0
        %1203 = vmatmul.mubr.bf16.gmra.mrb[0].mxu0 %v1165
        %v1204 = vpop.f32.mrb[0].mxu0
        %v1205 = vadd.f32 %v935, %v1204
        %v1206 = vpop.f32.mrb[0].mxu0
        %v1207 = vpop.f32.mrb[0].mxu0
        %v1208 = vpop.f32.mrb[0].mxu0
        %1209 = vdwg.mxu0
        %v1210 = vsel %vm937, %v1205, -inf
        %1211 = vmax.xlane.f32.xlu0 %v1210
        %v1212 = vpop.xlane.xlu0 %1211
        %v1213 = vsub.f32 %v1205, %v1212
        %v1214 = vmul.f32 %v1213, 1.442695
        %v1215 = vpow.pop %v1214
        %v1216 = vsel %vm937, %v1215, 0.0
        %1217 = vadd.xlane.f32.xlu0 %v1216
        %v1218 = vpop.xlane.xlu0 %1217
        %v1219 = vrcp.pop %v1218
        %v1220 = vmul.f32 %v1215, %v1219
        %v1221 = vpack.c.bf16 %v1220, %v1220
        %1222 = vrot.lane.b32.xlu0 %v1111, 112
        %v1223 = vpop.permute.xlu0 %1222
        %v1225 = vsel %vm937, %v1221, 0
        %v1228 = vsel %vm999, %v1223, 0
        %1230 = vmatprep.subr.bf16.mxu0 0
        %1231 = vmatpush1.bf16.msra.mxu0 %v1228
        %1232 = vmatprep.subr.bf16.mxu0 0
        %1233 = vmatpush1.bf16.msra.mxu0 0
        %1234 = vmatprep.subr.bf16.mxu0 0
        %1235 = vmatpush1.bf16.msra.mxu0 0
        %1236 = vmatprep.subr.bf16.mxu0 0
        %1237 = vmatpush1.bf16.msra.mxu0 0
        %1238 = vmatprep.subr.bf16.mxu0 0
        %1239 = vmatpush1.bf16.msra.mxu0 0
        %1240 = vmatprep.subr.bf16.mxu0 0
        %1241 = vmatpush1.bf16.msra.mxu0 0
        %1242 = vmatprep.subr.bf16.mxu0 0
        %1243 = vmatpush1.bf16.msra.mxu0 0
        %1244 = vmatprep.subr.bf16.mxu0 0
        %1245 = vmatpush1.bf16.msra.mxu0 0
        %1246 = vmatprep.subr.bf16.mxu0 0
        %1247 = vmatpush1.bf16.msra.mxu0 0
        %1248 = vmatprep.subr.bf16.mxu0 0
        %1249 = vmatpush1.bf16.msra.mxu0 0
        %1250 = vmatprep.subr.bf16.mxu0 0
        %1251 = vmatpush1.bf16.msra.mxu0 0
        %1252 = vmatprep.subr.bf16.mxu0 0
        %1253 = vmatpush1.bf16.msra.mxu0 0
        %1254 = vmatprep.subr.bf16.mxu0 0
        %1255 = vmatpush1.bf16.msra.mxu0 0
        %1256 = vmatprep.subr.bf16.mxu0 0
        %1257 = vmatpush1.bf16.msra.mxu0 0
        %1258 = vmatprep.subr.bf16.mxu0 0
        %1259 = vmatpush1.bf16.msra.mxu0 0
        %1260 = vmatprep.subr.bf16.mxu0 0
        %1261 = vmatpush1.bf16.msra.mxu0 0
        %1262 = vmatprep.mubr.bf16.mxu0 0
        %1263 = vmatmul.mubr.bf16.gmra.mrb[0].mxu0 %v1225
        %v1264 = vpop.f32.mrb[0].mxu0
        %v1265 = vadd.f32 0.0, %v1264
        %v1266 = vpop.f32.mrb[0].mxu0
        %v1267 = vpop.f32.mrb[0].mxu0
        %v1268 = vpop.f32.mrb[0].mxu0
        %1269 = vdwg.mxu0
        %1270 = vrot.lane.b32.xlu0 %v928, 104
        %v1271 = vpop.permute.xlu0 %1270
        %1272 = vrot.lane.b32.xlu0 %v1048, 104
        %v1273 = vpop.permute.xlu0 %1272
        %v1275 = vsel %vm937, %v1271, 0
        %v1278 = vsel %vm937, %v1273, 0
        %1280 = vmatprep.subr.bf16.mxu0 0
        %1281 = vmatpush1.bf16.xpose.msra.mxu0 %v1278
        %1282 = vmatprep.subr.bf16.mxu0 0
        %1283 = vmatpush1.bf16.xpose.msra.mxu0 0
        %1284 = vmatprep.subr.bf16.mxu0 0
        %1285 = vmatpush1.bf16.xpose.msra.mxu0 0
        %1286 = vmatprep.subr.bf16.mxu0 0
        %1287 = vmatpush1.bf16.xpose.msra.mxu0 0
        %1288 = vmatprep.subr.bf16.mxu0 0
        %1289 = vmatpush1.bf16.xpose.msra.mxu0 0
        %1290 = vmatprep.subr.bf16.mxu0 0
        %1291 = vmatpush1.bf16.xpose.msra.mxu0 0
        %1292 = vmatprep.subr.bf16.mxu0 0
        %1293 = vmatpush1.bf16.xpose.msra.mxu0 0
        %1294 = vmatprep.subr.bf16.mxu0 0
        %1295 = vmatpush1.bf16.xpose.msra.mxu0 0
        %1296 = vmatprep.subr.bf16.mxu0 0
        %1297 = vmatpush1.bf16.xpose.msra.mxu0 0
        %1298 = vmatprep.subr.bf16.mxu0 0
        %1299 = vmatpush1.bf16.xpose.msra.mxu0 0
        %1300 = vmatprep.subr.bf16.mxu0 0
        %1301 = vmatpush1.bf16.xpose.msra.mxu0 0
        %1302 = vmatprep.subr.bf16.mxu0 0
        %1303 = vmatpush1.bf16.xpose.msra.mxu0 0
        %1304 = vmatprep.subr.bf16.mxu0 0
        %1305 = vmatpush1.bf16.xpose.msra.mxu0 0
        %1306 = vmatprep.subr.bf16.mxu0 0
        %1307 = vmatpush1.bf16.xpose.msra.mxu0 0
        %1308 = vmatprep.subr.bf16.mxu0 0
        %1309 = vmatpush1.bf16.xpose.msra.mxu0 0
        %1310 = vmatprep.subr.bf16.mxu0 0
        %1311 = vmatpush1.bf16.xpose.msra.mxu0 0
        %1312 = vmatprep.mubr.bf16.mxu0 0
        %1313 = vmatmul.mubr.bf16.gmra.mrb[0].mxu0 %v1275
        %v1314 = vpop.f32.mrb[0].mxu0
        %v1315 = vadd.f32 %v935, %v1314
        %v1316 = vpop.f32.mrb[0].mxu0
        %v1317 = vpop.f32.mrb[0].mxu0
        %v1318 = vpop.f32.mrb[0].mxu0
        %1319 = vdwg.mxu0
        %v1320 = vsel %vm937, %v1315, -inf
        %1321 = vmax.xlane.f32.xlu0 %v1320
        %v1322 = vpop.xlane.xlu0 %1321
        %v1323 = vsub.f32 %v1315, %v1322
        %v1324 = vmul.f32 %v1323, 1.442695
        %v1325 = vpow.pop %v1324
        %v1326 = vsel %vm937, %v1325, 0.0
        %1327 = vadd.xlane.f32.xlu0 %v1326
        %v1328 = vpop.xlane.xlu0 %1327
        %v1329 = vrcp.pop %v1328
        %v1330 = vmul.f32 %v1325, %v1329
        %v1331 = vpack.c.bf16 %v1330, %v1330
        %1332 = vrot.lane.b32.xlu0 %v1111, 104
        %v1333 = vpop.permute.xlu0 %1332
        %v1335 = vsel %vm937, %v1331, 0
        %v1338 = vsel %vm999, %v1333, 0
        %1340 = vmatprep.subr.bf16.mxu0 0
        %1341 = vmatpush1.bf16.msra.mxu0 %v1338
        %1342 = vmatprep.subr.bf16.mxu0 0
        %1343 = vmatpush1.bf16.msra.mxu0 0
        %1344 = vmatprep.subr.bf16.mxu0 0
        %1345 = vmatpush1.bf16.msra.mxu0 0
        %1346 = vmatprep.subr.bf16.mxu0 0
        %1347 = vmatpush1.bf16.msra.mxu0 0
        %1348 = vmatprep.subr.bf16.mxu0 0
        %1349 = vmatpush1.bf16.msra.mxu0 0
        %1350 = vmatprep.subr.bf16.mxu0 0
        %1351 = vmatpush1.bf16.msra.mxu0 0
        %1352 = vmatprep.subr.bf16.mxu0 0
        %1353 = vmatpush1.bf16.msra.mxu0 0
        %1354 = vmatprep.subr.bf16.mxu0 0
        %1355 = vmatpush1.bf16.msra.mxu0 0
        %1356 = vmatprep.subr.bf16.mxu0 0
        %1357 = vmatpush1.bf16.msra.mxu0 0
        %1358 = vmatprep.subr.bf16.mxu0 0
        %1359 = vmatpush1.bf16.msra.mxu0 0
        %1360 = vmatprep.subr.bf16.mxu0 0
        %1361 = vmatpush1.bf16.msra.mxu0 0
        %1362 = vmatprep.subr.bf16.mxu0 0
        %1363 = vmatpush1.bf16.msra.mxu0 0
        %1364 = vmatprep.subr.bf16.mxu0 0
        %1365 = vmatpush1.bf16.msra.mxu0 0
        %1366 = vmatprep.subr.bf16.mxu0 0
        %1367 = vmatpush1.bf16.msra.mxu0 0
        %1368 = vmatprep.subr.bf16.mxu0 0
        %1369 = vmatpush1.bf16.msra.mxu0 0
        %1370 = vmatprep.subr.bf16.mxu0 0
        %1371 = vmatpush1.bf16.msra.mxu0 0
        %1372 = vmatprep.mubr.bf16.mxu0 0
        %1373 = vmatmul.mubr.bf16.gmra.mrb[0].mxu0 %v1335
        %v1374 = vpop.f32.mrb[0].mxu0
        %v1375 = vadd.f32 0.0, %v1374
        %v1376 = vpop.f32.mrb[0].mxu0
        %v1377 = vpop.f32.mrb[0].mxu0
        %v1378 = vpop.f32.mrb[0].mxu0
        %1379 = vdwg.mxu0
        %1381 = vrot.lane.b32.xlu0 %v1155, 8
        %v1382 = vpop.permute.xlu0 %1381
        %1385 = vrot.lane.b32.xlu0 %v1265, 16
        %v1386 = vpop.permute.xlu0 %1385
        %1389 = vrot.lane.b32.xlu0 %v1375, 24
        %v1390 = vpop.permute.xlu0 %1389
        %v1392 = vsel %vm937, %v1038, %v1382
        %vm1393 = vcmask 130048
        %v1394 = vsel %vm1393, %v1392, %v1386
        %vm1395 = vcmask 195584
        %v1396 = vsel %vm1395, %v1394, %v1390
        %v1397 = vpack.c.bf16 %v1396, %v1396
        %v1398 = vld [vmem:[%s9] sm:$0xf]
        %v1399 = vld [vmem:[%s9 + $0x4] sm:$0xf]
        %v1400 = vld [vmem:[%s9 + $0x8] sm:$0xf]
        %v1401 = vld [vmem:[%s9 + $0xc] sm:$0xf]
        %v1402 = vld [vmem:[%s10] sm:$0x1]
        %v1404 = vlaneseq
        %v1405 = vshrl.u32 %v1404, 7
        %v1406 = vsub.s32 0, %v1405
        %v1407 = vrot.slane %v1402, %v1406
        %v1413 = vunpack.c.l.b16 %v1398
        %v1414 = vunpack.c.l.b16 %v1399
        %v1415 = vunpack.c.l.b16 %v1400
        %v1416 = vunpack.c.l.b16 %v1401
        %v1417 = vpack.c.b16 %v1414, %v1413
        %v1418 = vpack.c.b16 %v1416, %v1415
        %v1422 = vsel %vm831, %v1397, 0
        %1424 = vmatprep.subr.bf16.mxu0 0
        %1425 = vmatpush1.bf16.msra.mxu0 %v1417
        %1426 = vmatprep.subr.bf16.mxu0 0
        %1427 = vmatpush1.bf16.msra.mxu0 %v1418
        %1428 = vmatprep.subr.bf16.mxu0 0
        %1429 = vmatpush1.bf16.msra.mxu0 0
        %1430 = vmatprep.subr.bf16.mxu0 0
        %1431 = vmatpush1.bf16.msra.mxu0 0
        %1432 = vmatprep.subr.bf16.mxu0 0
        %1433 = vmatpush1.bf16.msra.mxu0 0
        %1434 = vmatprep.subr.bf16.mxu0 0
        %1435 = vmatpush1.bf16.msra.mxu0 0
        %1436 = vmatprep.subr.bf16.mxu0 0
        %1437 = vmatpush1.bf16.msra.mxu0 0
        %1438 = vmatprep.subr.bf16.mxu0 0
        %1439 = vmatpush1.bf16.msra.mxu0 0
        %1440 = vmatprep.subr.bf16.mxu0 0
        %1441 = vmatpush1.bf16.msra.mxu0 0
        %1442 = vmatprep.subr.bf16.mxu0 0
        %1443 = vmatpush1.bf16.msra.mxu0 0
        %1444 = vmatprep.subr.bf16.mxu0 0
        %1445 = vmatpush1.bf16.msra.mxu0 0
        %1446 = vmatprep.subr.bf16.mxu0 0
        %1447 = vmatpush1.bf16.msra.mxu0 0
        %1448 = vmatprep.subr.bf16.mxu0 0
        %1449 = vmatpush1.bf16.msra.mxu0 0
        %1450 = vmatprep.subr.bf16.mxu0 0
        %1451 = vmatpush1.bf16.msra.mxu0 0
        %1452 = vmatprep.subr.bf16.mxu0 0
        %1453 = vmatpush1.bf16.msra.mxu0 0
        %1454 = vmatprep.subr.bf16.mxu0 0
        %1455 = vmatpush1.bf16.msra.mxu0 0
        %1456 = vmatprep.mubr.bf16.mxu0 0
        %1457 = vmatmul.mubr.bf16.gmra.mrb[0].mxu0 %v1422
        %v1458 = vpop.f32.mrb[0].mxu0
        %v1459 = vadd.f32 %v1407, %v1458
        %v1460 = vpop.f32.mrb[0].mxu0
        %v1461 = vpop.f32.mrb[0].mxu0
        %v1462 = vpop.f32.mrb[0].mxu0
        %1463 = vdwg.mxu0
        %v1464 = vadd.f32 %v859, %v1459
        %v1465 = vpack.c.bf16 %v1464, %v1464
        %v1466 = vld [vmem:[#allocation15] sm:$0xf]
        %v1467 = vld [vmem:[#allocation15 + $0x4] sm:$0xf]
        %v1468 = vld [vmem:[#allocation15 + $0x8] sm:$0xf]
        %v1469 = vld [vmem:[#allocation15 + $0xc] sm:$0xf]
        %v1470 = vld [vmem:[%s12] sm:$0x1]
        %v1472 = vlaneseq
        %v1473 = vshrl.u32 %v1472, 7
        %v1474 = vsub.s32 0, %v1473
        %v1475 = vrot.slane %v1470, %v1474
        %v1481 = vunpack.c.l.b16 %v1466
        %v1482 = vunpack.c.l.b16 %v1467
        %v1483 = vunpack.c.l.b16 %v1468
        %v1484 = vunpack.c.l.b16 %v1469
        %v1485 = vpack.c.b16 %v1482, %v1481
        %v1486 = vpack.c.b16 %v1484, %v1483
        %v1490 = vsel %vm831, %v1465, 0
        %1492 = vmatprep.subr.bf16.mxu0 0
        %1493 = vmatpush1.bf16.msra.mxu0 %v1485
        %1494 = vmatprep.subr.bf16.mxu0 0
        %1495 = vmatpush1.bf16.msra.mxu0 %v1486
        %1496 = vmatprep.subr.bf16.mxu0 0
        %1497 = vmatpush1.bf16.msra.mxu0 0
        %1498 = vmatprep.subr.bf16.mxu0 0
        %1499 = vmatpush1.bf16.msra.mxu0 0
        %1500 = vmatprep.subr.bf16.mxu0 0
        %1501 = vmatpush1.bf16.msra.mxu0 0
        %1502 = vmatprep.subr.bf16.mxu0 0
        %1503 = vmatpush1.bf16.msra.mxu0 0
        %1504 = vmatprep.subr.bf16.mxu0 0
        %1505 = vmatpush1.bf16.msra.mxu0 0
        %1506 = vmatprep.subr.bf16.mxu0 0
        %1507 = vmatpush1.bf16.msra.mxu0 0
        %1508 = vmatprep.subr.bf16.mxu0 0
        %1509 = vmatpush1.bf16.msra.mxu0 0
        %1510 = vmatprep.subr.bf16.mxu0 0
        %1511 = vmatpush1.bf16.msra.mxu0 0
        %1512 = vmatprep.subr.bf16.mxu0 0
        %1513 = vmatpush1.bf16.msra.mxu0 0
        %1514 = vmatprep.subr.bf16.mxu0 0
        %1515 = vmatpush1.bf16.msra.mxu0 0
        %1516 = vmatprep.subr.bf16.mxu0 0
        %1517 = vmatpush1.bf16.msra.mxu0 0
        %1518 = vmatprep.subr.bf16.mxu0 0
        %1519 = vmatpush1.bf16.msra.mxu0 0
        %1520 = vmatprep.subr.bf16.mxu0 0
        %1521 = vmatpush1.bf16.msra.mxu0 0
        %1522 = vmatprep.subr.bf16.mxu0 0
        %1523 = vmatpush1.bf16.msra.mxu0 0
        %1524 = vmatprep.mubr.bf16.mxu0 0
        %1525 = vmatmul.mubr.bf16.gmra.mrb[0].mxu0 %v1490
        %v1526 = vpop.f32.mrb[0].mxu0
        %v1527 = vadd.f32 %v1475, %v1526
        %v1528 = vpop.f32.mrb[0].mxu0
        %v1529 = vpop.f32.mrb[0].mxu0
        %v1530 = vpop.f32.mrb[0].mxu0
        %1531 = vdwg.mxu0
        %v1532 = vxor.u32 %v1527, 2147483648
        %v1533 = vmul.f32 %v1532, 1.442695
        %v1534 = vpow.pop %v1533
        %v1535 = vadd.f32 %v1534, 1.0
        %v1536 = vrcp.pop %v1535
        %v1537 = vmul.f32 1.0, %v1536
        %v1538 = vmul.f32 %v1527, %v1537
        %v1539 = vpack.c.bf16 %v1538, %v1538
        %v1540 = vld [vmem:[%s13] sm:$0xf]
        %v1541 = vld [vmem:[%s13 + $0x4] sm:$0xf]
        %v1542 = vld [vmem:[%s13 + $0x8] sm:$0xf]
        %v1543 = vld [vmem:[%s13 + $0xc] sm:$0xf]
        %v1544 = vld [vmem:[%s14] sm:$0x1]
        %v1546 = vlaneseq
        %v1547 = vshrl.u32 %v1546, 7
        %v1548 = vsub.s32 0, %v1547
        %v1549 = vrot.slane %v1544, %v1548
        %v1555 = vunpack.c.l.b16 %v1540
        %v1556 = vunpack.c.l.b16 %v1541
        %v1557 = vunpack.c.l.b16 %v1542
        %v1558 = vunpack.c.l.b16 %v1543
        %v1559 = vpack.c.b16 %v1556, %v1555
        %v1560 = vpack.c.b16 %v1558, %v1557
        %v1564 = vsel %vm831, %v1539, 0
        %1566 = vmatprep.subr.bf16.mxu0 0
        %1567 = vmatpush1.bf16.msra.mxu0 %v1559
        %1568 = vmatprep.subr.bf16.mxu0 0
        %1569 = vmatpush1.bf16.msra.mxu0 %v1560
        %1570 = vmatprep.subr.bf16.mxu0 0
        %1571 = vmatpush1.bf16.msra.mxu0 0
        %1572 = vmatprep.subr.bf16.mxu0 0
        %1573 = vmatpush1.bf16.msra.mxu0 0
        %1574 = vmatprep.subr.bf16.mxu0 0
        %1575 = vmatpush1.bf16.msra.mxu0 0
        %1576 = vmatprep.subr.bf16.mxu0 0
        %1577 = vmatpush1.bf16.msra.mxu0 0
        %1578 = vmatprep.subr.bf16.mxu0 0
        %1579 = vmatpush1.bf16.msra.mxu0 0
        %1580 = vmatprep.subr.bf16.mxu0 0
        %1581 = vmatpush1.bf16.msra.mxu0 0
        %1582 = vmatprep.subr.bf16.mxu0 0
        %1583 = vmatpush1.bf16.msra.mxu0 0
        %1584 = vmatprep.subr.bf16.mxu0 0
        %1585 = vmatpush1.bf16.msra.mxu0 0
        %1586 = vmatprep.subr.bf16.mxu0 0
        %1587 = vmatpush1.bf16.msra.mxu0 0
        %1588 = vmatprep.subr.bf16.mxu0 0
        %1589 = vmatpush1.bf16.msra.mxu0 0
        %1590 = vmatprep.subr.bf16.mxu0 0
        %1591 = vmatpush1.bf16.msra.mxu0 0
        %1592 = vmatprep.subr.bf16.mxu0 0
        %1593 = vmatpush1.bf16.msra.mxu0 0
        %1594 = vmatprep.subr.bf16.mxu0 0
        %1595 = vmatpush1.bf16.msra.mxu0 0
        %1596 = vmatprep.subr.bf16.mxu0 0
        %1597 = vmatpush1.bf16.msra.mxu0 0
        %1598 = vmatprep.mubr.bf16.mxu0 0
        %1599 = vmatmul.mubr.bf16.gmra.mrb[0].mxu0 %v1564
        %v1600 = vpop.f32.mrb[0].mxu0
        %v1601 = vadd.f32 %v1549, %v1600
        %v1602 = vpop.f32.mrb[0].mxu0
        %v1603 = vpop.f32.mrb[0].mxu0
        %v1604 = vpop.f32.mrb[0].mxu0
        %1605 = vdwg.mxu0
        %v1606 = vxor.u32 %v1601, 2147483648
        %v1607 = vmul.f32 %v1606, 1.442695
        %v1608 = vpow.pop %v1607
        %v1609 = vadd.f32 %v1608, 1.0
        %v1610 = vrcp.pop %v1609
        %v1611 = vmul.f32 1.0, %v1610
        %v1612 = vmul.f32 %v1601, %v1611
        %v1613 = vpack.c.bf16 %v1612, %v1612
        %v1614 = vld [vmem:[#allocation16] sm:$0xf]
        %v1615 = vld [vmem:[#allocation16 + $0x4] sm:$0xf]
        %v1616 = vld [vmem:[#allocation16 + $0x8] sm:$0xf]
        %v1617 = vld [vmem:[#allocation16 + $0xc] sm:$0xf]
        %v1618 = vld [vmem:[%s16] sm:$0x1]
        %v1620 = vlaneseq
        %v1621 = vshrl.u32 %v1620, 7
        %v1622 = vsub.s32 0, %v1621
        %v1623 = vrot.slane %v1618, %v1622
        %v1629 = vunpack.c.l.b16 %v1614
        %v1630 = vunpack.c.l.b16 %v1615
        %v1631 = vunpack.c.l.b16 %v1616
        %v1632 = vunpack.c.l.b16 %v1617
        %v1633 = vpack.c.b16 %v1630, %v1629
        %v1634 = vpack.c.b16 %v1632, %v1631
        %v1638 = vsel %vm831, %v1613, 0
        %1640 = vmatprep.subr.bf16.mxu0 0
        %1641 = vmatpush1.bf16.msra.mxu0 %v1633
        %1642 = vmatprep.subr.bf16.mxu0 0
        %1643 = vmatpush1.bf16.msra.mxu0 %v1634
        %1644 = vmatprep.subr.bf16.mxu0 0
        %1645 = vmatpush1.bf16.msra.mxu0 0
        %1646 = vmatprep.subr.bf16.mxu0 0
        %1647 = vmatpush1.bf16.msra.mxu0 0
        %1648 = vmatprep.subr.bf16.mxu0 0
        %1649 = vmatpush1.bf16.msra.mxu0 0
        %1650 = vmatprep.subr.bf16.mxu0 0
        %1651 = vmatpush1.bf16.msra.mxu0 0
        %1652 = vmatprep.subr.bf16.mxu0 0
        %1653 = vmatpush1.bf16.msra.mxu0 0
        %1654 = vmatprep.subr.bf16.mxu0 0
        %1655 = vmatpush1.bf16.msra.mxu0 0
        %1656 = vmatprep.subr.bf16.mxu0 0
        %1657 = vmatpush1.bf16.msra.mxu0 0
        %1658 = vmatprep.subr.bf16.mxu0 0
        %1659 = vmatpush1.bf16.msra.mxu0 0
        %1660 = vmatprep.subr.bf16.mxu0 0
        %1661 = vmatpush1.bf16.msra.mxu0 0
        %1662 = vmatprep.subr.bf16.mxu0 0
        %1663 = vmatpush1.bf16.msra.mxu0 0
        %1664 = vmatprep.subr.bf16.mxu0 0
        %1665 = vmatpush1.bf16.msra.mxu0 0
        %1666 = vmatprep.subr.bf16.mxu0 0
        %1667 = vmatpush1.bf16.msra.mxu0 0
        %1668 = vmatprep.subr.bf16.mxu0 0
        %1669 = vmatpush1.bf16.msra.mxu0 0
        %1670 = vmatprep.subr.bf16.mxu0 0
        %1671 = vmatpush1.bf16.msra.mxu0 0
        %1672 = vmatprep.mubr.bf16.mxu0 0
        %1673 = vmatmul.mubr.bf16.gmra.mrb[0].mxu0 %v1638
        %v1674 = vpop.f32.mrb[0].mxu0
        %v1675 = vadd.f32 %v1623, %v1674
        %v1676 = vpop.f32.mrb[0].mxu0
        %v1677 = vpop.f32.mrb[0].mxu0
        %v1678 = vpop.f32.mrb[0].mxu0
        %1679 = vdwg.mxu0
        %v1680 = vld [vmem:[%s713] sm:$0xff]
        %1682 = vset.pattern.permute.xlu0 0
        %1683 = vperm.xlu0 %1682, %v1680
        %v1684 = vpop.permute.xlu0 %1683
        %v1686 = vmul.f32 %v1675, %v1684
        %v1687 = vadd.f32 %v1464, %v1686
        %1688 = vst.msk [vmem:[%s702] sm:$0xff] %vm831, %v1687
        %s1689 = sand.u32 %s434, 1
        %s1690 = scalar_lea.sflag [#allocation6], %s1689
        %s1691 = sand.u32 %s434, 1
        %s1692 = smul.addr %s1691, 8
        %s1693 = scalar_lea.vmem [#allocation18], %s1692
        // Predicated region
        $region125: #{tpu_custom_call.1} parent=87 // pred_check
          %p1694 = pneg %p444
        $region126: #{tpu_custom_call.1} parent=87 // pred_check_branch
          %1696 = sbr.rel (%p1694) target = $region128
        $region127: #{tpu_custom_call.1} parent=87 // pred_region
          %s1698 = ssub.s32 128, 128
          %1699 = vsyncadd %s1690, %s1698
          %s1700 = sadd.s32 %s43, %s42
          %s1701 = smul.addr %s1700, 128
          %s1702 = scalar_lea.hbm %s17, %s1701
          %s1704 = sshll.u32 %s1693, 4
          %s1705 = int_to_ptr.vmem [resolvable:$true] %s1704
          %1707 = dma.vmem_to_hbm [thread:$0]  %s1705, 128, %s1702, %s1690
        $region128: #{tpu_custom_call.1} parent=87 // pred_fallthru
          _
      $region88: #{tpu_custom_call.1} parent=5 // pred_fallthru
        _
      %p1708 = scmp.le.s32.totalorder 2, %s33
      // Predicated region
      $region129: #{tpu_custom_call.1} parent=5 // pred_check
        %p1709 = pneg %p1708
      $region130: #{tpu_custom_call.1} parent=5 // pred_check_branch
        %1711 = sbr.rel (%p1709) target = $region132
      $region131: #{tpu_custom_call.1} parent=5 // pred_region
        %s1712 = ssub.s32 %s33, 2
        // Predicated region
        $region133: #{tpu_custom_call.1} parent=131 // pred_check
          %p1713 = pneg %p450
        $region134: #{tpu_custom_call.1} parent=131 // pred_check_branch
          %1715 = sbr.rel (%p1713) target = $region136
        $region135: #{tpu_custom_call.1} parent=131 // pred_region
          %s1716 = sand.u32 %s435, 1
          %s1717 = scalar_lea.sflag [#allocation6], %s1716
          %s1718 = sand.u32 %s435, 1
          %s1719 = smul.addr %s1718, 8
          %s1720 = scalar_lea.vmem [#allocation18], %s1719
          %1721 = dma.done %s1717, 128
        $region136: #{tpu_custom_call.1} parent=131 // pred_fallthru
          _
      $region132: #{tpu_custom_call.1} parent=5 // pred_fallthru
        _
    $region6: #{tpu_custom_call.1} parent=1 // loop_footer
      %s37 = sadd.s32 1, %s33
    $region7: #{tpu_custom_call.1} parent=1 // loop_footer_branch
      %32 = sbr.rel target = $region3
    $region8: #{tpu_custom_call.1} parent=1 // loop_exit
      _
    %1722 = vsyncpa [#allocation5], 1
    %s1723 = scalar_lea.sflag [#allocation5], 1
    %1724 = vsyncpa %s1723, 1
    %1725 = vsyncpa [#allocation8], 1
    %1726 = vsyncpa [#allocation11], 1
    %1727 = vsyncpa [#allocation14], 1
    %1728 = vsyncpa [#allocation17], 1
    %1729 = vsyncpa [#allocation6], 1
    %s1730 = scalar_lea.sflag [#allocation6], 1
    %1731 = vsyncpa %s1730, 1

// kernel: tpu_custom_call.1
$region0: #{tpu_custom_call.1}
  #allocation0 [shape = 'u32[]', space=smem, size = 0x4, offset = 0x4, fixed_abs, tag = 'smem constant byte address 0x4 - core index']
  #allocation1 [shape = 'u32[144,128]{1,0:T(1,128)}', space=vmem, size = 0x12000, scoped, tag = 'internal scratch']
  #allocation2 [shape = 'bf16[8,32]{1,0:T(8,128)(2,1)}', space=vmem, size = 0x800, scoped, tag = 'scratch operand']
  #allocation3 [shape = 'bf16[8,32]{1,0:T(8,128)(2,1)}', space=vmem, size = 0x800, scoped, tag = 'scratch operand']
  %s0 = inlined_call_operand.vmem [shape: f32[2,8,32], index: 0, kind: input, shape index: {}]
  %s1 = inlined_call_operand.hbm [shape: f32[2,1,8], index: 1, kind: input, shape index: {}]
  %s2 = inlined_call_operand.vmem [shape: f32[2,8,1], index: 2, kind: input, shape index: {}]
  %s3 = inlined_call_operand.hbm [shape: f32[1,32], index: 3, kind: input, shape index: {}]
  %s4 = inlined_call_operand.hbm [shape: f32[1,32], index: 4, kind: input, shape index: {}]
  %s5 = inlined_call_operand.vmem [shape: bf16[32,32], index: 5, kind: input, shape index: {}]
  %s6 = inlined_call_operand.hbm [shape: f32[1,32], index: 6, kind: input, shape index: {}]
  %s7 = inlined_call_operand.hbm [shape: bf16[32,64], index: 7, kind: input, shape index: {}]
  %s8 = inlined_call_operand.hbm [shape: f32[1,64], index: 8, kind: input, shape index: {}]
  %s9 = inlined_call_operand.vmem [shape: bf16[32,32], index: 9, kind: input, shape index: {}]
  %s10 = inlined_call_operand.vmem [shape: f32[1,32], index: 10, kind: input, shape index: {}]
  %s11 = inlined_call_operand.hbm [shape: bf16[32,32], index: 11, kind: input, shape index: {}]
  %s12 = inlined_call_operand.vmem [shape: f32[1,32], index: 12, kind: input, shape index: {}]
  %s13 = inlined_call_operand.vmem [shape: bf16[32,32], index: 13, kind: input, shape index: {}]
  %s14 = inlined_call_operand.vmem [shape: f32[1,32], index: 14, kind: input, shape index: {}]
  %s15 = inlined_call_operand.hbm [shape: bf16[32,32], index: 15, kind: input, shape index: {}]
  %s16 = inlined_call_operand.vmem [shape: f32[1,32], index: 16, kind: input, shape index: {}]
  %s17 = inlined_call_operand.hbm [shape: f32[2,8,32], index: 17, kind: output, shape index: {}]
  %s18 = sld [smem:[#allocation0]]
  $region137: #{tpu_custom_call.1} parent=0
    _
  %s20 = ssub.s32 1, %s18
  %s21 = scalar_select 0, %s20, %s18
  $region1: #{tpu_custom_call.1} parent=0
    #allocation4 [shape = 'u8[1024]{0}', space=vmem, size = 0x400, scoped, tag = 'input window, operand 1']
    #allocation5 [shape = 's32[2]{0}', space=sflag, size = 0x8, scoped, tag = 'scoped memory for tpu_custom_call.1']
    #allocation6 [shape = 's32[2]{0}', space=sflag, size = 0x8, scoped, tag = 'scoped memory for tpu_custom_call.1']
    #allocation7 [shape = 'u8[512]{0}', space=vmem, size = 0x400, scoped, tag = 'input window, operand 3, single buffered']
    #allocation8 [shape = 's32[1]{0}', space=sflag, size = 0x4, scoped, tag = 'scoped memory for tpu_custom_call.1']
    #allocation9 [shape = 'u8[512]{0}', space=vmem, size = 0x400, scoped, tag = 'input window, operand 4, single buffered']
    #allocation10 [shape = 'u8[512]{0}', space=vmem, size = 0x400, scoped, tag = 'input window, operand 6, single buffered']
    #allocation11 [shape = 's32[1]{0}', space=sflag, size = 0x4, scoped, tag = 'scoped memory for tpu_custom_call.1']
    #allocation12 [shape = 'u8[8192]{0}', space=vmem, size = 0x2000, scoped, tag = 'input window, operand 7, single buffered']
    #allocation13 [shape = 'u8[512]{0}', space=vmem, size = 0x400, scoped, tag = 'input window, operand 8, single buffered']
    #allocation14 [shape = 's32[1]{0}', space=sflag, size = 0x4, scoped, tag = 'scoped memory for tpu_custom_call.1']
    #allocation15 [shape = 'u8[8192]{0}', space=vmem, size = 0x2000, scoped, tag = 'input window, operand 11, single buffered']
    #allocation16 [shape = 'u8[8192]{0}', space=vmem, size = 0x2000, scoped, tag = 'input window, operand 15, single buffered']
    #allocation17 [shape = 's32[1]{0}', space=sflag, size = 0x4, scoped, tag = 'scoped memory for tpu_custom_call.1']
    #allocation18 [shape = 'u8[8192]{0}', space=vmem, size = 0x2000, scoped, tag = 'output window, operand 0']
    %22 = vsyncpa [#allocation5], 0
    %s23 = scalar_lea.sflag [#allocation5], 1
    %24 = vsyncpa %s23, 0
    %25 = vsyncpa [#allocation8], 0
    %26 = vsyncpa [#allocation11], 0
    %27 = vsyncpa [#allocation14], 0
    %28 = vsyncpa [#allocation17], 0
    %29 = vsyncpa [#allocation6], 0
    %s30 = scalar_lea.sflag [#allocation6], 1
    %31 = vsyncpa %s30, 0
    loop: start=0, step=1, limit=4
    $region2: #{tpu_custom_call.1} parent=1 // loop_pre_header
      _
    $region3: #{tpu_custom_call.1} parent=1 // loop_header
      %s33 = sphi 0, %s37
      %p34 = scmp.ge.s32.totalorder %s33, 4
      %s40 = sphi 0, %s52
      %s41 = sphi 0, %s48
      %s42 = sphi 0, %s40
      %s43 = sphi 0, %s41
      %s44 = sphi 0, %s42
      %s45 = sphi 0, %s43
      %s55 = sphi 0, %s57
      %s58 = sphi 0, %s55
      %s59 = sphi 0, %s58
      %s75 = sphi 0, %s59
      %s81 = sphi 0, %s83
      %s84 = sphi 0, %s81
      %s85 = sphi 0, %s84
      %s101 = sphi 0, %s85
      %s109 = sphi 0, %s111
      %s112 = sphi 0, %s109
      %s113 = sphi 0, %s112
      %s129 = sphi 0, %s113
      %s133 = sphi 0, %s133
      %s135 = sphi 0, %s133
      %s136 = sphi 0, %s135
      %s150 = sphi 0, %s136
      %s154 = sphi 0, %s154
      %s156 = sphi 0, %s154
      %s157 = sphi 0, %s156
      %s171 = sphi 0, %s157
      %s175 = sphi 0, %s175
      %s177 = sphi 0, %s175
      %s178 = sphi 0, %s177
      %s192 = sphi 0, %s178
      %s196 = sphi 0, %s196
      %s198 = sphi 0, %s196
      %s199 = sphi 0, %s198
      %s213 = sphi 0, %s199
      %s217 = sphi 0, %s217
      %s219 = sphi 0, %s217
      %s220 = sphi 0, %s219
      %s234 = sphi 0, %s220
      %s238 = sphi 0, %s238
      %s240 = sphi 0, %s238
      %s241 = sphi 0, %s240
      %s255 = sphi 0, %s241
      %s259 = sphi 0, %s259
      %s261 = sphi 0, %s259
      %s262 = sphi 0, %s261
      %s276 = sphi 0, %s262
      %s280 = sphi 0, %s280
      %s282 = sphi 0, %s280
      %s283 = sphi 0, %s282
      %s297 = sphi 0, %s283
      %s301 = sphi 0, %s301
      %s303 = sphi 0, %s301
      %s304 = sphi 0, %s303
      %s318 = sphi 0, %s304
      %s322 = sphi 0, %s322
      %s324 = sphi 0, %s322
      %s325 = sphi 0, %s324
      %s339 = sphi 0, %s325
      %s343 = sphi 0, %s343
      %s345 = sphi 0, %s343
      %s346 = sphi 0, %s345
      %s360 = sphi 0, %s346
      %s364 = sphi 0, %s364
      %s366 = sphi 0, %s364
      %s367 = sphi 0, %s366
      %s381 = sphi 0, %s367
      %s385 = sphi 0, %s385
      %s387 = sphi 0, %s385
      %s388 = sphi 0, %s387
      %s402 = sphi 0, %s388
      %s406 = sphi 0, %s406
      %s408 = sphi 0, %s406
      %s409 = sphi 0, %s408
      %s423 = sphi 0, %s409
      %s431 = sphi 0, %s433
      %s434 = sphi 0, %s431
      %s435 = sphi 0, %s434
      %s451 = sphi 0, %s435
    $region4: #{tpu_custom_call.1} parent=1 // loop_header_branch
      %36 = sbr.rel (%p34) target = $region8
    $region5: #{tpu_custom_call.1} parent=1 // loop_body
      %s38 = ssub.s32 %s33, 1
      %s39 = ssub.s32 %s33, 2
      %s46 = sadd.s32 1, %s41
      %p47 = scmp.ge.s32.totalorder %s46, 1
      %s48 = scalar_select %p47, 0, %s46
      %s49 = sadd.s32 1, %s40
      %s50 = scalar_select %p47, %s49, %s40
      %p51 = scmp.ge.s32.totalorder %s50, 2
      %s52 = scalar_select %p51, 0, %s50
      %s53 = ssub.s32 %s40, %s52
      %p54 = scmp.eq.s32.totalorder %s53, 0
      %s56 = sadd.s32 %s55, 1
      %s57 = scalar_select %p54, %s55, %s56
      %p60 = pneg %p54
      %p61 = scmp.eq.s32.totalorder %s33, 1
      %p62 = por %p60, %p61
      %p63 = scmp.ne.s32.totalorder %s55, %s58
      %p64 = scmp.eq.s32.totalorder %s33, 0
      %p65 = por %p63, %p64
      %p66 = scmp.ne.s32.totalorder %s55, %s58
      %p67 = scmp.eq.s32.totalorder %s38, 1
      %p68 = por %p66, %p67
      %p69 = scmp.ne.s32.totalorder %s58, %s59
      %p70 = scmp.eq.s32.totalorder %s38, 0
      %p71 = por %p69, %p70
      %p72 = scmp.ne.s32.totalorder %s58, %s59
      %p73 = scmp.eq.s32.totalorder %s39, 1
      %p74 = por %p72, %p73
      %p76 = scmp.ne.s32.totalorder %s59, %s75
      %p77 = scmp.eq.s32.totalorder %s39, 0
      %p78 = por %p76, %p77
      %s79 = ssub.s32 %s40, %s52
      %p80 = scmp.eq.s32.totalorder %s79, 0
      %s82 = sadd.s32 %s81, 1
      %s83 = scalar_select %p80, %s81, %s82
      %p86 = pneg %p80
      %p87 = scmp.eq.s32.totalorder %s33, 1
      %p88 = por %p86, %p87
      %p89 = scmp.ne.s32.totalorder %s81, %s84
      %p90 = scmp.eq.s32.totalorder %s33, 0
      %p91 = por %p89, %p90
      %p92 = scmp.ne.s32.totalorder %s81, %s84
      %p93 = scmp.eq.s32.totalorder %s38, 1
      %p94 = por %p92, %p93
      %p95 = scmp.ne.s32.totalorder %s84, %s85
      %p96 = scmp.eq.s32.totalorder %s38, 0
      %p97 = por %p95, %p96
      %p98 = scmp.ne.s32.totalorder %s84, %s85
      %p99 = scmp.eq.s32.totalorder %s39, 1
      %p100 = por %p98, %p99
      %p102 = scmp.ne.s32.totalorder %s85, %s101
      %p103 = scmp.eq.s32.totalorder %s39, 0
      %p104 = por %p102, %p103
      %s105 = ssub.s32 %s40, %s52
      %s106 = ssub.s32 %s41, %s48
      %s107 = sor.u32 %s105, %s106
      %p108 = scmp.eq.s32.totalorder %s107, 0
      %s110 = sadd.s32 %s109, 1
      %s111 = scalar_select %p108, %s109, %s110
      %p114 = pneg %p108
      %p115 = scmp.eq.s32.totalorder %s33, 1
      %p116 = por %p114, %p115
      %p117 = scmp.ne.s32.totalorder %s109, %s112
      %p118 = scmp.eq.s32.totalorder %s33, 0
      %p119 = por %p117, %p118
      %p120 = scmp.ne.s32.totalorder %s109, %s112
      %p121 = scmp.eq.s32.totalorder %s38, 1
      %p122 = por %p120, %p121
      %p123 = scmp.ne.s32.totalorder %s112, %s113
      %p124 = scmp.eq.s32.totalorder %s38, 0
      %p125 = por %p123, %p124
      %p126 = scmp.ne.s32.totalorder %s112, %s113
      %p127 = scmp.eq.s32.totalorder %s39, 1
      %p128 = por %p126, %p127
      %p130 = scmp.ne.s32.totalorder %s113, %s129
      %p131 = scmp.eq.s32.totalorder %s39, 0
      %p132 = por %p130, %p131
      %s134 = sadd.s32 %s133, 1
      %p137 = scmp.eq.s32.totalorder %s33, 1
      %p138 = scmp.ne.s32.totalorder %s133, %s135
      %p139 = scmp.eq.s32.totalorder %s33, 0
      %p140 = por %p138, %p139
      %p141 = scmp.ne.s32.totalorder %s133, %s135
      %p142 = scmp.eq.s32.totalorder %s38, 1
      %p143 = por %p141, %p142
      %p144 = scmp.ne.s32.totalorder %s135, %s136
      %p145 = scmp.eq.s32.totalorder %s38, 0
      %p146 = por %p144, %p145
      %p147 = scmp.ne.s32.totalorder %s135, %s136
      %p148 = scmp.eq.s32.totalorder %s39, 1
      %p149 = por %p147, %p148
      %p151 = scmp.ne.s32.totalorder %s136, %s150
      %p152 = scmp.eq.s32.totalorder %s39, 0
      %p153 = por %p151, %p152
      %s155 = sadd.s32 %s154, 1
      %p158 = scmp.eq.s32.totalorder %s33, 1
      %p159 = scmp.ne.s32.totalorder %s154, %s156
      %p160 = scmp.eq.s32.totalorder %s33, 0
      %p161 = por %p159, %p160
      %p162 = scmp.ne.s32.totalorder %s154, %s156
      %p163 = scmp.eq.s32.totalorder %s38, 1
      %p164 = por %p162, %p163
      %p165 = scmp.ne.s32.totalorder %s156, %s157
      %p166 = scmp.eq.s32.totalorder %s38, 0
      %p167 = por %p165, %p166
      %p168 = scmp.ne.s32.totalorder %s156, %s157
      %p169 = scmp.eq.s32.totalorder %s39, 1
      %p170 = por %p168, %p169
      %p172 = scmp.ne.s32.totalorder %s157, %s171
      %p173 = scmp.eq.s32.totalorder %s39, 0
      %p174 = por %p172, %p173
      %s176 = sadd.s32 %s175, 1
      %p179 = scmp.eq.s32.totalorder %s33, 1
      %p180 = scmp.ne.s32.totalorder %s175, %s177
      %p181 = scmp.eq.s32.totalorder %s33, 0
      %p182 = por %p180, %p181
      %p183 = scmp.ne.s32.totalorder %s175, %s177
      %p184 = scmp.eq.s32.totalorder %s38, 1
      %p185 = por %p183, %p184
      %p186 = scmp.ne.s32.totalorder %s177, %s178
      %p187 = scmp.eq.s32.totalorder %s38, 0
      %p188 = por %p186, %p187
      %p189 = scmp.ne.s32.totalorder %s177, %s178
      %p190 = scmp.eq.s32.totalorder %s39, 1
      %p191 = por %p189, %p190
      %p193 = scmp.ne.s32.totalorder %s178, %s192
      %p194 = scmp.eq.s32.totalorder %s39, 0
      %p195 = por %p193, %p194
      %s197 = sadd.s32 %s196, 1
      %p200 = scmp.eq.s32.totalorder %s33, 1
      %p201 = scmp.ne.s32.totalorder %s196, %s198
      %p202 = scmp.eq.s32.totalorder %s33, 0
      %p203 = por %p201, %p202
      %p204 = scmp.ne.s32.totalorder %s196, %s198
      %p205 = scmp.eq.s32.totalorder %s38, 1
      %p206 = por %p204, %p205
      %p207 = scmp.ne.s32.totalorder %s198, %s199
      %p208 = scmp.eq.s32.totalorder %s38, 0
      %p209 = por %p207, %p208
      %p210 = scmp.ne.s32.totalorder %s198, %s199
      %p211 = scmp.eq.s32.totalorder %s39, 1
      %p212 = por %p210, %p211
      %p214 = scmp.ne.s32.totalorder %s199, %s213
      %p215 = scmp.eq.s32.totalorder %s39, 0
      %p216 = por %p214, %p215
      %s218 = sadd.s32 %s217, 1
      %p221 = scmp.eq.s32.totalorder %s33, 1
      %p222 = scmp.ne.s32.totalorder %s217, %s219
      %p223 = scmp.eq.s32.totalorder %s33, 0
      %p224 = por %p222, %p223
      %p225 = scmp.ne.s32.totalorder %s217, %s219
      %p226 = scmp.eq.s32.totalorder %s38, 1
      %p227 = por %p225, %p226
      %p228 = scmp.ne.s32.totalorder %s219, %s220
      %p229 = scmp.eq.s32.totalorder %s38, 0
      %p230 = por %p228, %p229
      %p231 = scmp.ne.s32.totalorder %s219, %s220
      %p232 = scmp.eq.s32.totalorder %s39, 1
      %p233 = por %p231, %p232
      %p235 = scmp.ne.s32.totalorder %s220, %s234
      %p236 = scmp.eq.s32.totalorder %s39, 0
      %p237 = por %p235, %p236
      %s239 = sadd.s32 %s238, 1
      %p242 = scmp.eq.s32.totalorder %s33, 1
      %p243 = scmp.ne.s32.totalorder %s238, %s240
      %p244 = scmp.eq.s32.totalorder %s33, 0
      %p245 = por %p243, %p244
      %p246 = scmp.ne.s32.totalorder %s238, %s240
      %p247 = scmp.eq.s32.totalorder %s38, 1
      %p248 = por %p246, %p247
      %p249 = scmp.ne.s32.totalorder %s240, %s241
      %p250 = scmp.eq.s32.totalorder %s38, 0
      %p251 = por %p249, %p250
      %p252 = scmp.ne.s32.totalorder %s240, %s241
      %p253 = scmp.eq.s32.totalorder %s39, 1
      %p254 = por %p252, %p253
      %p256 = scmp.ne.s32.totalorder %s241, %s255
      %p257 = scmp.eq.s32.totalorder %s39, 0
      %p258 = por %p256, %p257
      %s260 = sadd.s32 %s259, 1
      %p263 = scmp.eq.s32.totalorder %s33, 1
      %p264 = scmp.ne.s32.totalorder %s259, %s261
      %p265 = scmp.eq.s32.totalorder %s33, 0
      %p266 = por %p264, %p265
      %p267 = scmp.ne.s32.totalorder %s259, %s261
      %p268 = scmp.eq.s32.totalorder %s38, 1
      %p269 = por %p267, %p268
      %p270 = scmp.ne.s32.totalorder %s261, %s262
      %p271 = scmp.eq.s32.totalorder %s38, 0
      %p272 = por %p270, %p271
      %p273 = scmp.ne.s32.totalorder %s261, %s262
      %p274 = scmp.eq.s32.totalorder %s39, 1
      %p275 = por %p273, %p274
      %p277 = scmp.ne.s32.totalorder %s262, %s276
      %p278 = scmp.eq.s32.totalorder %s39, 0
      %p279 = por %p277, %p278
      %s281 = sadd.s32 %s280, 1
      %p284 = scmp.eq.s32.totalorder %s33, 1
      %p285 = scmp.ne.s32.totalorder %s280, %s282
      %p286 = scmp.eq.s32.totalorder %s33, 0
      %p287 = por %p285, %p286
      %p288 = scmp.ne.s32.totalorder %s280, %s282
      %p289 = scmp.eq.s32.totalorder %s38, 1
      %p290 = por %p288, %p289
      %p291 = scmp.ne.s32.totalorder %s282, %s283
      %p292 = scmp.eq.s32.totalorder %s38, 0
      %p293 = por %p291, %p292
      %p294 = scmp.ne.s32.totalorder %s282, %s283
      %p295 = scmp.eq.s32.totalorder %s39, 1
      %p296 = por %p294, %p295
      %p298 = scmp.ne.s32.totalorder %s283, %s297
      %p299 = scmp.eq.s32.totalorder %s39, 0
      %p300 = por %p298, %p299
      %s302 = sadd.s32 %s301, 1
      %p305 = scmp.eq.s32.totalorder %s33, 1
      %p306 = scmp.ne.s32.totalorder %s301, %s303
      %p307 = scmp.eq.s32.totalorder %s33, 0
      %p308 = por %p306, %p307
      %p309 = scmp.ne.s32.totalorder %s301, %s303
      %p310 = scmp.eq.s32.totalorder %s38, 1
      %p311 = por %p309, %p310
      %p312 = scmp.ne.s32.totalorder %s303, %s304
      %p313 = scmp.eq.s32.totalorder %s38, 0
      %p314 = por %p312, %p313
      %p315 = scmp.ne.s32.totalorder %s303, %s304
      %p316 = scmp.eq.s32.totalorder %s39, 1
      %p317 = por %p315, %p316
      %p319 = scmp.ne.s32.totalorder %s304, %s318
      %p320 = scmp.eq.s32.totalorder %s39, 0
      %p321 = por %p319, %p320
      %s323 = sadd.s32 %s322, 1
      %p326 = scmp.eq.s32.totalorder %s33, 1
      %p327 = scmp.ne.s32.totalorder %s322, %s324
      %p328 = scmp.eq.s32.totalorder %s33, 0
      %p329 = por %p327, %p328
      %p330 = scmp.ne.s32.totalorder %s322, %s324
      %p331 = scmp.eq.s32.totalorder %s38, 1
      %p332 = por %p330, %p331
      %p333 = scmp.ne.s32.totalorder %s324, %s325
      %p334 = scmp.eq.s32.totalorder %s38, 0
      %p335 = por %p333, %p334
      %p336 = scmp.ne.s32.totalorder %s324, %s325
      %p337 = scmp.eq.s32.totalorder %s39, 1
      %p338 = por %p336, %p337
      %p340 = scmp.ne.s32.totalorder %s325, %s339
      %p341 = scmp.eq.s32.totalorder %s39, 0
      %p342 = por %p340, %p341
      %s344 = sadd.s32 %s343, 1
      %p347 = scmp.eq.s32.totalorder %s33, 1
      %p348 = scmp.ne.s32.totalorder %s343, %s345
      %p349 = scmp.eq.s32.totalorder %s33, 0
      %p350 = por %p348, %p349
      %p351 = scmp.ne.s32.totalorder %s343, %s345
      %p352 = scmp.eq.s32.totalorder %s38, 1
      %p353 = por %p351, %p352
      %p354 = scmp.ne.s32.totalorder %s345, %s346
      %p355 = scmp.eq.s32.totalorder %s38, 0
      %p356 = por %p354, %p355
      %p357 = scmp.ne.s32.totalorder %s345, %s346
      %p358 = scmp.eq.s32.totalorder %s39, 1
      %p359 = por %p357, %p358
      %p361 = scmp.ne.s32.totalorder %s346, %s360
      %p362 = scmp.eq.s32.totalorder %s39, 0
      %p363 = por %p361, %p362
      %s365 = sadd.s32 %s364, 1
      %p368 = scmp.eq.s32.totalorder %s33, 1
      %p369 = scmp.ne.s32.totalorder %s364, %s366
      %p370 = scmp.eq.s32.totalorder %s33, 0
      %p371 = por %p369, %p370
      %p372 = scmp.ne.s32.totalorder %s364, %s366
      %p373 = scmp.eq.s32.totalorder %s38, 1
      %p374 = por %p372, %p373
      %p375 = scmp.ne.s32.totalorder %s366, %s367
      %p376 = scmp.eq.s32.totalorder %s38, 0
      %p377 = por %p375, %p376
      %p378 = scmp.ne.s32.totalorder %s366, %s367
      %p379 = scmp.eq.s32.totalorder %s39, 1
      %p380 = por %p378, %p379
      %p382 = scmp.ne.s32.totalorder %s367, %s381
      %p383 = scmp.eq.s32.totalorder %s39, 0
      %p384 = por %p382, %p383
      %s386 = sadd.s32 %s385, 1
      %p389 = scmp.eq.s32.totalorder %s33, 1
      %p390 = scmp.ne.s32.totalorder %s385, %s387
      %p391 = scmp.eq.s32.totalorder %s33, 0
      %p392 = por %p390, %p391
      %p393 = scmp.ne.s32.totalorder %s385, %s387
      %p394 = scmp.eq.s32.totalorder %s38, 1
      %p395 = por %p393, %p394
      %p396 = scmp.ne.s32.totalorder %s387, %s388
      %p397 = scmp.eq.s32.totalorder %s38, 0
      %p398 = por %p396, %p397
      %p399 = scmp.ne.s32.totalorder %s387, %s388
      %p400 = scmp.eq.s32.totalorder %s39, 1
      %p401 = por %p399, %p400
      %p403 = scmp.ne.s32.totalorder %s388, %s402
      %p404 = scmp.eq.s32.totalorder %s39, 0
      %p405 = por %p403, %p404
      %s407 = sadd.s32 %s406, 1
      %p410 = scmp.eq.s32.totalorder %s33, 1
      %p411 = scmp.ne.s32.totalorder %s406, %s408
      %p412 = scmp.eq.s32.totalorder %s33, 0
      %p413 = por %p411, %p412
      %p414 = scmp.ne.s32.totalorder %s406, %s408
      %p415 = scmp.eq.s32.totalorder %s38, 1
      %p416 = por %p414, %p415
      %p417 = scmp.ne.s32.totalorder %s408, %s409
      %p418 = scmp.eq.s32.totalorder %s38, 0
      %p419 = por %p417, %p418
      %p420 = scmp.ne.s32.totalorder %s408, %s409
      %p421 = scmp.eq.s32.totalorder %s39, 1
      %p422 = por %p420, %p421
      %p424 = scmp.ne.s32.totalorder %s409, %s423
      %p425 = scmp.eq.s32.totalorder %s39, 0
      %p426 = por %p424, %p425
      %s427 = ssub.s32 %s40, %s52
      %s428 = ssub.s32 %s41, %s48
      %s429 = sor.u32 %s427, %s428
      %p430 = scmp.eq.s32.totalorder %s429, 0
      %s432 = sadd.s32 %s431, 1
      %s433 = scalar_select %p430, %s431, %s432
      %p436 = pneg %p430
      %p437 = scmp.eq.s32.totalorder %s33, 1
      %p438 = por %p436, %p437
      %p439 = scmp.ne.s32.totalorder %s431, %s434
      %p440 = scmp.eq.s32.totalorder %s33, 0
      %p441 = por %p439, %p440
      %p442 = scmp.ne.s32.totalorder %s431, %s434
      %p443 = scmp.eq.s32.totalorder %s38, 1
      %p444 = por %p442, %p443
      %p445 = scmp.ne.s32.totalorder %s434, %s435
      %p446 = scmp.eq.s32.totalorder %s38, 0
      %p447 = por %p445, %p446
      %p448 = scmp.ne.s32.totalorder %s434, %s435
      %p449 = scmp.eq.s32.totalorder %s39, 1
      %p450 = por %p448, %p449
      %p452 = scmp.ne.s32.totalorder %s435, %s451
      %p453 = scmp.eq.s32.totalorder %s39, 0
      %p454 = por %p452, %p453
      %p455 = scmp.le.s32.totalorder 1, %s33
      %p456 = scmp.lt.s32.totalorder %s33, 3
      %p457 = pnand %p455, %p456
      %p458 = pneg %p457
      // Predicated region
      $region9: #{tpu_custom_call.1} parent=5 // pred_check
        _
      $region10: #{tpu_custom_call.1} parent=5 // pred_check_branch
        %460 = sbr.rel (%p457) target = $region12
      $region11: #{tpu_custom_call.1} parent=5 // pred_region
        %s461 = ssub.s32 %s33, 1
        // Predicated region
        $region13: #{tpu_custom_call.1} parent=11 // pred_check
          %p462 = pneg %p146
        $region14: #{tpu_custom_call.1} parent=11 // pred_check_branch
          %464 = sbr.rel (%p462) target = $region16
        $region15: #{tpu_custom_call.1} parent=11 // pred_region
          %s466 = ssub.s32 16, 16
          %467 = vsyncadd [#allocation8], %s466
          %s469 = sshll.u32 [#allocation7], 4
          %s470 = int_to_ptr.vmem [resolvable:$true] %s469
          %472 = dma.hbm_to_vmem [thread:$0]  %s3, 16, %s470, [#allocation8]
        $region16: #{tpu_custom_call.1} parent=11 // pred_fallthru
          _
        // Predicated region
        $region17: #{tpu_custom_call.1} parent=11 // pred_check
          %p473 = pneg %p167
        $region18: #{tpu_custom_call.1} parent=11 // pred_check_branch
          %475 = sbr.rel (%p473) target = $region20
        $region19: #{tpu_custom_call.1} parent=11 // pred_region
          %s477 = ssub.s32 16, 16
          %478 = vsyncadd [#allocation8], %s477
          %s480 = sshll.u32 [#allocation9], 4
          %s481 = int_to_ptr.vmem [resolvable:$true] %s480
          %483 = dma.hbm_to_vmem [thread:$0]  %s4, 16, %s481, [#allocation8]
        $region20: #{tpu_custom_call.1} parent=11 // pred_fallthru
          _
        // Predicated region
        $region21: #{tpu_custom_call.1} parent=11 // pred_check
          %p484 = pneg %p188
        $region22: #{tpu_custom_call.1} parent=11 // pred_check_branch
          %486 = sbr.rel (%p484) target = $region24
        $region23: #{tpu_custom_call.1} parent=11 // pred_region
          _
        $region24: #{tpu_custom_call.1} parent=11 // pred_fallthru
          _
        // Predicated region
        $region25: #{tpu_custom_call.1} parent=11 // pred_check
          %p487 = pneg %p209
        $region26: #{tpu_custom_call.1} parent=11 // pred_check_branch
          %489 = sbr.rel (%p487) target = $region28
        $region27: #{tpu_custom_call.1} parent=11 // pred_region
          %s491 = ssub.s32 16, 16
          %492 = vsyncadd [#allocation11], %s491
          %s494 = sshll.u32 [#allocation10], 4
          %s495 = int_to_ptr.vmem [resolvable:$true] %s494
          %497 = dma.hbm_to_vmem [thread:$0]  %s6, 16, %s495, [#allocation11]
        $region28: #{tpu_custom_call.1} parent=11 // pred_fallthru
          _
        // Predicated region
        $region29: #{tpu_custom_call.1} parent=11 // pred_check
          %p498 = pneg %p230
        $region30: #{tpu_custom_call.1} parent=11 // pred_check_branch
          %500 = sbr.rel (%p498) target = $region32
        $region31: #{tpu_custom_call.1} parent=11 // pred_region
          %s502 = ssub.s32 256, 256
          %503 = vsyncadd [#allocation11], %s502
          %s504 = sshll.u32 [#allocation12], 4
          %s505 = int_to_ptr.vmem [resolvable:$true] %s504
          %510 = dma.hbm_to_vmem [thread:$0]  %s7, 256, %s505, [#allocation11], 64, 64, 4
        $region32: #{tpu_custom_call.1} parent=11 // pred_fallthru
          _
        // Predicated region
        $region33: #{tpu_custom_call.1} parent=11 // pred_check
          %p511 = pneg %p251
        $region34: #{tpu_custom_call.1} parent=11 // pred_check_branch
          %513 = sbr.rel (%p511) target = $region36
        $region35: #{tpu_custom_call.1} parent=11 // pred_region
          %s515 = ssub.s32 16, 16
          %516 = vsyncadd [#allocation14], %s515
          %s518 = sshll.u32 [#allocation13], 4
          %s519 = int_to_ptr.vmem [resolvable:$true] %s518
          %521 = dma.hbm_to_vmem [thread:$0]  %s8, 16, %s519, [#allocation14]
        $region36: #{tpu_custom_call.1} parent=11 // pred_fallthru
          _
        // Predicated region
        $region37: #{tpu_custom_call.1} parent=11 // pred_check
          %p522 = pneg %p272
        $region38: #{tpu_custom_call.1} parent=11 // pred_check_branch
          %524 = sbr.rel (%p522) target = $region40
        $region39: #{tpu_custom_call.1} parent=11 // pred_region
          _
        $region40: #{tpu_custom_call.1} parent=11 // pred_fallthru
          _
        // Predicated region
        $region41: #{tpu_custom_call.1} parent=11 // pred_check
          %p525 = pneg %p293
        $region42: #{tpu_custom_call.1} parent=11 // pred_check_branch
          %527 = sbr.rel (%p525) target = $region44
        $region43: #{tpu_custom_call.1} parent=11 // pred_region
          _
        $region44: #{tpu_custom_call.1} parent=11 // pred_fallthru
          _
        // Predicated region
        $region45: #{tpu_custom_call.1} parent=11 // pred_check
          %p528 = pneg %p314
        $region46: #{tpu_custom_call.1} parent=11 // pred_check_branch
          %530 = sbr.rel (%p528) target = $region48
        $region47: #{tpu_custom_call.1} parent=11 // pred_region
          %s532 = ssub.s32 256, 256
          %533 = vsyncadd [#allocation14], %s532
          %s534 = sshll.u32 [#allocation15], 4
          %s535 = int_to_ptr.vmem [resolvable:$true] %s534
          %540 = dma.hbm_to_vmem [thread:$0]  %s11, 256, %s535, [#allocation14], 64, 64, 4
        $region48: #{tpu_custom_call.1} parent=11 // pred_fallthru
          _
        // Predicated region
        $region49: #{tpu_custom_call.1} parent=11 // pred_check
          %p541 = pneg %p335
        $region50: #{tpu_custom_call.1} parent=11 // pred_check_branch
          %543 = sbr.rel (%p541) target = $region52
        $region51: #{tpu_custom_call.1} parent=11 // pred_region
          _
        $region52: #{tpu_custom_call.1} parent=11 // pred_fallthru
          _
        // Predicated region
        $region53: #{tpu_custom_call.1} parent=11 // pred_check
          %p544 = pneg %p356
        $region54: #{tpu_custom_call.1} parent=11 // pred_check_branch
          %546 = sbr.rel (%p544) target = $region56
        $region55: #{tpu_custom_call.1} parent=11 // pred_region
          _
        $region56: #{tpu_custom_call.1} parent=11 // pred_fallthru
          _
        // Predicated region
        $region57: #{tpu_custom_call.1} parent=11 // pred_check
          %p547 = pneg %p377
        $region58: #{tpu_custom_call.1} parent=11 // pred_check_branch
          %549 = sbr.rel (%p547) target = $region60
        $region59: #{tpu_custom_call.1} parent=11 // pred_region
          _
        $region60: #{tpu_custom_call.1} parent=11 // pred_fallthru
          _
        // Predicated region
        $region61: #{tpu_custom_call.1} parent=11 // pred_check
          %p550 = pneg %p398
        $region62: #{tpu_custom_call.1} parent=11 // pred_check_branch
          %552 = sbr.rel (%p550) target = $region64
        $region63: #{tpu_custom_call.1} parent=11 // pred_region
          %s554 = ssub.s32 256, 256
          %555 = vsyncadd [#allocation17], %s554
          %s556 = sshll.u32 [#allocation16], 4
          %s557 = int_to_ptr.vmem [resolvable:$true] %s556
          %562 = dma.hbm_to_vmem [thread:$0]  %s15, 256, %s557, [#allocation17], 64, 64, 4
        $region64: #{tpu_custom_call.1} parent=11 // pred_fallthru
          _
        // Predicated region
        $region65: #{tpu_custom_call.1} parent=11 // pred_check
          %p563 = pneg %p419
        $region66: #{tpu_custom_call.1} parent=11 // pred_check_branch
          %565 = sbr.rel (%p563) target = $region68
        $region67: #{tpu_custom_call.1} parent=11 // pred_region
          _
        $region68: #{tpu_custom_call.1} parent=11 // pred_fallthru
          _
      $region12: #{tpu_custom_call.1} parent=5 // pred_fallthru
        _
      %p566 = scmp.lt.s32.totalorder %s33, 2
      // Predicated region
      $region69: #{tpu_custom_call.1} parent=5 // pred_check
        %p567 = pneg %p566
      $region70: #{tpu_custom_call.1} parent=5 // pred_check_branch
        %569 = sbr.rel (%p567) target = $region72
      $region71: #{tpu_custom_call.1} parent=5 // pred_region
        // Predicated region
        $region73: #{tpu_custom_call.1} parent=71 // pred_check
          %p570 = pneg %p65
        $region74: #{tpu_custom_call.1} parent=71 // pred_check_branch
          %572 = sbr.rel (%p570) target = $region76
        $region75: #{tpu_custom_call.1} parent=71 // pred_region
          %p573 = scmp.lt.s32.totalorder %s40, 1
          %s574 = scalar_select %p573, %s40, 1
          %s575 = smul.addr %s574, 8
          %s576 = scalar_lea.vmem %s0, %s575
        $region76: #{tpu_custom_call.1} parent=71 // pred_fallthru
          _
        // Predicated region
        $region77: #{tpu_custom_call.1} parent=71 // pred_check
          %p577 = pneg %p91
        $region78: #{tpu_custom_call.1} parent=71 // pred_check_branch
          %579 = sbr.rel (%p577) target = $region80
        $region79: #{tpu_custom_call.1} parent=71 // pred_region
          %s580 = sand.u32 %s81, 1
          %s581 = scalar_lea.sflag [#allocation5], %s580
          %s582 = sand.u32 %s81, 1
          %s583 = scalar_lea.vmem [#allocation4], %s582
          %s585 = ssub.s32 16, 16
          %586 = vsyncadd %s581, %s585
          %s587 = smul.addr %s40, 16
          %s588 = scalar_lea.hbm %s1, %s587
          %s590 = sshll.u32 %s583, 4
          %s591 = int_to_ptr.vmem [resolvable:$true] %s590
          %593 = dma.hbm_to_vmem [thread:$0]  %s588, 16, %s591, %s581
        $region80: #{tpu_custom_call.1} parent=71 // pred_fallthru
          _
        // Predicated region
        $region81: #{tpu_custom_call.1} parent=71 // pred_check
          %p594 = pneg %p119
        $region82: #{tpu_custom_call.1} parent=71 // pred_check_branch
          %596 = sbr.rel (%p594) target = $region84
        $region83: #{tpu_custom_call.1} parent=71 // pred_region
          %p597 = scmp.lt.s32.totalorder %s40, 1
          %s598 = scalar_select %p597, %s40, 1
          %p599 = scmp.lt.s32.totalorder %s41, 0
          %s600 = scalar_select %p599, %s41, 0
          %s601 = sadd.s32 %s600, %s598
          %s602 = smul.addr %s601, 8
          %s603 = scalar_lea.vmem %s2, %s602
        $region84: #{tpu_custom_call.1} parent=71 // pred_fallthru
          _
      $region72: #{tpu_custom_call.1} parent=5 // pred_fallthru
        _
      %p604 = scmp.le.s32.totalorder 1, %s33
      %p605 = scmp.lt.s32.totalorder %s33, 3
      %p606 = pnand %p604, %p605
      %p607 = pneg %p606
      // Predicated region
      $region85: #{tpu_custom_call.1} parent=5 // pred_check
        _
      $region86: #{tpu_custom_call.1} parent=5 // pred_check_branch
        %609 = sbr.rel (%p606) target = $region88
      $region87: #{tpu_custom_call.1} parent=5 // pred_region
        %s610 = ssub.s32 %s33, 1
        %s611 = sand.u32 %s84, 1
        %s612 = scalar_lea.sflag [#allocation5], %s611
        %s613 = sand.u32 %s84, 1
        %s614 = scalar_lea.vmem [#allocation4], %s613
        // Predicated region
        $region89: #{tpu_custom_call.1} parent=87 // pred_check
          %p615 = pneg %p97
        $region90: #{tpu_custom_call.1} parent=87 // pred_check_branch
          %617 = sbr.rel (%p615) target = $region92
        $region91: #{tpu_custom_call.1} parent=87 // pred_region
          %618 = dma.done %s612, 16
        $region92: #{tpu_custom_call.1} parent=87 // pred_fallthru
          _
        // Predicated region
        $region93: #{tpu_custom_call.1} parent=87 // pred_check
          %p619 = pneg %p146
        $region94: #{tpu_custom_call.1} parent=87 // pred_check_branch
          %621 = sbr.rel (%p619) target = $region96
        $region95: #{tpu_custom_call.1} parent=87 // pred_region
          %622 = dma.done [#allocation8], 16
        $region96: #{tpu_custom_call.1} parent=87 // pred_fallthru
          _
        // Predicated region
        $region97: #{tpu_custom_call.1} parent=87 // pred_check
          %p623 = pneg %p167
        $region98: #{tpu_custom_call.1} parent=87 // pred_check_branch
          %625 = sbr.rel (%p623) target = $region100
        $region99: #{tpu_custom_call.1} parent=87 // pred_region
          %626 = dma.done [#allocation8], 16
        $region100: #{tpu_custom_call.1} parent=87 // pred_fallthru
          _
        // Predicated region
        $region101: #{tpu_custom_call.1} parent=87 // pred_check
          %p627 = pneg %p209
        $region102: #{tpu_custom_call.1} parent=87 // pred_check_branch
          %629 = sbr.rel (%p627) target = $region104
        $region103: #{tpu_custom_call.1} parent=87 // pred_region
          %630 = dma.done [#allocation11], 16
        $region104: #{tpu_custom_call.1} parent=87 // pred_fallthru
          _
        // Predicated region
        $region105: #{tpu_custom_call.1} parent=87 // pred_check
          %p631 = pneg %p230
        $region106: #{tpu_custom_call.1} parent=87 // pred_check_branch
          %633 = sbr.rel (%p631) target = $region108
        $region107: #{tpu_custom_call.1} parent=87 // pred_region
          %634 = dma.done [#allocation11], 256
        $region108: #{tpu_custom_call.1} parent=87 // pred_fallthru
          _
        // Predicated region
        $region109: #{tpu_custom_call.1} parent=87 // pred_check
          %p635 = pneg %p251
        $region110: #{tpu_custom_call.1} parent=87 // pred_check_branch
          %637 = sbr.rel (%p635) target = $region112
        $region111: #{tpu_custom_call.1} parent=87 // pred_region
          %638 = dma.done [#allocation14], 16
        $region112: #{tpu_custom_call.1} parent=87 // pred_fallthru
          _
        // Predicated region
        $region113: #{tpu_custom_call.1} parent=87 // pred_check
          %p639 = pneg %p314
        $region114: #{tpu_custom_call.1} parent=87 // pred_check_branch
          %641 = sbr.rel (%p639) target = $region116
        $region115: #{tpu_custom_call.1} parent=87 // pred_region
          %642 = dma.done [#allocation14], 256
        $region116: #{tpu_custom_call.1} parent=87 // pred_fallthru
          _
        // Predicated region
        $region117: #{tpu_custom_call.1} parent=87 // pred_check
          %p643 = pneg %p398
        $region118: #{tpu_custom_call.1} parent=87 // pred_check_branch
          %645 = sbr.rel (%p643) target = $region120
        $region119: #{tpu_custom_call.1} parent=87 // pred_region
          %646 = dma.done [#allocation17], 256
        $region120: #{tpu_custom_call.1} parent=87 // pred_fallthru
          _
        %p647 = scmp.lt.s32.totalorder %s42, 1
        %s648 = scalar_select %p647, %s42, 1
        %s649 = smul.addr %s648, 8
        %s650 = scalar_lea.vmem %s0, %s649
        %p651 = pneg %p71
        %p652 = pneg %p68
        %s653 = sand.u32 %s84, 1
        %s654 = scalar_lea.sflag [#allocation5], %s653
        %s655 = sand.u32 %s84, 1
        %s656 = scalar_lea.vmem [#allocation4], %s655
        %p657 = pneg %p97
        %p658 = pneg %p94
        %p659 = scmp.lt.s32.totalorder %s42, 1
        %s660 = scalar_select %p659, %s42, 1
        %p661 = scmp.lt.s32.totalorder %s43, 0
        %s662 = scalar_select %p661, %s43, 0
        %s663 = sadd.s32 %s662, %s660
        %s664 = smul.addr %s663, 8
        %s665 = scalar_lea.vmem %s2, %s664
        %p666 = pneg %p125
        %p667 = pneg %p122
        %p668 = pneg %p146
        %p669 = pneg %p143
        %p670 = pneg %p167
        %p671 = pneg %p164
        %p672 = pneg %p188
        %p673 = pneg %p185
        %p674 = pneg %p209
        %p675 = pneg %p206
        %p676 = pneg %p230
        %p677 = pneg %p227
        %p678 = pneg %p251
        %p679 = pneg %p248
        %p680 = pneg %p272
        %p681 = pneg %p269
        %p682 = pneg %p293
        %p683 = pneg %p290
        %p684 = pneg %p314
        %p685 = pneg %p311
        %p686 = pneg %p335
        %p687 = pneg %p332
        %p688 = pneg %p356
        %p689 = pneg %p353
        %p690 = pneg %p377
        %p691 = pneg %p374
        %p692 = pneg %p398
        %p693 = pneg %p395
        %p694 = pneg %p419
        %p695 = pneg %p416
        %p696 = pneg %p447
        %p697 = pneg %p444
        %s698 = sand.u32 %s434, 1
        %s699 = scalar_lea.sflag [#allocation6], %s698
        %s700 = sand.u32 %s434, 1
        %s701 = smul.addr %s700, 8
        %s702 = scalar_lea.vmem [#allocation18], %s701
        %p703 = scmp.lt.s32.totalorder %s42, 1
        %s704 = scalar_select %p703, %s42, 1
        %s705 = smul.addr %s704, 8
        %s706 = scalar_lea.vmem %s0, %s705
        %p707 = scmp.lt.s32.totalorder %s42, 1
        %s708 = scalar_select %p707, %s42, 1
        %p709 = scmp.lt.s32.totalorder %s43, 0
        %s710 = scalar_select %p709, %s43, 0
        %s711 = sadd.s32 %s710, %s708
        %s712 = smul.addr %s711, 8
        %s713 = scalar_lea.vmem %s2, %s712
        %v715 = vld [vmem:[#allocation7] sm:$0x1]
        %v716 = vld [vmem:[#allocation9] sm:$0x1]
        %p717 = scmp.eq.s32.totalorder %s43, 0
        // Predicated region
        $region121: #{tpu_custom_call.1} parent=87 // pred_check
          %p718 = pneg %p717
        $region122: #{tpu_custom_call.1} parent=87 // pred_check_branch
          %720 = sbr.rel (%p718) target = $region124
        $region123: #{tpu_custom_call.1} parent=87 // pred_region
          %v721 = vld [vmem:[%s706] sm:$0xff]
          %vm722 = vcmask 261120
          %v723 = vsel %vm722, %v721, 0.0
          %724 = vadd.xlane.f32.xlu0 %v723
          %v725 = vpop.xlane.xlu0 %724
          %v726 = vrcp.pop 32.0
          %v727 = vmul.f32 %v725, %v726
          %v728 = vsub.f32 %v721, %v727
          %v729 = vmul.f32 %v728, %v728
          %v730 = vsel %vm722, %v729, 0.0
          %731 = vadd.xlane.f32.xlu0 %v730
          %v732 = vpop.xlane.xlu0 %731
          %v733 = vmul.f32 %v732, %v726
          %v734 = vadd.f32 %v733, 1e-05
          %v735 = vrsqrt.pop %v734
          %v736 = vmul.f32 %v728, %v735
          %v738 = vlaneseq
          %v739 = vshrl.u32 %v738, 7
          %v740 = vsub.s32 0, %v739
          %v741 = vrot.slane %v715, %v740
          %v743 = vmul.f32 %v736, %v741
          %v745 = vlaneseq
          %v746 = vshrl.u32 %v745, 7
          %v747 = vsub.s32 0, %v746
          %v748 = vrot.slane %v716, %v747
          %v750 = vadd.f32 %v743, %v748
          %v751 = vpack.c.bf16 %v750, %v750
          %v752 = vld [vmem:[#allocation12] sm:$0xf]
          %v753 = vld [vmem:[#allocation12 + $0x4] sm:$0xf]
          %v754 = vld [vmem:[#allocation12 + $0x8] sm:$0xf]
          %v755 = vld [vmem:[#allocation12 + $0xc] sm:$0xf]
          %v756 = vld [vmem:[#allocation13] sm:$0x1]
          %v758 = vlaneseq
          %v759 = vshrl.u32 %v758, 7
          %v760 = vsub.s32 0, %v759
          %v761 = vrot.slane %v756, %v760
          %v767 = vunpack.c.l.b16 %v752
          %v768 = vunpack.c.l.b16 %v753
          %v769 = vunpack.c.l.b16 %v754
          %v770 = vunpack.c.l.b16 %v755
          %v771 = vpack.c.b16 %v768, %v767
          %v772 = vpack.c.b16 %v770, %v769
          %v776 = vsel %vm722, %v751, 0
          %778 = vmatprep.subr.bf16.mxu0 0
          %779 = vmatpush1.bf16.msra.mxu0 %v771
          %780 = vmatprep.subr.bf16.mxu0 0
          %781 = vmatpush1.bf16.msra.mxu0 %v772
          %782 = vmatprep.subr.bf16.mxu0 0
          %783 = vmatpush1.bf16.msra.mxu0 0
          %784 = vmatprep.subr.bf16.mxu0 0
          %785 = vmatpush1.bf16.msra.mxu0 0
          %786 = vmatprep.subr.bf16.mxu0 0
          %787 = vmatpush1.bf16.msra.mxu0 0
          %788 = vmatprep.subr.bf16.mxu0 0
          %789 = vmatpush1.bf16.msra.mxu0 0
          %790 = vmatprep.subr.bf16.mxu0 0
          %791 = vmatpush1.bf16.msra.mxu0 0
          %792 = vmatprep.subr.bf16.mxu0 0
          %793 = vmatpush1.bf16.msra.mxu0 0
          %794 = vmatprep.subr.bf16.mxu0 0
          %795 = vmatpush1.bf16.msra.mxu0 0
          %796 = vmatprep.subr.bf16.mxu0 0
          %797 = vmatpush1.bf16.msra.mxu0 0
          %798 = vmatprep.subr.bf16.mxu0 0
          %799 = vmatpush1.bf16.msra.mxu0 0
          %800 = vmatprep.subr.bf16.mxu0 0
          %801 = vmatpush1.bf16.msra.mxu0 0
          %802 = vmatprep.subr.bf16.mxu0 0
          %803 = vmatpush1.bf16.msra.mxu0 0
          %804 = vmatprep.subr.bf16.mxu0 0
          %805 = vmatpush1.bf16.msra.mxu0 0
          %806 = vmatprep.subr.bf16.mxu0 0
          %807 = vmatpush1.bf16.msra.mxu0 0
          %808 = vmatprep.subr.bf16.mxu0 0
          %809 = vmatpush1.bf16.msra.mxu0 0
          %810 = vmatprep.mubr.bf16.mxu0 0
          %811 = vmatmul.mubr.bf16.gmra.mrb[0].mxu0 %v776
          %v812 = vpop.f32.mrb[0].mxu0
          %v813 = vadd.f32 %v761, %v812
          %v814 = vpop.f32.mrb[0].mxu0
          %v815 = vpop.f32.mrb[0].mxu0
          %v816 = vpop.f32.mrb[0].mxu0
          %817 = vdwg.mxu0
          %v818 = vpack.c.bf16 %v813, %v813
          %vm819 = vcmask 257024
          %820 = vst.msk [vmem:[#allocation2] sm:$0xf] %vm819, %v818
          %v822 = vunpack.c.l.b16 %v818
          %v823 = vpack.c.b16 %v822, %v822
          %824 = vrot.lane.b32.xlu0 %v823, 96
          %v825 = vpop.permute.xlu0 %824
          %827 = vst.msk [vmem:[#allocation3] sm:$0xf] %vm819, %v825
        $region124: #{tpu_custom_call.1} parent=87 // pred_fallthru
          _
        %s828 = smul.u32 %s43, 8
        %s829 = scalar_lea.vmem %s706, %s828
        %v830 = vld [vmem:[%s829] sm:$0xff]
        %vm831 = vcmask 261120
        %v832 = vsel %vm831, %v830, 0.0
        %833 = vadd.xlane.f32.xlu0 %v832
        %v834 = vpop.xlane.xlu0 %833
        %v835 = vrcp.pop 32.0
        %v836 = vmul.f32 %v834, %v835
        %v837 = vsub.f32 %v830, %v836
        %v838 = vmul.f32 %v837, %v837
        %v839 = vsel %vm831, %v838, 0.0
        %840 = vadd.xlane.f32.xlu0 %v839
        %v841 = vpop.xlane.xlu0 %840
        %v842 = vmul.f32 %v841, %v835
        %v843 = vadd.f32 %v842, 1e-05
        %v844 = vrsqrt.pop %v843
        %v845 = vmul.f32 %v837, %v844
        %v847 = vlaneseq
        %v848 = vshrl.u32 %v847, 7
        %v849 = vsub.s32 0, %v848
        %v850 = vrot.slane %v715, %v849
        %v852 = vmul.f32 %v845, %v850
        %v854 = vlaneseq
        %v855 = vshrl.u32 %v854, 7
        %v856 = vsub.s32 0, %v855
        %v857 = vrot.slane %v716, %v856
        %v859 = vadd.f32 %v852, %v857
        %v860 = vpack.c.bf16 %v859, %v859
        %v861 = vld [vmem:[%s5] sm:$0xf]
        %v862 = vld [vmem:[%s5 + $0x4] sm:$0xf]
        %v863 = vld [vmem:[%s5 + $0x8] sm:$0xf]
        %v864 = vld [vmem:[%s5 + $0xc] sm:$0xf]
        %v865 = vld [vmem:[#allocation10] sm:$0x1]
        %v867 = vlaneseq
        %v868 = vshrl.u32 %v867, 7
        %v869 = vsub.s32 0, %v868
        %v870 = vrot.slane %v865, %v869
        %v876 = vunpack.c.l.b16 %v861
        %v877 = vunpack.c.l.b16 %v862
        %v878 = vunpack.c.l.b16 %v863
        %v879 = vunpack.c.l.b16 %v864
        %v880 = vpack.c.b16 %v877, %v876
        %v881 = vpack.c.b16 %v879, %v878
        %v885 = vsel %vm831, %v860, 0
        %887 = vmatprep.subr.bf16.mxu0 0
        %888 = vmatpush1.bf16.msra.mxu0 %v880
        %889 = vmatprep.subr.bf16.mxu0 0
        %890 = vmatpush1.bf16.msra.mxu0 %v881
        %891 = vmatprep.subr.bf16.mxu0 0
        %892 = vmatpush1.bf16.msra.mxu0 0
        %893 = vmatprep.subr.bf16.mxu0 0
        %894 = vmatpush1.bf16.msra.mxu0 0
        %895 = vmatprep.subr.bf16.mxu0 0
        %896 = vmatpush1.bf16.msra.mxu0 0
        %897 = vmatprep.subr.bf16.mxu0 0
        %898 = vmatpush1.bf16.msra.mxu0 0
        %899 = vmatprep.subr.bf16.mxu0 0
        %900 = vmatpush1.bf16.msra.mxu0 0
        %901 = vmatprep.subr.bf16.mxu0 0
        %902 = vmatpush1.bf16.msra.mxu0 0
        %903 = vmatprep.subr.bf16.mxu0 0
        %904 = vmatpush1.bf16.msra.mxu0 0
        %905 = vmatprep.subr.bf16.mxu0 0
        %906 = vmatpush1.bf16.msra.mxu0 0
        %907 = vmatprep.subr.bf16.mxu0 0
        %908 = vmatpush1.bf16.msra.mxu0 0
        %909 = vmatprep.subr.bf16.mxu0 0
        %910 = vmatpush1.bf16.msra.mxu0 0
        %911 = vmatprep.subr.bf16.mxu0 0
        %912 = vmatpush1.bf16.msra.mxu0 0
        %913 = vmatprep.subr.bf16.mxu0 0
        %914 = vmatpush1.bf16.msra.mxu0 0
        %915 = vmatprep.subr.bf16.mxu0 0
        %916 = vmatpush1.bf16.msra.mxu0 0
        %917 = vmatprep.subr.bf16.mxu0 0
        %918 = vmatpush1.bf16.msra.mxu0 0
        %919 = vmatprep.mubr.bf16.mxu0 0
        %920 = vmatmul.mubr.bf16.gmra.mrb[0].mxu0 %v885
        %v921 = vpop.f32.mrb[0].mxu0
        %v922 = vadd.f32 %v870, %v921
        %v923 = vpop.f32.mrb[0].mxu0
        %v924 = vpop.f32.mrb[0].mxu0
        %v925 = vpop.f32.mrb[0].mxu0
        %926 = vdwg.mxu0
        %v927 = vld [vmem:[%s614] sm:$0x1]
        %v928 = vpack.c.bf16 %v922, %v922
        %v929 = vld [vmem:[#allocation2] sm:$0xf]
        %v930 = vld [vmem:[#allocation3] sm:$0xf]
        %v932 = vlaneseq
        %v933 = vshrl.u32 %v932, 7
        %v934 = vsub.s32 0, %v933
        %v935 = vrot.slane %v927, %v934
        %vm937 = vcmask 64512
        %v939 = vsel %vm937, %v928, 0
        %v942 = vsel %vm937, %v929, 0
        %944 = vmatprep.subr.bf16.mxu0 0
        %945 = vmatpush1.bf16.xpose.msra.mxu0 %v942
        %946 = vmatprep.subr.bf16.mxu0 0
        %947 = vmatpush1.bf16.xpose.msra.mxu0 0
        %948 = vmatprep.subr.bf16.mxu0 0
        %949 = vmatpush1.bf16.xpose.msra.mxu0 0
        %950 = vmatprep.subr.bf16.mxu0 0
        %951 = vmatpush1.bf16.xpose.msra.mxu0 0
        %952 = vmatprep.subr.bf16.mxu0 0
        %953 = vmatpush1.bf16.xpose.msra.mxu0 0
        %954 = vmatprep.subr.bf16.mxu0 0
        %955 = vmatpush1.bf16.xpose.msra.mxu0 0
        %956 = vmatprep.subr.bf16.mxu0 0
        %957 = vmatpush1.bf16.xpose.msra.mxu0 0
        %958 = vmatprep.subr.bf16.mxu0 0
        %959 = vmatpush1.bf16.xpose.msra.mxu0 0
        %960 = vmatprep.subr.bf16.mxu0 0
        %961 = vmatpush1.bf16.xpose.msra.mxu0 0
        %962 = vmatprep.subr.bf16.mxu0 0
        %963 = vmatpush1.bf16.xpose.msra.mxu0 0
        %964 = vmatprep.subr.bf16.mxu0 0
        %965 = vmatpush1.bf16.xpose.msra.mxu0 0
        %966 = vmatprep.subr.bf16.mxu0 0
        %967 = vmatpush1.bf16.xpose.msra.mxu0 0
        %968 = vmatprep.subr.bf16.mxu0 0
        %969 = vmatpush1.bf16.xpose.msra.mxu0 0
        %970 = vmatprep.subr.bf16.mxu0 0
        %971 = vmatpush1.bf16.xpose.msra.mxu0 0
        %972 = vmatprep.subr.bf16.mxu0 0
        %973 = vmatpush1.bf16.xpose.msra.mxu0 0
        %974 = vmatprep.subr.bf16.mxu0 0
        %975 = vmatpush1.bf16.xpose.msra.mxu0 0
        %976 = vmatprep.mubr.bf16.mxu0 0
        %977 = vmatmul.mubr.bf16.gmra.mrb[0].mxu0 %v939
        %v978 = vpop.f32.mrb[0].mxu0
        %v979 = vadd.f32 %v935, %v978
        %v980 = vpop.f32.mrb[0].mxu0
        %v981 = vpop.f32.mrb[0].mxu0
        %v982 = vpop.f32.mrb[0].mxu0
        %983 = vdwg.mxu0
        %v984 = vsel %vm937, %v979, -inf
        %985 = vmax.xlane.f32.xlu0 %v984
        %v986 = vpop.xlane.xlu0 %985
        %v987 = vsub.f32 %v979, %v986
        %v988 = vmul.f32 %v987, 1.442695
        %v989 = vpow.pop %v988
        %v990 = vsel %vm937, %v989, 0.0
        %991 = vadd.xlane.f32.xlu0 %v990
        %v992 = vpop.xlane.xlu0 %991
        %v993 = vrcp.pop %v992
        %v994 = vmul.f32 %v989, %v993
        %v995 = vpack.c.bf16 %v994, %v994
        %v997 = vsel %vm937, %v995, 0
        %vm999 = vcmask 1043456
        %v1001 = vsel %vm999, %v930, 0
        %1003 = vmatprep.subr.bf16.mxu0 0
        %1004 = vmatpush1.bf16.msra.mxu0 %v1001
        %1005 = vmatprep.subr.bf16.mxu0 0
        %1006 = vmatpush1.bf16.msra.mxu0 0
        %1007 = vmatprep.subr.bf16.mxu0 0
        %1008 = vmatpush1.bf16.msra.mxu0 0
        %1009 = vmatprep.subr.bf16.mxu0 0
        %1010 = vmatpush1.bf16.msra.mxu0 0
        %1011 = vmatprep.subr.bf16.mxu0 0
        %1012 = vmatpush1.bf16.msra.mxu0 0
        %1013 = vmatprep.subr.bf16.mxu0 0
        %1014 = vmatpush1.bf16.msra.mxu0 0
        %1015 = vmatprep.subr.bf16.mxu0 0
        %1016 = vmatpush1.bf16.msra.mxu0 0
        %1017 = vmatprep.subr.bf16.mxu0 0
        %1018 = vmatpush1.bf16.msra.mxu0 0
        %1019 = vmatprep.subr.bf16.mxu0 0
        %1020 = vmatpush1.bf16.msra.mxu0 0
        %1021 = vmatprep.subr.bf16.mxu0 0
        %1022 = vmatpush1.bf16.msra.mxu0 0
        %1023 = vmatprep.subr.bf16.mxu0 0
        %1024 = vmatpush1.bf16.msra.mxu0 0
        %1025 = vmatprep.subr.bf16.mxu0 0
        %1026 = vmatpush1.bf16.msra.mxu0 0
        %1027 = vmatprep.subr.bf16.mxu0 0
        %1028 = vmatpush1.bf16.msra.mxu0 0
        %1029 = vmatprep.subr.bf16.mxu0 0
        %1030 = vmatpush1.bf16.msra.mxu0 0
        %1031 = vmatprep.subr.bf16.mxu0 0
        %1032 = vmatpush1.bf16.msra.mxu0 0
        %1033 = vmatprep.subr.bf16.mxu0 0
        %1034 = vmatpush1.bf16.msra.mxu0 0
        %1035 = vmatprep.mubr.bf16.mxu0 0
        %1036 = vmatmul.mubr.bf16.gmra.mrb[0].mxu0 %v997
        %v1037 = vpop.f32.mrb[0].mxu0
        %v1038 = vadd.f32 0.0, %v1037
        %v1039 = vpop.f32.mrb[0].mxu0
        %v1040 = vpop.f32.mrb[0].mxu0
        %v1041 = vpop.f32.mrb[0].mxu0
        %1042 = vdwg.mxu0
        %1044 = vrot.lane.b32.xlu0 %v928, 120
        %v1045 = vpop.permute.xlu0 %1044
        %v1047 = vunpack.c.l.b16 %v929
        %v1048 = vpack.c.b16 %v1047, %v1047
        %1049 = vrot.lane.b32.xlu0 %v1048, 120
        %v1050 = vpop.permute.xlu0 %1049
        %v1052 = vsel %vm937, %v1045, 0
        %v1055 = vsel %vm937, %v1050, 0
        %1057 = vmatprep.subr.bf16.mxu0 0
        %1058 = vmatpush1.bf16.xpose.msra.mxu0 %v1055
        %1059 = vmatprep.subr.bf16.mxu0 0
        %1060 = vmatpush1.bf16.xpose.msra.mxu0 0
        %1061 = vmatprep.subr.bf16.mxu0 0
        %1062 = vmatpush1.bf16.xpose.msra.mxu0 0
        %1063 = vmatprep.subr.bf16.mxu0 0
        %1064 = vmatpush1.bf16.xpose.msra.mxu0 0
        %1065 = vmatprep.subr.bf16.mxu0 0
        %1066 = vmatpush1.bf16.xpose.msra.mxu0 0
        %1067 = vmatprep.subr.bf16.mxu0 0
        %1068 = vmatpush1.bf16.xpose.msra.mxu0 0
        %1069 = vmatprep.subr.bf16.mxu0 0
        %1070 = vmatpush1.bf16.xpose.msra.mxu0 0
        %1071 = vmatprep.subr.bf16.mxu0 0
        %1072 = vmatpush1.bf16.xpose.msra.mxu0 0
        %1073 = vmatprep.subr.bf16.mxu0 0
        %1074 = vmatpush1.bf16.xpose.msra.mxu0 0
        %1075 = vmatprep.subr.bf16.mxu0 0
        %1076 = vmatpush1.bf16.xpose.msra.mxu0 0
        %1077 = vmatprep.subr.bf16.mxu0 0
        %1078 = vmatpush1.bf16.xpose.msra.mxu0 0
        %1079 = vmatprep.subr.bf16.mxu0 0
        %1080 = vmatpush1.bf16.xpose.msra.mxu0 0
        %1081 = vmatprep.subr.bf16.mxu0 0
        %1082 = vmatpush1.bf16.xpose.msra.mxu0 0
        %1083 = vmatprep.subr.bf16.mxu0 0
        %1084 = vmatpush1.bf16.xpose.msra.mxu0 0
        %1085 = vmatprep.subr.bf16.mxu0 0
        %1086 = vmatpush1.bf16.xpose.msra.mxu0 0
        %1087 = vmatprep.subr.bf16.mxu0 0
        %1088 = vmatpush1.bf16.xpose.msra.mxu0 0
        %1089 = vmatprep.mubr.bf16.mxu0 0
        %1090 = vmatmul.mubr.bf16.gmra.mrb[0].mxu0 %v1052
        %v1091 = vpop.f32.mrb[0].mxu0
        %v1092 = vadd.f32 %v935, %v1091
        %v1093 = vpop.f32.mrb[0].mxu0
        %v1094 = vpop.f32.mrb[0].mxu0
        %v1095 = vpop.f32.mrb[0].mxu0
        %1096 = vdwg.mxu0
        %v1097 = vsel %vm937, %v1092, -inf
        %1098 = vmax.xlane.f32.xlu0 %v1097
        %v1099 = vpop.xlane.xlu0 %1098
        %v1100 = vsub.f32 %v1092, %v1099
        %v1101 = vmul.f32 %v1100, 1.442695
        %v1102 = vpow.pop %v1101
        %v1103 = vsel %vm937, %v1102, 0.0
        %1104 = vadd.xlane.f32.xlu0 %v1103
        %v1105 = vpop.xlane.xlu0 %1104
        %v1106 = vrcp.pop %v1105
        %v1107 = vmul.f32 %v1102, %v1106
        %v1108 = vpack.c.bf16 %v1107, %v1107
        %v1110 = vunpack.c.l.b16 %v930
        %v1111 = vpack.c.b16 %v1110, %v1110
        %1112 = vrot.lane.b32.xlu0 %v1111, 120
        %v1113 = vpop.permute.xlu0 %1112
        %v1115 = vsel %vm937, %v1108, 0
        %v1118 = vsel %vm999, %v1113, 0
        %1120 = vmatprep.subr.bf16.mxu0 0
        %1121 = vmatpush1.bf16.msra.mxu0 %v1118
        %1122 = vmatprep.subr.bf16.mxu0 0
        %1123 = vmatpush1.bf16.msra.mxu0 0
        %1124 = vmatprep.subr.bf16.mxu0 0
        %1125 = vmatpush1.bf16.msra.mxu0 0
        %1126 = vmatprep.subr.bf16.mxu0 0
        %1127 = vmatpush1.bf16.msra.mxu0 0
        %1128 = vmatprep.subr.bf16.mxu0 0
        %1129 = vmatpush1.bf16.msra.mxu0 0
        %1130 = vmatprep.subr.bf16.mxu0 0
        %1131 = vmatpush1.bf16.msra.mxu0 0
        %1132 = vmatprep.subr.bf16.mxu0 0
        %1133 = vmatpush1.bf16.msra.mxu0 0
        %1134 = vmatprep.subr.bf16.mxu0 0
        %1135 = vmatpush1.bf16.msra.mxu0 0
        %1136 = vmatprep.subr.bf16.mxu0 0
        %1137 = vmatpush1.bf16.msra.mxu0 0
        %1138 = vmatprep.subr.bf16.mxu0 0
        %1139 = vmatpush1.bf16.msra.mxu0 0
        %1140 = vmatprep.subr.bf16.mxu0 0
        %1141 = vmatpush1.bf16.msra.mxu0 0
        %1142 = vmatprep.subr.bf16.mxu0 0
        %1143 = vmatpush1.bf16.msra.mxu0 0
        %1144 = vmatprep.subr.bf16.mxu0 0
        %1145 = vmatpush1.bf16.msra.mxu0 0
        %1146 = vmatprep.subr.bf16.mxu0 0
        %1147 = vmatpush1.bf16.msra.mxu0 0
        %1148 = vmatprep.subr.bf16.mxu0 0
        %1149 = vmatpush1.bf16.msra.mxu0 0
        %1150 = vmatprep.subr.bf16.mxu0 0
        %1151 = vmatpush1.bf16.msra.mxu0 0
        %1152 = vmatprep.mubr.bf16.mxu0 0
        %1153 = vmatmul.mubr.bf16.gmra.mrb[0].mxu0 %v1115
        %v1154 = vpop.f32.mrb[0].mxu0
        %v1155 = vadd.f32 0.0, %v1154
        %v1156 = vpop.f32.mrb[0].mxu0
        %v1157 = vpop.f32.mrb[0].mxu0
        %v1158 = vpop.f32.mrb[0].mxu0
        %1159 = vdwg.mxu0
        %1160 = vrot.lane.b32.xlu0 %v928, 112
        %v1161 = vpop.permute.xlu0 %1160
        %1162 = vrot.lane.b32.xlu0 %v1048, 112
        %v1163 = vpop.permute.xlu0 %1162
        %v1165 = vsel %vm937, %v1161, 0
        %v1168 = vsel %vm937, %v1163, 0
        %1170 = vmatprep.subr.bf16.mxu0 0
        %1171 = vmatpush1.bf16.xpose.msra.mxu0 %v1168
        %1172 = vmatprep.subr.bf16.mxu0 0
        %1173 = vmatpush1.bf16.xpose.msra.mxu0 0
        %1174 = vmatprep.subr.bf16.mxu0 0
        %1175 = vmatpush1.bf16.xpose.msra.mxu0 0
        %1176 = vmatprep.subr.bf16.mxu0 0
        %1177 = vmatpush1.bf16.xpose.msra.mxu0 0
        %1178 = vmatprep.subr.bf16.mxu0 0
        %1179 = vmatpush1.bf16.xpose.msra.mxu0 0
        %1180 = vmatprep.subr.bf16.mxu0 0
        %1181 = vmatpush1.bf16.xpose.msra.mxu0 0
        %1182 = vmatprep.subr.bf16.mxu0 0
        %1183 = vmatpush1.bf16.xpose.msra.mxu0 0
        %1184 = vmatprep.subr.bf16.mxu0 0
        %1185 = vmatpush1.bf16.xpose.msra.mxu0 0
        %1186 = vmatprep.subr.bf16.mxu0 0
        %1187 = vmatpush1.bf16.xpose.msra.mxu0 0
        %1188 = vmatprep.subr.bf16.mxu0 0
        %1189 = vmatpush1.bf16.xpose.msra.mxu0 0
        %1190 = vmatprep.subr.bf16.mxu0 0
        %1191 = vmatpush1.bf16.xpose.msra.mxu0 0
        %1192 = vmatprep.subr.bf16.mxu0 0
        %1193 = vmatpush1.bf16.xpose.msra.mxu0 0
        %1194 = vmatprep.subr.bf16.mxu0 0
        %1195 = vmatpush1.bf16.xpose.msra.mxu0 0
        %1196 = vmatprep.subr.bf16.mxu0 0
        %1197 = vmatpush1.bf16.xpose.msra.mxu0 0
        %1198 = vmatprep.subr.bf16.mxu0 0
        %1199 = vmatpush1.bf16.xpose.msra.mxu0 0
        %1200 = vmatprep.subr.bf16.mxu0 0
        %1201 = vmatpush1.bf16.xpose.msra.mxu0 0
        %1202 = vmatprep.mubr.bf16.mxu0 0
        %1203 = vmatmul.mubr.bf16.gmra.mrb[0].mxu0 %v1165
        %v1204 = vpop.f32.mrb[0].mxu0
        %v1205 = vadd.f32 %v935, %v1204
        %v1206 = vpop.f32.mrb[0].mxu0
        %v1207 = vpop.f32.mrb[0].mxu0
        %v1208 = vpop.f32.mrb[0].mxu0
        %1209 = vdwg.mxu0
        %v1210 = vsel %vm937, %v1205, -inf
        %1211 = vmax.xlane.f32.xlu0 %v1210
        %v1212 = vpop.xlane.xlu0 %1211
        %v1213 = vsub.f32 %v1205, %v1212
        %v1214 = vmul.f32 %v1213, 1.442695
        %v1215 = vpow.pop %v1214
        %v1216 = vsel %vm937, %v1215, 0.0
        %1217 = vadd.xlane.f32.xlu0 %v1216
        %v1218 = vpop.xlane.xlu0 %1217
        %v1219 = vrcp.pop %v1218
        %v1220 = vmul.f32 %v1215, %v1219
        %v1221 = vpack.c.bf16 %v1220, %v1220
        %1222 = vrot.lane.b32.xlu0 %v1111, 112
        %v1223 = vpop.permute.xlu0 %1222
        %v1225 = vsel %vm937, %v1221, 0
        %v1228 = vsel %vm999, %v1223, 0
        %1230 = vmatprep.subr.bf16.mxu0 0
        %1231 = vmatpush1.bf16.msra.mxu0 %v1228
        %1232 = vmatprep.subr.bf16.mxu0 0
        %1233 = vmatpush1.bf16.msra.mxu0 0
        %1234 = vmatprep.subr.bf16.mxu0 0
        %1235 = vmatpush1.bf16.msra.mxu0 0
        %1236 = vmatprep.subr.bf16.mxu0 0
        %1237 = vmatpush1.bf16.msra.mxu0 0
        %1238 = vmatprep.subr.bf16.mxu0 0
        %1239 = vmatpush1.bf16.msra.mxu0 0
        %1240 = vmatprep.subr.bf16.mxu0 0
        %1241 = vmatpush1.bf16.msra.mxu0 0
        %1242 = vmatprep.subr.bf16.mxu0 0
        %1243 = vmatpush1.bf16.msra.mxu0 0
        %1244 = vmatprep.subr.bf16.mxu0 0
        %1245 = vmatpush1.bf16.msra.mxu0 0
        %1246 = vmatprep.subr.bf16.mxu0 0
        %1247 = vmatpush1.bf16.msra.mxu0 0
        %1248 = vmatprep.subr.bf16.mxu0 0
        %1249 = vmatpush1.bf16.msra.mxu0 0
        %1250 = vmatprep.subr.bf16.mxu0 0
        %1251 = vmatpush1.bf16.msra.mxu0 0
        %1252 = vmatprep.subr.bf16.mxu0 0
        %1253 = vmatpush1.bf16.msra.mxu0 0
        %1254 = vmatprep.subr.bf16.mxu0 0
        %1255 = vmatpush1.bf16.msra.mxu0 0
        %1256 = vmatprep.subr.bf16.mxu0 0
        %1257 = vmatpush1.bf16.msra.mxu0 0
        %1258 = vmatprep.subr.bf16.mxu0 0
        %1259 = vmatpush1.bf16.msra.mxu0 0
        %1260 = vmatprep.subr.bf16.mxu0 0
        %1261 = vmatpush1.bf16.msra.mxu0 0
        %1262 = vmatprep.mubr.bf16.mxu0 0
        %1263 = vmatmul.mubr.bf16.gmra.mrb[0].mxu0 %v1225
        %v1264 = vpop.f32.mrb[0].mxu0
        %v1265 = vadd.f32 0.0, %v1264
        %v1266 = vpop.f32.mrb[0].mxu0
        %v1267 = vpop.f32.mrb[0].mxu0
        %v1268 = vpop.f32.mrb[0].mxu0
        %1269 = vdwg.mxu0
        %1270 = vrot.lane.b32.xlu0 %v928, 104
        %v1271 = vpop.permute.xlu0 %1270
        %1272 = vrot.lane.b32.xlu0 %v1048, 104
        %v1273 = vpop.permute.xlu0 %1272
        %v1275 = vsel %vm937, %v1271, 0
        %v1278 = vsel %vm937, %v1273, 0
        %1280 = vmatprep.subr.bf16.mxu0 0
        %1281 = vmatpush1.bf16.xpose.msra.mxu0 %v1278
        %1282 = vmatprep.subr.bf16.mxu0 0
        %1283 = vmatpush1.bf16.xpose.msra.mxu0 0
        %1284 = vmatprep.subr.bf16.mxu0 0
        %1285 = vmatpush1.bf16.xpose.msra.mxu0 0
        %1286 = vmatprep.subr.bf16.mxu0 0
        %1287 = vmatpush1.bf16.xpose.msra.mxu0 0
        %1288 = vmatprep.subr.bf16.mxu0 0
        %1289 = vmatpush1.bf16.xpose.msra.mxu0 0
        %1290 = vmatprep.subr.bf16.mxu0 0
        %1291 = vmatpush1.bf16.xpose.msra.mxu0 0
        %1292 = vmatprep.subr.bf16.mxu0 0
        %1293 = vmatpush1.bf16.xpose.msra.mxu0 0
        %1294 = vmatprep.subr.bf16.mxu0 0
        %1295 = vmatpush1.bf16.xpose.msra.mxu0 0
        %1296 = vmatprep.subr.bf16.mxu0 0
        %1297 = vmatpush1.bf16.xpose.msra.mxu0 0
        %1298 = vmatprep.subr.bf16.mxu0 0
        %1299 = vmatpush1.bf16.xpose.msra.mxu0 0
        %1300 = vmatprep.subr.bf16.mxu0 0
        %1301 = vmatpush1.bf16.xpose.msra.mxu0 0
        %1302 = vmatprep.subr.bf16.mxu0 0
        %1303 = vmatpush1.bf16.xpose.msra.mxu0 0
        %1304 = vmatprep.subr.bf16.mxu0 0
        %1305 = vmatpush1.bf16.xpose.msra.mxu0 0
        %1306 = vmatprep.subr.bf16.mxu0 0
        %1307 = vmatpush1.bf16.xpose.msra.mxu0 0
        %1308 = vmatprep.subr.bf16.mxu0 0
        %1309 = vmatpush1.bf16.xpose.msra.mxu0 0
        %1310 = vmatprep.subr.bf16.mxu0 0
        %1311 = vmatpush1.bf16.xpose.msra.mxu0 0
        %1312 = vmatprep.mubr.bf16.mxu0 0
        %1313 = vmatmul.mubr.bf16.gmra.mrb[0].mxu0 %v1275
        %v1314 = vpop.f32.mrb[0].mxu0
        %v1315 = vadd.f32 %v935, %v1314
        %v1316 = vpop.f32.mrb[0].mxu0
        %v1317 = vpop.f32.mrb[0].mxu0
        %v1318 = vpop.f32.mrb[0].mxu0
        %1319 = vdwg.mxu0
        %v1320 = vsel %vm937, %v1315, -inf
        %1321 = vmax.xlane.f32.xlu0 %v1320
        %v1322 = vpop.xlane.xlu0 %1321
        %v1323 = vsub.f32 %v1315, %v1322
        %v1324 = vmul.f32 %v1323, 1.442695
        %v1325 = vpow.pop %v1324
        %v1326 = vsel %vm937, %v1325, 0.0
        %1327 = vadd.xlane.f32.xlu0 %v1326
        %v1328 = vpop.xlane.xlu0 %1327
        %v1329 = vrcp.pop %v1328
        %v1330 = vmul.f32 %v1325, %v1329
        %v1331 = vpack.c.bf16 %v1330, %v1330
        %1332 = vrot.lane.b32.xlu0 %v1111, 104
        %v1333 = vpop.permute.xlu0 %1332
        %v1335 = vsel %vm937, %v1331, 0
        %v1338 = vsel %vm999, %v1333, 0
        %1340 = vmatprep.subr.bf16.mxu0 0
        %1341 = vmatpush1.bf16.msra.mxu0 %v1338
        %1342 = vmatprep.subr.bf16.mxu0 0
        %1343 = vmatpush1.bf16.msra.mxu0 0
        %1344 = vmatprep.subr.bf16.mxu0 0
        %1345 = vmatpush1.bf16.msra.mxu0 0
        %1346 = vmatprep.subr.bf16.mxu0 0
        %1347 = vmatpush1.bf16.msra.mxu0 0
        %1348 = vmatprep.subr.bf16.mxu0 0
        %1349 = vmatpush1.bf16.msra.mxu0 0
        %1350 = vmatprep.subr.bf16.mxu0 0
        %1351 = vmatpush1.bf16.msra.mxu0 0
        %1352 = vmatprep.subr.bf16.mxu0 0
        %1353 = vmatpush1.bf16.msra.mxu0 0
        %1354 = vmatprep.subr.bf16.mxu0 0
        %1355 = vmatpush1.bf16.msra.mxu0 0
        %1356 = vmatprep.subr.bf16.mxu0 0
        %1357 = vmatpush1.bf16.msra.mxu0 0
        %1358 = vmatprep.subr.bf16.mxu0 0
        %1359 = vmatpush1.bf16.msra.mxu0 0
        %1360 = vmatprep.subr.bf16.mxu0 0
        %1361 = vmatpush1.bf16.msra.mxu0 0
        %1362 = vmatprep.subr.bf16.mxu0 0
        %1363 = vmatpush1.bf16.msra.mxu0 0
        %1364 = vmatprep.subr.bf16.mxu0 0
        %1365 = vmatpush1.bf16.msra.mxu0 0
        %1366 = vmatprep.subr.bf16.mxu0 0
        %1367 = vmatpush1.bf16.msra.mxu0 0
        %1368 = vmatprep.subr.bf16.mxu0 0
        %1369 = vmatpush1.bf16.msra.mxu0 0
        %1370 = vmatprep.subr.bf16.mxu0 0
        %1371 = vmatpush1.bf16.msra.mxu0 0
        %1372 = vmatprep.mubr.bf16.mxu0 0
        %1373 = vmatmul.mubr.bf16.gmra.mrb[0].mxu0 %v1335
        %v1374 = vpop.f32.mrb[0].mxu0
        %v1375 = vadd.f32 0.0, %v1374
        %v1376 = vpop.f32.mrb[0].mxu0
        %v1377 = vpop.f32.mrb[0].mxu0
        %v1378 = vpop.f32.mrb[0].mxu0
        %1379 = vdwg.mxu0
        %1381 = vrot.lane.b32.xlu0 %v1155, 8
        %v1382 = vpop.permute.xlu0 %1381
        %1385 = vrot.lane.b32.xlu0 %v1265, 16
        %v1386 = vpop.permute.xlu0 %1385
        %1389 = vrot.lane.b32.xlu0 %v1375, 24
        %v1390 = vpop.permute.xlu0 %1389
        %v1392 = vsel %vm937, %v1038, %v1382
        %vm1393 = vcmask 130048
        %v1394 = vsel %vm1393, %v1392, %v1386
        %vm1395 = vcmask 195584
        %v1396 = vsel %vm1395, %v1394, %v1390
        %v1397 = vpack.c.bf16 %v1396, %v1396
        %v1398 = vld [vmem:[%s9] sm:$0xf]
        %v1399 = vld [vmem:[%s9 + $0x4] sm:$0xf]
        %v1400 = vld [vmem:[%s9 + $0x8] sm:$0xf]
        %v1401 = vld [vmem:[%s9 + $0xc] sm:$0xf]
        %v1402 = vld [vmem:[%s10] sm:$0x1]
        %v1404 = vlaneseq
        %v1405 = vshrl.u32 %v1404, 7
        %v1406 = vsub.s32 0, %v1405
        %v1407 = vrot.slane %v1402, %v1406
        %v1413 = vunpack.c.l.b16 %v1398
        %v1414 = vunpack.c.l.b16 %v1399
        %v1415 = vunpack.c.l.b16 %v1400
        %v1416 = vunpack.c.l.b16 %v1401
        %v1417 = vpack.c.b16 %v1414, %v1413
        %v1418 = vpack.c.b16 %v1416, %v1415
        %v1422 = vsel %vm831, %v1397, 0
        %1424 = vmatprep.subr.bf16.mxu0 0
        %1425 = vmatpush1.bf16.msra.mxu0 %v1417
        %1426 = vmatprep.subr.bf16.mxu0 0
        %1427 = vmatpush1.bf16.msra.mxu0 %v1418
        %1428 = vmatprep.subr.bf16.mxu0 0
        %1429 = vmatpush1.bf16.msra.mxu0 0
        %1430 = vmatprep.subr.bf16.mxu0 0
        %1431 = vmatpush1.bf16.msra.mxu0 0
        %1432 = vmatprep.subr.bf16.mxu0 0
        %1433 = vmatpush1.bf16.msra.mxu0 0
        %1434 = vmatprep.subr.bf16.mxu0 0
        %1435 = vmatpush1.bf16.msra.mxu0 0
        %1436 = vmatprep.subr.bf16.mxu0 0
        %1437 = vmatpush1.bf16.msra.mxu0 0
        %1438 = vmatprep.subr.bf16.mxu0 0
        %1439 = vmatpush1.bf16.msra.mxu0 0
        %1440 = vmatprep.subr.bf16.mxu0 0
        %1441 = vmatpush1.bf16.msra.mxu0 0
        %1442 = vmatprep.subr.bf16.mxu0 0
        %1443 = vmatpush1.bf16.msra.mxu0 0
        %1444 = vmatprep.subr.bf16.mxu0 0
        %1445 = vmatpush1.bf16.msra.mxu0 0
        %1446 = vmatprep.subr.bf16.mxu0 0
        %1447 = vmatpush1.bf16.msra.mxu0 0
        %1448 = vmatprep.subr.bf16.mxu0 0
        %1449 = vmatpush1.bf16.msra.mxu0 0
        %1450 = vmatprep.subr.bf16.mxu0 0
        %1451 = vmatpush1.bf16.msra.mxu0 0
        %1452 = vmatprep.subr.bf16.mxu0 0
        %1453 = vmatpush1.bf16.msra.mxu0 0
        %1454 = vmatprep.subr.bf16.mxu0 0
        %1455 = vmatpush1.bf16.msra.mxu0 0
        %1456 = vmatprep.mubr.bf16.mxu0 0
        %1457 = vmatmul.mubr.bf16.gmra.mrb[0].mxu0 %v1422
        %v1458 = vpop.f32.mrb[0].mxu0
        %v1459 = vadd.f32 %v1407, %v1458
        %v1460 = vpop.f32.mrb[0].mxu0
        %v1461 = vpop.f32.mrb[0].mxu0
        %v1462 = vpop.f32.mrb[0].mxu0
        %1463 = vdwg.mxu0
        %v1464 = vadd.f32 %v859, %v1459
        %v1465 = vpack.c.bf16 %v1464, %v1464
        %v1466 = vld [vmem:[#allocation15] sm:$0xf]
        %v1467 = vld [vmem:[#allocation15 + $0x4] sm:$0xf]
        %v1468 = vld [vmem:[#allocation15 + $0x8] sm:$0xf]
        %v1469 = vld [vmem:[#allocation15 + $0xc] sm:$0xf]
        %v1470 = vld [vmem:[%s12] sm:$0x1]
        %v1472 = vlaneseq
        %v1473 = vshrl.u32 %v1472, 7
        %v1474 = vsub.s32 0, %v1473
        %v1475 = vrot.slane %v1470, %v1474
        %v1481 = vunpack.c.l.b16 %v1466
        %v1482 = vunpack.c.l.b16 %v1467
        %v1483 = vunpack.c.l.b16 %v1468
        %v1484 = vunpack.c.l.b16 %v1469
        %v1485 = vpack.c.b16 %v1482, %v1481
        %v1486 = vpack.c.b16 %v1484, %v1483
        %v1490 = vsel %vm831, %v1465, 0
        %1492 = vmatprep.subr.bf16.mxu0 0
        %1493 = vmatpush1.bf16.msra.mxu0 %v1485
        %1494 = vmatprep.subr.bf16.mxu0 0
        %1495 = vmatpush1.bf16.msra.mxu0 %v1486
        %1496 = vmatprep.subr.bf16.mxu0 0
        %1497 = vmatpush1.bf16.msra.mxu0 0
        %1498 = vmatprep.subr.bf16.mxu0 0
        %1499 = vmatpush1.bf16.msra.mxu0 0
        %1500 = vmatprep.subr.bf16.mxu0 0
        %1501 = vmatpush1.bf16.msra.mxu0 0
        %1502 = vmatprep.subr.bf16.mxu0 0
        %1503 = vmatpush1.bf16.msra.mxu0 0
        %1504 = vmatprep.subr.bf16.mxu0 0
        %1505 = vmatpush1.bf16.msra.mxu0 0
        %1506 = vmatprep.subr.bf16.mxu0 0
        %1507 = vmatpush1.bf16.msra.mxu0 0
        %1508 = vmatprep.subr.bf16.mxu0 0
        %1509 = vmatpush1.bf16.msra.mxu0 0
        %1510 = vmatprep.subr.bf16.mxu0 0
        %1511 = vmatpush1.bf16.msra.mxu0 0
        %1512 = vmatprep.subr.bf16.mxu0 0
        %1513 = vmatpush1.bf16.msra.mxu0 0
        %1514 = vmatprep.subr.bf16.mxu0 0
        %1515 = vmatpush1.bf16.msra.mxu0 0
        %1516 = vmatprep.subr.bf16.mxu0 0
        %1517 = vmatpush1.bf16.msra.mxu0 0
        %1518 = vmatprep.subr.bf16.mxu0 0
        %1519 = vmatpush1.bf16.msra.mxu0 0
        %1520 = vmatprep.subr.bf16.mxu0 0
        %1521 = vmatpush1.bf16.msra.mxu0 0
        %1522 = vmatprep.subr.bf16.mxu0 0
        %1523 = vmatpush1.bf16.msra.mxu0 0
        %1524 = vmatprep.mubr.bf16.mxu0 0
        %1525 = vmatmul.mubr.bf16.gmra.mrb[0].mxu0 %v1490
        %v1526 = vpop.f32.mrb[0].mxu0
        %v1527 = vadd.f32 %v1475, %v1526
        %v1528 = vpop.f32.mrb[0].mxu0
        %v1529 = vpop.f32.mrb[0].mxu0
        %v1530 = vpop.f32.mrb[0].mxu0
        %1531 = vdwg.mxu0
        %v1532 = vxor.u32 %v1527, 2147483648
        %v1533 = vmul.f32 %v1532, 1.442695
        %v1534 = vpow.pop %v1533
        %v1535 = vadd.f32 %v1534, 1.0
        %v1536 = vrcp.pop %v1535
        %v1537 = vmul.f32 1.0, %v1536
        %v1538 = vmul.f32 %v1527, %v1537
        %v1539 = vpack.c.bf16 %v1538, %v1538
        %v1540 = vld [vmem:[%s13] sm:$0xf]
        %v1541 = vld [vmem:[%s13 + $0x4] sm:$0xf]
        %v1542 = vld [vmem:[%s13 + $0x8] sm:$0xf]
        %v1543 = vld [vmem:[%s13 + $0xc] sm:$0xf]
        %v1544 = vld [vmem:[%s14] sm:$0x1]
        %v1546 = vlaneseq
        %v1547 = vshrl.u32 %v1546, 7
        %v1548 = vsub.s32 0, %v1547
        %v1549 = vrot.slane %v1544, %v1548
        %v1555 = vunpack.c.l.b16 %v1540
        %v1556 = vunpack.c.l.b16 %v1541
        %v1557 = vunpack.c.l.b16 %v1542
        %v1558 = vunpack.c.l.b16 %v1543
        %v1559 = vpack.c.b16 %v1556, %v1555
        %v1560 = vpack.c.b16 %v1558, %v1557
        %v1564 = vsel %vm831, %v1539, 0
        %1566 = vmatprep.subr.bf16.mxu0 0
        %1567 = vmatpush1.bf16.msra.mxu0 %v1559
        %1568 = vmatprep.subr.bf16.mxu0 0
        %1569 = vmatpush1.bf16.msra.mxu0 %v1560
        %1570 = vmatprep.subr.bf16.mxu0 0
        %1571 = vmatpush1.bf16.msra.mxu0 0
        %1572 = vmatprep.subr.bf16.mxu0 0
        %1573 = vmatpush1.bf16.msra.mxu0 0
        %1574 = vmatprep.subr.bf16.mxu0 0
        %1575 = vmatpush1.bf16.msra.mxu0 0
        %1576 = vmatprep.subr.bf16.mxu0 0
        %1577 = vmatpush1.bf16.msra.mxu0 0
        %1578 = vmatprep.subr.bf16.mxu0 0
        %1579 = vmatpush1.bf16.msra.mxu0 0
        %1580 = vmatprep.subr.bf16.mxu0 0
        %1581 = vmatpush1.bf16.msra.mxu0 0
        %1582 = vmatprep.subr.bf16.mxu0 0
        %1583 = vmatpush1.bf16.msra.mxu0 0
        %1584 = vmatprep.subr.bf16.mxu0 0
        %1585 = vmatpush1.bf16.msra.mxu0 0
        %1586 = vmatprep.subr.bf16.mxu0 0
        %1587 = vmatpush1.bf16.msra.mxu0 0
        %1588 = vmatprep.subr.bf16.mxu0 0
        %1589 = vmatpush1.bf16.msra.mxu0 0
        %1590 = vmatprep.subr.bf16.mxu0 0
        %1591 = vmatpush1.bf16.msra.mxu0 0
        %1592 = vmatprep.subr.bf16.mxu0 0
        %1593 = vmatpush1.bf16.msra.mxu0 0
        %1594 = vmatprep.subr.bf16.mxu0 0
        %1595 = vmatpush1.bf16.msra.mxu0 0
        %1596 = vmatprep.subr.bf16.mxu0 0
        %1597 = vmatpush1.bf16.msra.mxu0 0
        %1598 = vmatprep.mubr.bf16.mxu0 0
        %1599 = vmatmul.mubr.bf16.gmra.mrb[0].mxu0 %v1564
        %v1600 = vpop.f32.mrb[0].mxu0
        %v1601 = vadd.f32 %v1549, %v1600
        %v1602 = vpop.f32.mrb[0].mxu0
        %v1603 = vpop.f32.mrb[0].mxu0
        %v1604 = vpop.f32.mrb[0].mxu0
        %1605 = vdwg.mxu0
        %v1606 = vxor.u32 %v1601, 2147483648
        %v1607 = vmul.f32 %v1606, 1.442695
        %v1608 = vpow.pop %v1607
        %v1609 = vadd.f32 %v1608, 1.0
        %v1610 = vrcp.pop %v1609
        %v1611 = vmul.f32 1.0, %v1610
        %v1612 = vmul.f32 %v1601, %v1611
        %v1613 = vpack.c.bf16 %v1612, %v1612
        %v1614 = vld [vmem:[#allocation16] sm:$0xf]
        %v1615 = vld [vmem:[#allocation16 + $0x4] sm:$0xf]
        %v1616 = vld [vmem:[#allocation16 + $0x8] sm:$0xf]
        %v1617 = vld [vmem:[#allocation16 + $0xc] sm:$0xf]
        %v1618 = vld [vmem:[%s16] sm:$0x1]
        %v1620 = vlaneseq
        %v1621 = vshrl.u32 %v1620, 7
        %v1622 = vsub.s32 0, %v1621
        %v1623 = vrot.slane %v1618, %v1622
        %v1629 = vunpack.c.l.b16 %v1614
        %v1630 = vunpack.c.l.b16 %v1615
        %v1631 = vunpack.c.l.b16 %v1616
        %v1632 = vunpack.c.l.b16 %v1617
        %v1633 = vpack.c.b16 %v1630, %v1629
        %v1634 = vpack.c.b16 %v1632, %v1631
        %v1638 = vsel %vm831, %v1613, 0
        %1640 = vmatprep.subr.bf16.mxu0 0
        %1641 = vmatpush1.bf16.msra.mxu0 %v1633
        %1642 = vmatprep.subr.bf16.mxu0 0
        %1643 = vmatpush1.bf16.msra.mxu0 %v1634
        %1644 = vmatprep.subr.bf16.mxu0 0
        %1645 = vmatpush1.bf16.msra.mxu0 0
        %1646 = vmatprep.subr.bf16.mxu0 0
        %1647 = vmatpush1.bf16.msra.mxu0 0
        %1648 = vmatprep.subr.bf16.mxu0 0
        %1649 = vmatpush1.bf16.msra.mxu0 0
        %1650 = vmatprep.subr.bf16.mxu0 0
        %1651 = vmatpush1.bf16.msra.mxu0 0
        %1652 = vmatprep.subr.bf16.mxu0 0
        %1653 = vmatpush1.bf16.msra.mxu0 0
        %1654 = vmatprep.subr.bf16.mxu0 0
        %1655 = vmatpush1.bf16.msra.mxu0 0
        %1656 = vmatprep.subr.bf16.mxu0 0
        %1657 = vmatpush1.bf16.msra.mxu0 0
        %1658 = vmatprep.subr.bf16.mxu0 0
        %1659 = vmatpush1.bf16.msra.mxu0 0
        %1660 = vmatprep.subr.bf16.mxu0 0
        %1661 = vmatpush1.bf16.msra.mxu0 0
        %1662 = vmatprep.subr.bf16.mxu0 0
        %1663 = vmatpush1.bf16.msra.mxu0 0
        %1664 = vmatprep.subr.bf16.mxu0 0
        %1665 = vmatpush1.bf16.msra.mxu0 0
        %1666 = vmatprep.subr.bf16.mxu0 0
        %1667 = vmatpush1.bf16.msra.mxu0 0
        %1668 = vmatprep.subr.bf16.mxu0 0
        %1669 = vmatpush1.bf16.msra.mxu0 0
        %1670 = vmatprep.subr.bf16.mxu0 0
        %1671 = vmatpush1.bf16.msra.mxu0 0
        %1672 = vmatprep.mubr.bf16.mxu0 0
        %1673 = vmatmul.mubr.bf16.gmra.mrb[0].mxu0 %v1638
        %v1674 = vpop.f32.mrb[0].mxu0
        %v1675 = vadd.f32 %v1623, %v1674
        %v1676 = vpop.f32.mrb[0].mxu0
        %v1677 = vpop.f32.mrb[0].mxu0
        %v1678 = vpop.f32.mrb[0].mxu0
        %1679 = vdwg.mxu0
        %v1680 = vld [vmem:[%s713] sm:$0xff]
        %1682 = vset.pattern.permute.xlu0 0
        %1683 = vperm.xlu0 %1682, %v1680
        %v1684 = vpop.permute.xlu0 %1683
        %v1686 = vmul.f32 %v1675, %v1684
        %v1687 = vadd.f32 %v1464, %v1686
        %1688 = vst.msk [vmem:[%s702] sm:$0xff] %vm831, %v1687
        %s1689 = sand.u32 %s434, 1
        %s1690 = scalar_lea.sflag [#allocation6], %s1689
        %s1691 = sand.u32 %s434, 1
        %s1692 = smul.addr %s1691, 8
        %s1693 = scalar_lea.vmem [#allocation18], %s1692
        // Predicated region
        $region125: #{tpu_custom_call.1} parent=87 // pred_check
          %p1694 = pneg %p444
        $region126: #{tpu_custom_call.1} parent=87 // pred_check_branch
          %1696 = sbr.rel (%p1694) target = $region128
        $region127: #{tpu_custom_call.1} parent=87 // pred_region
          %s1698 = ssub.s32 128, 128
          %1699 = vsyncadd %s1690, %s1698
          %s1700 = sadd.s32 %s43, %s42
          %s1701 = smul.addr %s1700, 128
          %s1702 = scalar_lea.hbm %s17, %s1701
          %s1704 = sshll.u32 %s1693, 4
          %s1705 = int_to_ptr.vmem [resolvable:$true] %s1704
          %1707 = dma.vmem_to_hbm [thread:$0]  %s1705, 128, %s1702, %s1690
        $region128: #{tpu_custom_call.1} parent=87 // pred_fallthru
          _
      $region88: #{tpu_custom_call.1} parent=5 // pred_fallthru
        _
      %p1708 = scmp.le.s32.totalorder 2, %s33
      // Predicated region
      $region129: #{tpu_custom_call.1} parent=5 // pred_check
        %p1709 = pneg %p1708
      $region130: #{tpu_custom_call.1} parent=5 // pred_check_branch
        %1711 = sbr.rel (%p1709) target = $region132
      $region131: #{tpu_custom_call.1} parent=5 // pred_region
        %s1712 = ssub.s32 %s33, 2
        // Predicated region
        $region133: #{tpu_custom_call.1} parent=131 // pred_check
          %p1713 = pneg %p450
        $region134: #{tpu_custom_call.1} parent=131 // pred_check_branch
          %1715 = sbr.rel (%p1713) target = $region136
        $region135: #{tpu_custom_call.1} parent=131 // pred_region
          %s1716 = sand.u32 %s435, 1
          %s1717 = scalar_lea.sflag [#allocation6], %s1716
          %s1718 = sand.u32 %s435, 1
          %s1719 = smul.addr %s1718, 8
          %s1720 = scalar_lea.vmem [#allocation18], %s1719
          %1721 = dma.done %s1717, 128
        $region136: #{tpu_custom_call.1} parent=131 // pred_fallthru
          _
      $region132: #{tpu_custom_call.1} parent=5 // pred_fallthru
        _
    $region6: #{tpu_custom_call.1} parent=1 // loop_footer
      %s37 = sadd.s32 1, %s33
    $region7: #{tpu_custom_call.1} parent=1 // loop_footer_branch
      %32 = sbr.rel target = $region3
    $region8: #{tpu_custom_call.1} parent=1 // loop_exit
      _
    %1722 = vsyncpa [#allocation5], 1
    %s1723 = scalar_lea.sflag [#allocation5], 1
    %1724 = vsyncpa %s1723, 1
    %1725 = vsyncpa [#allocation8], 1
    %1726 = vsyncpa [#allocation11], 1
    %1727 = vsyncpa [#allocation14], 1
    %1728 = vsyncpa [#allocation17], 1
    %1729 = vsyncpa [#allocation6], 1
    %s1730 = scalar_lea.sflag [#allocation6], 1
    %1731 = vsyncpa %s1730, 1

</llo_original>
